<compile_context>
chip_gen: v6e
topology: v6e:2x2x1
jax: 0.10.0
libtpu: 0.0.40
codegen_flags: <defaults>
</compile_context>

<pallas_src>
import functools

import jax
import jax.numpy as jnp
from jax.experimental import pallas as pl
from jax.experimental.pallas import tpu as pltpu

EPS = 1e-6  # matches dgl.nn.EdgeWeightNorm(norm='right', eps=1e-06)


def _hmae_kernel(w1_ref, w2_ref, a_ref, c_ref, t1_ref, *,
                 p_per_step, num_steps, num_rels, num_paths):
    """One grid step = up to `p_per_step` meta-paths.

    w1_ref, w2_ref : SMEM (P, R) float32          GTConv weights (conv1 / conv2)
    a_ref          : VMEM (R, N, N) float32       stacked relation adjacencies (grid-invariant)
    c_ref          : VMEM (p_per_step, N, N)      new_graph_list slab  (T1[p] @ T2[p])
    t1_ref         : VMEM (p_per_step, N, N)      first_graph_list slab (normalized conv1 output)
    """
    step = pl.program_id(0)

    for lp in range(p_per_step):  # static unroll: p_per_step is small
        p = step * p_per_step + lp

        def compute(lp=lp, p=p):
            # ---- fused conv1/conv2 weighted sums: one load of A[r] feeds BOTH paths ----
            a0 = a_ref[0].astype(jnp.float32)
            s1 = w1_ref[p, 0] * a0
            s2 = w2_ref[p, 0] * a0
            for r in range(1, num_rels):  # R small & static -> unrolled VPU axpy chains
                a_r = a_ref[r].astype(jnp.float32)
                s1 = s1 + w1_ref[p, r] * a_r
                s2 = s2 + w2_ref[p, r] * a_r

            # ---- softmax_norm: exp + 'right' EdgeWeightNorm ----
            # Weighted in-degree = sum over src (sublane) axis per dst column; one (1,N)
            # exact reciprocal + broadcast multiply instead of N^2 divides.
            e1 = jnp.exp(s1)
            e2 = jnp.exp(s2)
            inv1 = pl.reciprocal(jnp.sum(e1, axis=0, keepdims=True) + EPS)
            inv2 = pl.reciprocal(jnp.sum(e2, axis=0, keepdims=True) + EPS)
            t1 = e1 * inv1
            t2 = e2 * inv2

            t1_ref[lp] = t1.astype(t1_ref.dtype)
            # ---- adj_product_graph on the MXU (f32 accumulate); LHS kept live in vregs
            # so the t1_ref store drains in parallel with the matmul.
            c_ref[lp] = jnp.dot(
                t1, t2, preferred_element_type=jnp.float32
            ).astype(c_ref.dtype)

        # Tail guard only for lp's that can run past P on the last grid step.
        if (num_steps - 1) * p_per_step + lp >= num_paths:
            pl.when(p < num_paths)(compute)
        else:
            compute()


def _num_tensorcores_per_device():
    """TensorCores addressable by one pallas_call (megacore / v7x dual-TC)."""
    try:
        info = pltpu.get_tpu_info()
        for attr in ("num_cores", "core_count", "tensorcore_count", "num_tensorcores"):
            n = getattr(info, attr, None)
            if n is not None and int(n) > 0:
                return int(n)
    except Exception:
        pass
    try:
        kind = jax.devices()[0].device_kind.lower()
    except Exception:
        return 1
    # v4 / v5p expose 2 TCs per device (megacore); v7x has 2 TCs per chip.
    if any(tag in kind for tag in ("v4", "v5p", "v7", "7x")):
        return 2
    return 1


@functools.partial(jax.jit,
                   static_argnames=("p_per_step", "num_steps", "single_buffer"))
def _hmae_pallas(w1, w2, adj, *, p_per_step, num_steps, single_buffer):
    R, N, _ = adj.shape
    P = w1.shape[0]

    kernel = functools.partial(
        _hmae_kernel, p_per_step=p_per_step, num_steps=num_steps,
        num_rels=R, num_paths=P)

    # ---- explicit VMEM budget (v7x: 64 MiB VMEM / 32 MiB default scoped limit) ----
    a_bufs = 1 if single_buffer else 2
    out_bufs = 1 if (single_buffer and num_steps == 1) else 2
    resident = 4 * (R * a_bufs + 2 * p_per_step * out_bufs) * N * N
    scratch = 4 * 6 * N * N  # worst-case live f32 temporaries (s1, s2, e1, e2, t1, t2)
    vmem_limit = max(resident + scratch + (2 << 20), 32 << 20)
    try:
        vmem_cap = int(pltpu.get_tpu_info().vmem_capacity_bytes)
    except Exception:
        vmem_cap = 64 << 20  # conservative: v7x per-TensorCore VMEM
    vmem_limit = int(min(vmem_limit, (vmem_cap * 9) // 10))

    cost = pl.CostEstimate(
        flops=int(2 * P * N**3 + 4 * P * R * N**2 + 6 * P * N**2),
        transcendentals=int(2 * P * N**2),
        bytes_accessed=int(4 * (R * N * N + 2 * P * N * N + 2 * P * R)),
    )

    a_kw = {"pipeline_mode": pl.Buffered(1)} if single_buffer else {}
    out_kw = ({"pipeline_mode": pl.Buffered(1)}
              if (single_buffer and num_steps == 1) else {})

    grid_spec = pltpu.PrefetchScalarGridSpec(
        num_scalar_prefetch=0,
        grid=(num_steps,),
        in_specs=[
            pl.BlockSpec((P, R), lambda i: (0, 0),
                         memory_space=pltpu.MemorySpace.SMEM),
            pl.BlockSpec((P, R), lambda i: (0, 0),
                         memory_space=pltpu.MemorySpace.SMEM),
            # Grid-invariant: stays resident in VMEM; single-buffered to save R*N*N*4 B.
            # TODO(synk): for N large enough that the resident set overflows VMEM
            # (threshold ~half the v5e/v6e N on v7x), add a dst-column tile axis with a
            # two-pass normalization instead of keeping full (N, N) slabs resident.
            pl.BlockSpec((R, N, N), lambda i: (0, 0, 0), **a_kw),
        ],
        out_specs=[
            pl.BlockSpec((p_per_step, N, N), lambda i: (i, 0, 0), **out_kw),
            pl.BlockSpec((p_per_step, N, N), lambda i: (i, 0, 0), **out_kw),
        ],
    )

    return pl.pallas_call(
        kernel,
        grid_spec=grid_spec,
        out_shape=(
            jax.ShapeDtypeStruct((P, N, N), jnp.float32),
            jax.ShapeDtypeStruct((P, N, N), jnp.float32),
        ),
        compiler_params=pltpu.CompilerParams(
            dimension_semantics=(("parallel",) if num_steps > 1 else ("arbitrary",)),
            vmem_limit_bytes=vmem_limit,
        ),
        cost_estimate=cost,
    )(w1, w2, adj)


def hmae_layer_forward(adj, w1, w2):
    """HMAELayer(first=True).forward on a dense adjacency stack.

    adj : (R, N, N) float32   relation adjacency weights  (graph_list)
    w1  : (P, R)    float32   conv1.weight
    w2  : (P, R)    float32   conv2.weight
    returns (new_graph_list (P,N,N), W=[w1,w2], first_graph_list (P,N,N))
    """
    P = w1.shape[0]

    # One grid step per TensorCore: single step on v5e/v6e, two on v4/v5p/v7x.
    num_cores = max(1, min(_num_tensorcores_per_device(), P))
    p_per_step = pl.cdiv(P, num_cores)
    num_steps = pl.cdiv(P, p_per_step)

    try:
        new_graphs, first_graphs = _hmae_pallas(
            w1, w2, adj, p_per_step=p_per_step, num_steps=num_steps,
            single_buffer=True)
    except Exception:
        # pl.Buffered(1) rejected by this jax/libtpu -> fall back to default buffering.
        new_graphs, first_graphs = _hmae_pallas(
            w1, w2, adj, p_per_step=p_per_step, num_steps=num_steps,
            single_buffer=False)

    return new_graphs, [w1, w2], first_graphs


def _reference(adj, w1, w2):
    s1 = jnp.einsum("pr,rij->pij", w1, adj)
    s2 = jnp.einsum("pr,rij->pij", w2, adj)
    e1 = jnp.exp(s1)
    e2 = jnp.exp(s2)
    t1 = e1 / (jnp.sum(e1, axis=1, keepdims=True) + EPS)
    t2 = e2 / (jnp.sum(e2, axis=1, keepdims=True) + EPS)
    c = jnp.einsum("pij,pjk->pik", t1, t2)
    return c, t1


if __name__ == "__main__":
    # Small synthetic problem: R relations, P meta-paths, N nodes (dense graphs).
    R = 4          # num_meta_rels   (= len(graph_list))
    P = 3          # num_meta_paths
    N = 128        # number of nodes

    key = jax.random.PRNGKey(0)
    k_a, k_w1, k_w2 = jax.random.split(key, 3)

    # Positive edge weights (dense adjacency per relation).
    # TODO(synk): sparse DGL graphs skip non-edges; this dense translation applies
    # exp() to structural zeros as well (matches the dense reference below).
    adj = jax.random.uniform(k_a, (R, N, N), dtype=jnp.float32)
    # GTConv.reset_parameters(): normal_(std=0.01)
    w1 = 0.01 * jax.random.normal(k_w1, (P, R), dtype=jnp.float32)
    w2 = 0.01 * jax.random.normal(k_w2, (P, R), dtype=jnp.float32)

    new_graphs, W, first_graphs = hmae_layer_forward(adj, w1, w2)
    jax.block_until_ready((new_graphs, first_graphs))

    ref_c, ref_t1 = _reference(adj, w1, w2)
    assert jnp.allclose(new_graphs, ref_c, atol=1e-5, rtol=1e-5), "new_graph mismatch"
    assert jnp.allclose(first_graphs, ref_t1, atol=1e-5, rtol=1e-5), "first_graph mismatch"
    assert len(W) == 2 and W[0].shape == (P, R) and W[1].shape == (P, R)

    print("KERNEL_OK")
</pallas_src>

<mosaic_0001>
module attributes {stable_mosaic.version = 11 : i64} {
  func.func @_hmae_kernel(%arg0: i32, %arg1: memref<3x4xf32, #tpu.memory_space<smem>>, %arg2: memref<3x4xf32, #tpu.memory_space<smem>>, %arg3: memref<4x128x128xf32, #tpu.memory_space<vmem>>, %arg4: memref<3x128x128xf32, #tpu.memory_space<vmem>>, %arg5: memref<3x128x128xf32, #tpu.memory_space<vmem>>) attributes {dimension_semantics = [#tpu.dimension_semantics<arbitrary>], iteration_bounds = array<i64: 1>, scalar_prefetch = 0 : i64, scratch_operands = 0 : i64, tpu.core_type = #tpu.core_type<tc>, window_params = [{transform_indices = @transform_0, window_bounds = array<i64: 3, 4>}, {transform_indices = @transform_1, window_bounds = array<i64: 3, 4>}, {pipeline_mode = #tpu.pipeline_mode<synchronous>, transform_indices = @transform_2, window_bounds = array<i64: 4, 128, 128>}, {pipeline_mode = #tpu.pipeline_mode<synchronous>, transform_indices = @transform_3, window_bounds = array<i64: 3, 128, 128>}, {pipeline_mode = #tpu.pipeline_mode<synchronous>, transform_indices = @transform_4, window_bounds = array<i64: 3, 128, 128>}]} {
    %c3_i32 = arith.constant 3 : i32
    %0 = arith.muli %arg0, %c3_i32 : i32
    %c0_i32 = arith.constant 0 : i32
    %1 = arith.addi %0, %c0_i32 : i32
    %c0 = arith.constant 0 : index
    %c0_0 = arith.constant 0 : index
    %c0_1 = arith.constant 0 : index
    %2 = vector.load %arg3[%c0, %c0_0, %c0_1] : memref<4x128x128xf32, #tpu.memory_space<vmem>>, vector<1x128x128xf32>
    %3 = vector.shape_cast %2 : vector<1x128x128xf32> to vector<128x128xf32>
    %4 = arith.index_cast %1 : i32 to index
    %c0_2 = arith.constant 0 : index
    %5 = memref.load %arg1[%4, %c0_2] : memref<3x4xf32, #tpu.memory_space<smem>>
    %6 = vector.broadcast %5 : f32 to vector<128x128xf32>
    %7 = arith.mulf %6, %3 : vector<128x128xf32>
    %8 = arith.index_cast %1 : i32 to index
    %c0_3 = arith.constant 0 : index
    %9 = memref.load %arg2[%8, %c0_3] : memref<3x4xf32, #tpu.memory_space<smem>>
    %10 = vector.broadcast %9 : f32 to vector<128x128xf32>
    %11 = arith.mulf %10, %3 : vector<128x128xf32>
    %c1 = arith.constant 1 : index
    %c0_4 = arith.constant 0 : index
    %c0_5 = arith.constant 0 : index
    %12 = vector.load %arg3[%c1, %c0_4, %c0_5] : memref<4x128x128xf32, #tpu.memory_space<vmem>>, vector<1x128x128xf32>
    %13 = vector.shape_cast %12 : vector<1x128x128xf32> to vector<128x128xf32>
    %14 = arith.index_cast %1 : i32 to index
    %c1_6 = arith.constant 1 : index
    %15 = memref.load %arg1[%14, %c1_6] : memref<3x4xf32, #tpu.memory_space<smem>>
    %16 = vector.broadcast %15 : f32 to vector<128x128xf32>
    %17 = arith.mulf %16, %13 : vector<128x128xf32>
    %18 = arith.addf %7, %17 : vector<128x128xf32>
    %19 = arith.index_cast %1 : i32 to index
    %c1_7 = arith.constant 1 : index
    %20 = memref.load %arg2[%19, %c1_7] : memref<3x4xf32, #tpu.memory_space<smem>>
    %21 = vector.broadcast %20 : f32 to vector<128x128xf32>
    %22 = arith.mulf %21, %13 : vector<128x128xf32>
    %23 = arith.addf %11, %22 : vector<128x128xf32>
    %c2 = arith.constant 2 : index
    %c0_8 = arith.constant 0 : index
    %c0_9 = arith.constant 0 : index
    %24 = vector.load %arg3[%c2, %c0_8, %c0_9] : memref<4x128x128xf32, #tpu.memory_space<vmem>>, vector<1x128x128xf32>
    %25 = vector.shape_cast %24 : vector<1x128x128xf32> to vector<128x128xf32>
    %26 = arith.index_cast %1 : i32 to index
    %c2_10 = arith.constant 2 : index
    %27 = memref.load %arg1[%26, %c2_10] : memref<3x4xf32, #tpu.memory_space<smem>>
    %28 = vector.broadcast %27 : f32 to vector<128x128xf32>
    %29 = arith.mulf %28, %25 : vector<128x128xf32>
    %30 = arith.addf %18, %29 : vector<128x128xf32>
    %31 = arith.index_cast %1 : i32 to index
    %c2_11 = arith.constant 2 : index
    %32 = memref.load %arg2[%31, %c2_11] : memref<3x4xf32, #tpu.memory_space<smem>>
    %33 = vector.broadcast %32 : f32 to vector<128x128xf32>
    %34 = arith.mulf %33, %25 : vector<128x128xf32>
    %35 = arith.addf %23, %34 : vector<128x128xf32>
    %c3 = arith.constant 3 : index
    %c0_12 = arith.constant 0 : index
    %c0_13 = arith.constant 0 : index
    %36 = vector.load %arg3[%c3, %c0_12, %c0_13] : memref<4x128x128xf32, #tpu.memory_space<vmem>>, vector<1x128x128xf32>
    %37 = vector.shape_cast %36 : vector<1x128x128xf32> to vector<128x128xf32>
    %38 = arith.index_cast %1 : i32 to index
    %c3_14 = arith.constant 3 : index
    %39 = memref.load %arg1[%38, %c3_14] : memref<3x4xf32, #tpu.memory_space<smem>>
    %40 = vector.broadcast %39 : f32 to vector<128x128xf32>
    %41 = arith.mulf %40, %37 : vector<128x128xf32>
    %42 = arith.addf %30, %41 : vector<128x128xf32>
    %43 = arith.index_cast %1 : i32 to index
    %c3_15 = arith.constant 3 : index
    %44 = memref.load %arg2[%43, %c3_15] : memref<3x4xf32, #tpu.memory_space<smem>>
    %45 = vector.broadcast %44 : f32 to vector<128x128xf32>
    %46 = arith.mulf %45, %37 : vector<128x128xf32>
    %47 = arith.addf %35, %46 : vector<128x128xf32>
    %48 = math.exp %42 : vector<128x128xf32>
    %49 = math.exp %47 : vector<128x128xf32>
    %cst = arith.constant dense<0.000000e+00> : vector<128xf32>
    %50 = vector.multi_reduction <add>, %48, %cst [0] : vector<128x128xf32> to vector<128xf32>
    %51 = vector.shape_cast %50 : vector<128xf32> to vector<1x128xf32>
    %cst_16 = arith.constant 9.99999997E-7 : f32
    %52 = vector.broadcast %cst_16 : f32 to vector<1x128xf32>
    %53 = arith.addf %51, %52 : vector<1x128xf32>
    %54 = tpu.reciprocal %53 : vector<1x128xf32> -> vector<1x128xf32>
    %cst_17 = arith.constant dense<0.000000e+00> : vector<128xf32>
    %55 = vector.multi_reduction <add>, %49, %cst_17 [0] : vector<128x128xf32> to vector<128xf32>
    %56 = vector.shape_cast %55 : vector<128xf32> to vector<1x128xf32>
    %cst_18 = arith.constant 9.99999997E-7 : f32
    %57 = vector.broadcast %cst_18 : f32 to vector<1x128xf32>
    %58 = arith.addf %56, %57 : vector<1x128xf32>
    %59 = tpu.reciprocal %58 : vector<1x128xf32> -> vector<1x128xf32>
    %60 = vector.broadcast %54 : vector<1x128xf32> to vector<128x128xf32>
    %61 = arith.mulf %48, %60 : vector<128x128xf32>
    %62 = vector.broadcast %59 : vector<1x128xf32> to vector<128x128xf32>
    %63 = arith.mulf %49, %62 : vector<128x128xf32>
    %c0_19 = arith.constant 0 : index
    %c0_20 = arith.constant 0 : index
    %c0_21 = arith.constant 0 : index
    %64 = vector.load %arg5[%c0_19, %c0_20, %c0_21] : memref<3x128x128xf32, #tpu.memory_space<vmem>>, vector<1x128x128xf32>
    %65 = vector.shape_cast %64 : vector<1x128x128xf32> to vector<128x128xf32>
    %66 = vector.shape_cast %61 : vector<128x128xf32> to vector<1x128x128xf32>
    tpu.vector_store %arg5[%c0_19, %c0_20, %c0_21], %66 {strides = array<i32>} : memref<3x128x128xf32, #tpu.memory_space<vmem>>, vector<1x128x128xf32>,
    %cst_22 = arith.constant dense<0.000000e+00> : vector<128x128xf32>
    %67 = tpu.matmul %61, %63, %cst_22 {dimension_numbers = #tpu.dot_dimension_numbers<[1], [0], [0], [1], [0, 0, 1, 1], [], []>} : vector<128x128xf32>, vector<128x128xf32>, vector<128x128xf32> -> vector<128x128xf32>
    %c0_23 = arith.constant 0 : index
    %c0_24 = arith.constant 0 : index
    %c0_25 = arith.constant 0 : index
    %68 = vector.load %arg4[%c0_23, %c0_24, %c0_25] : memref<3x128x128xf32, #tpu.memory_space<vmem>>, vector<1x128x128xf32>
    %69 = vector.shape_cast %68 : vector<1x128x128xf32> to vector<128x128xf32>
    %70 = vector.shape_cast %67 : vector<128x128xf32> to vector<1x128x128xf32>
    tpu.vector_store %arg4[%c0_23, %c0_24, %c0_25], %70 {strides = array<i32>} : memref<3x128x128xf32, #tpu.memory_space<vmem>>, vector<1x128x128xf32>,
    %c3_i32_26 = arith.constant 3 : i32
    %71 = arith.muli %arg0, %c3_i32_26 : i32
    %c1_i32 = arith.constant 1 : i32
    %72 = arith.addi %71, %c1_i32 : i32
    %c0_27 = arith.constant 0 : index
    %c0_28 = arith.constant 0 : index
    %c0_29 = arith.constant 0 : index
    %73 = vector.load %arg3[%c0_27, %c0_28, %c0_29] : memref<4x128x128xf32, #tpu.memory_space<vmem>>, vector<1x128x128xf32>
    %74 = vector.shape_cast %73 : vector<1x128x128xf32> to vector<128x128xf32>
    %75 = arith.index_cast %72 : i32 to index
    %c0_30 = arith.constant 0 : index
    %76 = memref.load %arg1[%75, %c0_30] : memref<3x4xf32, #tpu.memory_space<smem>>
    %77 = vector.broadcast %76 : f32 to vector<128x128xf32>
    %78 = arith.mulf %77, %74 : vector<128x128xf32>
    %79 = arith.index_cast %72 : i32 to index
    %c0_31 = arith.constant 0 : index
    %80 = memref.load %arg2[%79, %c0_31] : memref<3x4xf32, #tpu.memory_space<smem>>
    %81 = vector.broadcast %80 : f32 to vector<128x128xf32>
    %82 = arith.mulf %81, %74 : vector<128x128xf32>
    %c1_32 = arith.constant 1 : index
    %c0_33 = arith.constant 0 : index
    %c0_34 = arith.constant 0 : index
    %83 = vector.load %arg3[%c1_32, %c0_33, %c0_34] : memref<4x128x128xf32, #tpu.memory_space<vmem>>, vector<1x128x128xf32>
    %84 = vector.shape_cast %83 : vector<1x128x128xf32> to vector<128x128xf32>
    %85 = arith.index_cast %72 : i32 to index
    %c1_35 = arith.constant 1 : index
    %86 = memref.load %arg1[%85, %c1_35] : memref<3x4xf32, #tpu.memory_space<smem>>
    %87 = vector.broadcast %86 : f32 to vector<128x128xf32>
    %88 = arith.mulf %87, %84 : vector<128x128xf32>
    %89 = arith.addf %78, %88 : vector<128x128xf32>
    %90 = arith.index_cast %72 : i32 to index
    %c1_36 = arith.constant 1 : index
    %91 = memref.load %arg2[%90, %c1_36] : memref<3x4xf32, #tpu.memory_space<smem>>
    %92 = vector.broadcast %91 : f32 to vector<128x128xf32>
    %93 = arith.mulf %92, %84 : vector<128x128xf32>
    %94 = arith.addf %82, %93 : vector<128x128xf32>
    %c2_37 = arith.constant 2 : index
    %c0_38 = arith.constant 0 : index
    %c0_39 = arith.constant 0 : index
    %95 = vector.load %arg3[%c2_37, %c0_38, %c0_39] : memref<4x128x128xf32, #tpu.memory_space<vmem>>, vector<1x128x128xf32>
    %96 = vector.shape_cast %95 : vector<1x128x128xf32> to vector<128x128xf32>
    %97 = arith.index_cast %72 : i32 to index
    %c2_40 = arith.constant 2 : index
    %98 = memref.load %arg1[%97, %c2_40] : memref<3x4xf32, #tpu.memory_space<smem>>
    %99 = vector.broadcast %98 : f32 to vector<128x128xf32>
    %100 = arith.mulf %99, %96 : vector<128x128xf32>
    %101 = arith.addf %89, %100 : vector<128x128xf32>
    %102 = arith.index_cast %72 : i32 to index
    %c2_41 = arith.constant 2 : index
    %103 = memref.load %arg2[%102, %c2_41] : memref<3x4xf32, #tpu.memory_space<smem>>
    %104 = vector.broadcast %103 : f32 to vector<128x128xf32>
    %105 = arith.mulf %104, %96 : vector<128x128xf32>
    %106 = arith.addf %94, %105 : vector<128x128xf32>
    %c3_42 = arith.constant 3 : index
    %c0_43 = arith.constant 0 : index
    %c0_44 = arith.constant 0 : index
    %107 = vector.load %arg3[%c3_42, %c0_43, %c0_44] : memref<4x128x128xf32, #tpu.memory_space<vmem>>, vector<1x128x128xf32>
    %108 = vector.shape_cast %107 : vector<1x128x128xf32> to vector<128x128xf32>
    %109 = arith.index_cast %72 : i32 to index
    %c3_45 = arith.constant 3 : index
    %110 = memref.load %arg1[%109, %c3_45] : memref<3x4xf32, #tpu.memory_space<smem>>
    %111 = vector.broadcast %110 : f32 to vector<128x128xf32>
    %112 = arith.mulf %111, %108 : vector<128x128xf32>
    %113 = arith.addf %101, %112 : vector<128x128xf32>
    %114 = arith.index_cast %72 : i32 to index
    %c3_46 = arith.constant 3 : index
    %115 = memref.load %arg2[%114, %c3_46] : memref<3x4xf32, #tpu.memory_space<smem>>
    %116 = vector.broadcast %115 : f32 to vector<128x128xf32>
    %117 = arith.mulf %116, %108 : vector<128x128xf32>
    %118 = arith.addf %106, %117 : vector<128x128xf32>
    %119 = math.exp %113 : vector<128x128xf32>
    %120 = math.exp %118 : vector<128x128xf32>
    %cst_47 = arith.constant dense<0.000000e+00> : vector<128xf32>
    %121 = vector.multi_reduction <add>, %119, %cst_47 [0] : vector<128x128xf32> to vector<128xf32>
    %122 = vector.shape_cast %121 : vector<128xf32> to vector<1x128xf32>
    %cst_48 = arith.constant 9.99999997E-7 : f32
    %123 = vector.broadcast %cst_48 : f32 to vector<1x128xf32>
    %124 = arith.addf %122, %123 : vector<1x128xf32>
    %125 = tpu.reciprocal %124 : vector<1x128xf32> -> vector<1x128xf32>
    %cst_49 = arith.constant dense<0.000000e+00> : vector<128xf32>
    %126 = vector.multi_reduction <add>, %120, %cst_49 [0] : vector<128x128xf32> to vector<128xf32>
    %127 = vector.shape_cast %126 : vector<128xf32> to vector<1x128xf32>
    %cst_50 = arith.constant 9.99999997E-7 : f32
    %128 = vector.broadcast %cst_50 : f32 to vector<1x128xf32>
    %129 = arith.addf %127, %128 : vector<1x128xf32>
    %130 = tpu.reciprocal %129 : vector<1x128xf32> -> vector<1x128xf32>
    %131 = vector.broadcast %125 : vector<1x128xf32> to vector<128x128xf32>
    %132 = arith.mulf %119, %131 : vector<128x128xf32>
    %133 = vector.broadcast %130 : vector<1x128xf32> to vector<128x128xf32>
    %134 = arith.mulf %120, %133 : vector<128x128xf32>
    %c1_51 = arith.constant 1 : index
    %c0_52 = arith.constant 0 : index
    %c0_53 = arith.constant 0 : index
    %135 = vector.load %arg5[%c1_51, %c0_52, %c0_53] : memref<3x128x128xf32, #tpu.memory_space<vmem>>, vector<1x128x128xf32>
    %136 = vector.shape_cast %135 : vector<1x128x128xf32> to vector<128x128xf32>
    %137 = vector.shape_cast %132 : vector<128x128xf32> to vector<1x128x128xf32>
    tpu.vector_store %arg5[%c1_51, %c0_52, %c0_53], %137 {strides = array<i32>} : memref<3x128x128xf32, #tpu.memory_space<vmem>>, vector<1x128x128xf32>,
    %cst_54 = arith.constant dense<0.000000e+00> : vector<128x128xf32>
    %138 = tpu.matmul %132, %134, %cst_54 {dimension_numbers = #tpu.dot_dimension_numbers<[1], [0], [0], [1], [0, 0, 1, 1], [], []>} : vector<128x128xf32>, vector<128x128xf32>, vector<128x128xf32> -> vector<128x128xf32>
    %c1_55 = arith.constant 1 : index
    %c0_56 = arith.constant 0 : index
    %c0_57 = arith.constant 0 : index
    %139 = vector.load %arg4[%c1_55, %c0_56, %c0_57] : memref<3x128x128xf32, #tpu.memory_space<vmem>>, vector<1x128x128xf32>
    %140 = vector.shape_cast %139 : vector<1x128x128xf32> to vector<128x128xf32>
    %141 = vector.shape_cast %138 : vector<128x128xf32> to vector<1x128x128xf32>
    tpu.vector_store %arg4[%c1_55, %c0_56, %c0_57], %141 {strides = array<i32>} : memref<3x128x128xf32, #tpu.memory_space<vmem>>, vector<1x128x128xf32>,
    %c3_i32_58 = arith.constant 3 : i32
    %142 = arith.muli %arg0, %c3_i32_58 : i32
    %c2_i32 = arith.constant 2 : i32
    %143 = arith.addi %142, %c2_i32 : i32
    %c0_59 = arith.constant 0 : index
    %c0_60 = arith.constant 0 : index
    %c0_61 = arith.constant 0 : index
    %144 = vector.load %arg3[%c0_59, %c0_60, %c0_61] : memref<4x128x128xf32, #tpu.memory_space<vmem>>, vector<1x128x128xf32>
    %145 = vector.shape_cast %144 : vector<1x128x128xf32> to vector<128x128xf32>
    %146 = arith.index_cast %143 : i32 to index
    %c0_62 = arith.constant 0 : index
    %147 = memref.load %arg1[%146, %c0_62] : memref<3x4xf32, #tpu.memory_space<smem>>
    %148 = vector.broadcast %147 : f32 to vector<128x128xf32>
    %149 = arith.mulf %148, %145 : vector<128x128xf32>
    %150 = arith.index_cast %143 : i32 to index
    %c0_63 = arith.constant 0 : index
    %151 = memref.load %arg2[%150, %c0_63] : memref<3x4xf32, #tpu.memory_space<smem>>
    %152 = vector.broadcast %151 : f32 to vector<128x128xf32>
    %153 = arith.mulf %152, %145 : vector<128x128xf32>
    %c1_64 = arith.constant 1 : index
    %c0_65 = arith.constant 0 : index
    %c0_66 = arith.constant 0 : index
    %154 = vector.load %arg3[%c1_64, %c0_65, %c0_66] : memref<4x128x128xf32, #tpu.memory_space<vmem>>, vector<1x128x128xf32>
    %155 = vector.shape_cast %154 : vector<1x128x128xf32> to vector<128x128xf32>
    %156 = arith.index_cast %143 : i32 to index
    %c1_67 = arith.constant 1 : index
    %157 = memref.load %arg1[%156, %c1_67] : memref<3x4xf32, #tpu.memory_space<smem>>
    %158 = vector.broadcast %157 : f32 to vector<128x128xf32>
    %159 = arith.mulf %158, %155 : vector<128x128xf32>
    %160 = arith.addf %149, %159 : vector<128x128xf32>
    %161 = arith.index_cast %143 : i32 to index
    %c1_68 = arith.constant 1 : index
    %162 = memref.load %arg2[%161, %c1_68] : memref<3x4xf32, #tpu.memory_space<smem>>
    %163 = vector.broadcast %162 : f32 to vector<128x128xf32>
    %164 = arith.mulf %163, %155 : vector<128x128xf32>
    %165 = arith.addf %153, %164 : vector<128x128xf32>
    %c2_69 = arith.constant 2 : index
    %c0_70 = arith.constant 0 : index
    %c0_71 = arith.constant 0 : index
    %166 = vector.load %arg3[%c2_69, %c0_70, %c0_71] : memref<4x128x128xf32, #tpu.memory_space<vmem>>, vector<1x128x128xf32>
    %167 = vector.shape_cast %166 : vector<1x128x128xf32> to vector<128x128xf32>
    %168 = arith.index_cast %143 : i32 to index
    %c2_72 = arith.constant 2 : index
    %169 = memref.load %arg1[%168, %c2_72] : memref<3x4xf32, #tpu.memory_space<smem>>
    %170 = vector.broadcast %169 : f32 to vector<128x128xf32>
    %171 = arith.mulf %170, %167 : vector<128x128xf32>
    %172 = arith.addf %160, %171 : vector<128x128xf32>
    %173 = arith.index_cast %143 : i32 to index
    %c2_73 = arith.constant 2 : index
    %174 = memref.load %arg2[%173, %c2_73] : memref<3x4xf32, #tpu.memory_space<smem>>
    %175 = vector.broadcast %174 : f32 to vector<128x128xf32>
    %176 = arith.mulf %175, %167 : vector<128x128xf32>
    %177 = arith.addf %165, %176 : vector<128x128xf32>
    %c3_74 = arith.constant 3 : index
    %c0_75 = arith.constant 0 : index
    %c0_76 = arith.constant 0 : index
    %178 = vector.load %arg3[%c3_74, %c0_75, %c0_76] : memref<4x128x128xf32, #tpu.memory_space<vmem>>, vector<1x128x128xf32>
    %179 = vector.shape_cast %178 : vector<1x128x128xf32> to vector<128x128xf32>
    %180 = arith.index_cast %143 : i32 to index
    %c3_77 = arith.constant 3 : index
    %181 = memref.load %arg1[%180, %c3_77] : memref<3x4xf32, #tpu.memory_space<smem>>
    %182 = vector.broadcast %181 : f32 to vector<128x128xf32>
    %183 = arith.mulf %182, %179 : vector<128x128xf32>
    %184 = arith.addf %172, %183 : vector<128x128xf32>
    %185 = arith.index_cast %143 : i32 to index
    %c3_78 = arith.constant 3 : index
    %186 = memref.load %arg2[%185, %c3_78] : memref<3x4xf32, #tpu.memory_space<smem>>
    %187 = vector.broadcast %186 : f32 to vector<128x128xf32>
    %188 = arith.mulf %187, %179 : vector<128x128xf32>
    %189 = arith.addf %177, %188 : vector<128x128xf32>
    %190 = math.exp %184 : vector<128x128xf32>
    %191 = math.exp %189 : vector<128x128xf32>
    %cst_79 = arith.constant dense<0.000000e+00> : vector<128xf32>
    %192 = vector.multi_reduction <add>, %190, %cst_79 [0] : vector<128x128xf32> to vector<128xf32>
    %193 = vector.shape_cast %192 : vector<128xf32> to vector<1x128xf32>
    %cst_80 = arith.constant 9.99999997E-7 : f32
    %194 = vector.broadcast %cst_80 : f32 to vector<1x128xf32>
    %195 = arith.addf %193, %194 : vector<1x128xf32>
    %196 = tpu.reciprocal %195 : vector<1x128xf32> -> vector<1x128xf32>
    %cst_81 = arith.constant dense<0.000000e+00> : vector<128xf32>
    %197 = vector.multi_reduction <add>, %191, %cst_81 [0] : vector<128x128xf32> to vector<128xf32>
    %198 = vector.shape_cast %197 : vector<128xf32> to vector<1x128xf32>
    %cst_82 = arith.constant 9.99999997E-7 : f32
    %199 = vector.broadcast %cst_82 : f32 to vector<1x128xf32>
    %200 = arith.addf %198, %199 : vector<1x128xf32>
    %201 = tpu.reciprocal %200 : vector<1x128xf32> -> vector<1x128xf32>
    %202 = vector.broadcast %196 : vector<1x128xf32> to vector<128x128xf32>
    %203 = arith.mulf %190, %202 : vector<128x128xf32>
    %204 = vector.broadcast %201 : vector<1x128xf32> to vector<128x128xf32>
    %205 = arith.mulf %191, %204 : vector<128x128xf32>
    %c2_83 = arith.constant 2 : index
    %c0_84 = arith.constant 0 : index
    %c0_85 = arith.constant 0 : index
    %206 = vector.load %arg5[%c2_83, %c0_84, %c0_85] : memref<3x128x128xf32, #tpu.memory_space<vmem>>, vector<1x128x128xf32>
    %207 = vector.shape_cast %206 : vector<1x128x128xf32> to vector<128x128xf32>
    %208 = vector.shape_cast %203 : vector<128x128xf32> to vector<1x128x128xf32>
    tpu.vector_store %arg5[%c2_83, %c0_84, %c0_85], %208 {strides = array<i32>} : memref<3x128x128xf32, #tpu.memory_space<vmem>>, vector<1x128x128xf32>,
    %cst_86 = arith.constant dense<0.000000e+00> : vector<128x128xf32>
    %209 = tpu.matmul %203, %205, %cst_86 {dimension_numbers = #tpu.dot_dimension_numbers<[1], [0], [0], [1], [0, 0, 1, 1], [], []>} : vector<128x128xf32>, vector<128x128xf32>, vector<128x128xf32> -> vector<128x128xf32>
    %c2_87 = arith.constant 2 : index
    %c0_88 = arith.constant 0 : index
    %c0_89 = arith.constant 0 : index
    %210 = vector.load %arg4[%c2_87, %c0_88, %c0_89] : memref<3x128x128xf32, #tpu.memory_space<vmem>>, vector<1x128x128xf32>
    %211 = vector.shape_cast %210 : vector<1x128x128xf32> to vector<128x128xf32>
    %212 = vector.shape_cast %209 : vector<128x128xf32> to vector<1x128x128xf32>
    tpu.vector_store %arg4[%c2_87, %c0_88, %c0_89], %212 {strides = array<i32>} : memref<3x128x128xf32, #tpu.memory_space<vmem>>, vector<1x128x128xf32>,
    return
  }
  func.func @transform_0(%arg0: i32) -> (i32, i32) {
    %c0_i32 = arith.constant 0 : i32
    %c0_i32_0 = arith.constant 0 : i32
    %c0_i32_1 = arith.constant 0 : i32
    return %c0_i32, %c0_i32_0 : i32, i32
  }
  func.func @transform_1(%arg0: i32) -> (i32, i32) {
    %c0_i32 = arith.constant 0 : i32
    %c0_i32_0 = arith.constant 0 : i32
    %c0_i32_1 = arith.constant 0 : i32
    return %c0_i32, %c0_i32_0 : i32, i32
  }
  func.func @transform_2(%arg0: i32) -> (i32, i32, i32) {
    %c0_i32 = arith.constant 0 : i32
    %c0_i32_0 = arith.constant 0 : i32
    %c0_i32_1 = arith.constant 0 : i32
    %c0_i32_2 = arith.constant 0 : i32
    return %c0_i32, %c0_i32_0, %c0_i32_1 : i32, i32, i32
  }
  func.func @transform_3(%arg0: i32) -> (i32, i32, i32) {
    %c0_i32 = arith.constant 0 : i32
    %c0_i32_0 = arith.constant 0 : i32
    %c0_i32_1 = arith.constant 0 : i32
    return %arg0, %c0_i32, %c0_i32_0 : i32, i32, i32
  }
  func.func @transform_4(%arg0: i32) -> (i32, i32, i32) {
    %c0_i32 = arith.constant 0 : i32
    %c0_i32_0 = arith.constant 0 : i32
    %c0_i32_1 = arith.constant 0 : i32
    return %arg0, %c0_i32, %c0_i32_0 : i32, i32, i32
  }
}

module attributes {stable_mosaic.version = 11 : i64} {
  func.func @_hmae_kernel(%arg0: i32, %arg1: memref<3x4xf32, #tpu.memory_space<smem>>, %arg2: memref<3x4xf32, #tpu.memory_space<smem>>, %arg3: memref<4x128x128xf32, #tpu.memory_space<vmem>>, %arg4: memref<3x128x128xf32, #tpu.memory_space<vmem>>, %arg5: memref<3x128x128xf32, #tpu.memory_space<vmem>>) attributes {dimension_semantics = [#tpu.dimension_semantics<arbitrary>], iteration_bounds = array<i64: 1>, scalar_prefetch = 0 : i64, scratch_operands = 0 : i64, tpu.core_type = #tpu.core_type<tc>, window_params = [{transform_indices = @transform_0, window_bounds = array<i64: 3, 4>}, {transform_indices = @transform_1, window_bounds = array<i64: 3, 4>}, {pipeline_mode = #tpu.pipeline_mode<synchronous>, transform_indices = @transform_2, window_bounds = array<i64: 4, 128, 128>}, {transform_indices = @transform_3, window_bounds = array<i64: 3, 128, 128>}, {transform_indices = @transform_4, window_bounds = array<i64: 3, 128, 128>}]} {
    %c3_i32 = arith.constant 3 : i32
    %0 = arith.muli %arg0, %c3_i32 : i32
    %c0_i32 = arith.constant 0 : i32
    %1 = arith.addi %0, %c0_i32 : i32
    %c0 = arith.constant 0 : index
    %c0_0 = arith.constant 0 : index
    %c0_1 = arith.constant 0 : index
    %2 = vector.load %arg3[%c0, %c0_0, %c0_1] : memref<4x128x128xf32, #tpu.memory_space<vmem>>, vector<1x128x128xf32>
    %3 = vector.shape_cast %2 : vector<1x128x128xf32> to vector<128x128xf32>
    %4 = arith.index_cast %1 : i32 to index
    %c0_2 = arith.constant 0 : index
    %5 = memref.load %arg1[%4, %c0_2] : memref<3x4xf32, #tpu.memory_space<smem>>
    %6 = vector.broadcast %5 : f32 to vector<128x128xf32>
    %7 = arith.mulf %6, %3 : vector<128x128xf32>
    %8 = arith.index_cast %1 : i32 to index
    %c0_3 = arith.constant 0 : index
    %9 = memref.load %arg2[%8, %c0_3] : memref<3x4xf32, #tpu.memory_space<smem>>
    %10 = vector.broadcast %9 : f32 to vector<128x128xf32>
    %11 = arith.mulf %10, %3 : vector<128x128xf32>
    %c1 = arith.constant 1 : index
    %c0_4 = arith.constant 0 : index
    %c0_5 = arith.constant 0 : index
    %12 = vector.load %arg3[%c1, %c0_4, %c0_5] : memref<4x128x128xf32, #tpu.memory_space<vmem>>, vector<1x128x128xf32>
    %13 = vector.shape_cast %12 : vector<1x128x128xf32> to vector<128x128xf32>
    %14 = arith.index_cast %1 : i32 to index
    %c1_6 = arith.constant 1 : index
    %15 = memref.load %arg1[%14, %c1_6] : memref<3x4xf32, #tpu.memory_space<smem>>
    %16 = vector.broadcast %15 : f32 to vector<128x128xf32>
    %17 = arith.mulf %16, %13 : vector<128x128xf32>
    %18 = arith.addf %7, %17 : vector<128x128xf32>
    %19 = arith.index_cast %1 : i32 to index
    %c1_7 = arith.constant 1 : index
    %20 = memref.load %arg2[%19, %c1_7] : memref<3x4xf32, #tpu.memory_space<smem>>
    %21 = vector.broadcast %20 : f32 to vector<128x128xf32>
    %22 = arith.mulf %21, %13 : vector<128x128xf32>
    %23 = arith.addf %11, %22 : vector<128x128xf32>
    %c2 = arith.constant 2 : index
    %c0_8 = arith.constant 0 : index
    %c0_9 = arith.constant 0 : index
    %24 = vector.load %arg3[%c2, %c0_8, %c0_9] : memref<4x128x128xf32, #tpu.memory_space<vmem>>, vector<1x128x128xf32>
    %25 = vector.shape_cast %24 : vector<1x128x128xf32> to vector<128x128xf32>
    %26 = arith.index_cast %1 : i32 to index
    %c2_10 = arith.constant 2 : index
    %27 = memref.load %arg1[%26, %c2_10] : memref<3x4xf32, #tpu.memory_space<smem>>
    %28 = vector.broadcast %27 : f32 to vector<128x128xf32>
    %29 = arith.mulf %28, %25 : vector<128x128xf32>
    %30 = arith.addf %18, %29 : vector<128x128xf32>
    %31 = arith.index_cast %1 : i32 to index
    %c2_11 = arith.constant 2 : index
    %32 = memref.load %arg2[%31, %c2_11] : memref<3x4xf32, #tpu.memory_space<smem>>
    %33 = vector.broadcast %32 : f32 to vector<128x128xf32>
    %34 = arith.mulf %33, %25 : vector<128x128xf32>
    %35 = arith.addf %23, %34 : vector<128x128xf32>
    %c3 = arith.constant 3 : index
    %c0_12 = arith.constant 0 : index
    %c0_13 = arith.constant 0 : index
    %36 = vector.load %arg3[%c3, %c0_12, %c0_13] : memref<4x128x128xf32, #tpu.memory_space<vmem>>, vector<1x128x128xf32>
    %37 = vector.shape_cast %36 : vector<1x128x128xf32> to vector<128x128xf32>
    %38 = arith.index_cast %1 : i32 to index
    %c3_14 = arith.constant 3 : index
    %39 = memref.load %arg1[%38, %c3_14] : memref<3x4xf32, #tpu.memory_space<smem>>
    %40 = vector.broadcast %39 : f32 to vector<128x128xf32>
    %41 = arith.mulf %40, %37 : vector<128x128xf32>
    %42 = arith.addf %30, %41 : vector<128x128xf32>
    %43 = arith.index_cast %1 : i32 to index
    %c3_15 = arith.constant 3 : index
    %44 = memref.load %arg2[%43, %c3_15] : memref<3x4xf32, #tpu.memory_space<smem>>
    %45 = vector.broadcast %44 : f32 to vector<128x128xf32>
    %46 = arith.mulf %45, %37 : vector<128x128xf32>
    %47 = arith.addf %35, %46 : vector<128x128xf32>
    %48 = math.exp %42 : vector<128x128xf32>
    %49 = math.exp %47 : vector<128x128xf32>
    %cst = arith.constant dense<0.000000e+00> : vector<128xf32>
    %50 = vector.multi_reduction <add>, %48, %cst [0] : vector<128x128xf32> to vector<128xf32>
    %51 = vector.shape_cast %50 : vector<128xf32> to vector<1x128xf32>
    %cst_16 = arith.constant 9.99999997E-7 : f32
    %52 = vector.broadcast %cst_16 : f32 to vector<1x128xf32>
    %53 = arith.addf %51, %52 : vector<1x128xf32>
    %54 = tpu.reciprocal %53 : vector<1x128xf32> -> vector<1x128xf32>
    %cst_17 = arith.constant dense<0.000000e+00> : vector<128xf32>
    %55 = vector.multi_reduction <add>, %49, %cst_17 [0] : vector<128x128xf32> to vector<128xf32>
    %56 = vector.shape_cast %55 : vector<128xf32> to vector<1x128xf32>
    %cst_18 = arith.constant 9.99999997E-7 : f32
    %57 = vector.broadcast %cst_18 : f32 to vector<1x128xf32>
    %58 = arith.addf %56, %57 : vector<1x128xf32>
    %59 = tpu.reciprocal %58 : vector<1x128xf32> -> vector<1x128xf32>
    %60 = vector.broadcast %54 : vector<1x128xf32> to vector<128x128xf32>
    %61 = arith.mulf %48, %60 : vector<128x128xf32>
    %62 = vector.broadcast %59 : vector<1x128xf32> to vector<128x128xf32>
    %63 = arith.mulf %49, %62 : vector<128x128xf32>
    %c0_19 = arith.constant 0 : index
    %c0_20 = arith.constant 0 : index
    %c0_21 = arith.constant 0 : index
    %64 = vector.load %arg5[%c0_19, %c0_20, %c0_21] : memref<3x128x128xf32, #tpu.memory_space<vmem>>, vector<1x128x128xf32>
    %65 = vector.shape_cast %64 : vector<1x128x128xf32> to vector<128x128xf32>
    %66 = vector.shape_cast %61 : vector<128x128xf32> to vector<1x128x128xf32>
    tpu.vector_store %arg5[%c0_19, %c0_20, %c0_21], %66 {strides = array<i32>} : memref<3x128x128xf32, #tpu.memory_space<vmem>>, vector<1x128x128xf32>,
    %cst_22 = arith.constant dense<0.000000e+00> : vector<128x128xf32>
    %67 = tpu.matmul %61, %63, %cst_22 {dimension_numbers = #tpu.dot_dimension_numbers<[1], [0], [0], [1], [0, 0, 1, 1], [], []>} : vector<128x128xf32>, vector<128x128xf32>, vector<128x128xf32> -> vector<128x128xf32>
    %c0_23 = arith.constant 0 : index
    %c0_24 = arith.constant 0 : index
    %c0_25 = arith.constant 0 : index
    %68 = vector.load %arg4[%c0_23, %c0_24, %c0_25] : memref<3x128x128xf32, #tpu.memory_space<vmem>>, vector<1x128x128xf32>
    %69 = vector.shape_cast %68 : vector<1x128x128xf32> to vector<128x128xf32>
    %70 = vector.shape_cast %67 : vector<128x128xf32> to vector<1x128x128xf32>
    tpu.vector_store %arg4[%c0_23, %c0_24, %c0_25], %70 {strides = array<i32>} : memref<3x128x128xf32, #tpu.memory_space<vmem>>, vector<1x128x128xf32>,
    %c3_i32_26 = arith.constant 3 : i32
    %71 = arith.muli %arg0, %c3_i32_26 : i32
    %c1_i32 = arith.constant 1 : i32
    %72 = arith.addi %71, %c1_i32 : i32
    %c0_27 = arith.constant 0 : index
    %c0_28 = arith.constant 0 : index
    %c0_29 = arith.constant 0 : index
    %73 = vector.load %arg3[%c0_27, %c0_28, %c0_29] : memref<4x128x128xf32, #tpu.memory_space<vmem>>, vector<1x128x128xf32>
    %74 = vector.shape_cast %73 : vector<1x128x128xf32> to vector<128x128xf32>
    %75 = arith.index_cast %72 : i32 to index
    %c0_30 = arith.constant 0 : index
    %76 = memref.load %arg1[%75, %c0_30] : memref<3x4xf32, #tpu.memory_space<smem>>
    %77 = vector.broadcast %76 : f32 to vector<128x128xf32>
    %78 = arith.mulf %77, %74 : vector<128x128xf32>
    %79 = arith.index_cast %72 : i32 to index
    %c0_31 = arith.constant 0 : index
    %80 = memref.load %arg2[%79, %c0_31] : memref<3x4xf32, #tpu.memory_space<smem>>
    %81 = vector.broadcast %80 : f32 to vector<128x128xf32>
    %82 = arith.mulf %81, %74 : vector<128x128xf32>
    %c1_32 = arith.constant 1 : index
    %c0_33 = arith.constant 0 : index
    %c0_34 = arith.constant 0 : index
    %83 = vector.load %arg3[%c1_32, %c0_33, %c0_34] : memref<4x128x128xf32, #tpu.memory_space<vmem>>, vector<1x128x128xf32>
    %84 = vector.shape_cast %83 : vector<1x128x128xf32> to vector<128x128xf32>
    %85 = arith.index_cast %72 : i32 to index
    %c1_35 = arith.constant 1 : index
    %86 = memref.load %arg1[%85, %c1_35] : memref<3x4xf32, #tpu.memory_space<smem>>
    %87 = vector.broadcast %86 : f32 to vector<128x128xf32>
    %88 = arith.mulf %87, %84 : vector<128x128xf32>
    %89 = arith.addf %78, %88 : vector<128x128xf32>
    %90 = arith.index_cast %72 : i32 to index
    %c1_36 = arith.constant 1 : index
    %91 = memref.load %arg2[%90, %c1_36] : memref<3x4xf32, #tpu.memory_space<smem>>
    %92 = vector.broadcast %91 : f32 to vector<128x128xf32>
    %93 = arith.mulf %92, %84 : vector<128x128xf32>
    %94 = arith.addf %82, %93 : vector<128x128xf32>
    %c2_37 = arith.constant 2 : index
    %c0_38 = arith.constant 0 : index
    %c0_39 = arith.constant 0 : index
    %95 = vector.load %arg3[%c2_37, %c0_38, %c0_39] : memref<4x128x128xf32, #tpu.memory_space<vmem>>, vector<1x128x128xf32>
    %96 = vector.shape_cast %95 : vector<1x128x128xf32> to vector<128x128xf32>
    %97 = arith.index_cast %72 : i32 to index
    %c2_40 = arith.constant 2 : index
    %98 = memref.load %arg1[%97, %c2_40] : memref<3x4xf32, #tpu.memory_space<smem>>
    %99 = vector.broadcast %98 : f32 to vector<128x128xf32>
    %100 = arith.mulf %99, %96 : vector<128x128xf32>
    %101 = arith.addf %89, %100 : vector<128x128xf32>
    %102 = arith.index_cast %72 : i32 to index
    %c2_41 = arith.constant 2 : index
    %103 = memref.load %arg2[%102, %c2_41] : memref<3x4xf32, #tpu.memory_space<smem>>
    %104 = vector.broadcast %103 : f32 to vector<128x128xf32>
    %105 = arith.mulf %104, %96 : vector<128x128xf32>
    %106 = arith.addf %94, %105 : vector<128x128xf32>
    %c3_42 = arith.constant 3 : index
    %c0_43 = arith.constant 0 : index
    %c0_44 = arith.constant 0 : index
    %107 = vector.load %arg3[%c3_42, %c0_43, %c0_44] : memref<4x128x128xf32, #tpu.memory_space<vmem>>, vector<1x128x128xf32>
    %108 = vector.shape_cast %107 : vector<1x128x128xf32> to vector<128x128xf32>
    %109 = arith.index_cast %72 : i32 to index
    %c3_45 = arith.constant 3 : index
    %110 = memref.load %arg1[%109, %c3_45] : memref<3x4xf32, #tpu.memory_space<smem>>
    %111 = vector.broadcast %110 : f32 to vector<128x128xf32>
    %112 = arith.mulf %111, %108 : vector<128x128xf32>
    %113 = arith.addf %101, %112 : vector<128x128xf32>
    %114 = arith.index_cast %72 : i32 to index
    %c3_46 = arith.constant 3 : index
    %115 = memref.load %arg2[%114, %c3_46] : memref<3x4xf32, #tpu.memory_space<smem>>
    %116 = vector.broadcast %115 : f32 to vector<128x128xf32>
    %117 = arith.mulf %116, %108 : vector<128x128xf32>
    %118 = arith.addf %106, %117 : vector<128x128xf32>
    %119 = math.exp %113 : vector<128x128xf32>
    %120 = math.exp %118 : vector<128x128xf32>
    %cst_47 = arith.constant dense<0.000000e+00> : vector<128xf32>
    %121 = vector.multi_reduction <add>, %119, %cst_47 [0] : vector<128x128xf32> to vector<128xf32>
    %122 = vector.shape_cast %121 : vector<128xf32> to vector<1x128xf32>
    %cst_48 = arith.constant 9.99999997E-7 : f32
    %123 = vector.broadcast %cst_48 : f32 to vector<1x128xf32>
    %124 = arith.addf %122, %123 : vector<1x128xf32>
    %125 = tpu.reciprocal %124 : vector<1x128xf32> -> vector<1x128xf32>
    %cst_49 = arith.constant dense<0.000000e+00> : vector<128xf32>
    %126 = vector.multi_reduction <add>, %120, %cst_49 [0] : vector<128x128xf32> to vector<128xf32>
    %127 = vector.shape_cast %126 : vector<128xf32> to vector<1x128xf32>
    %cst_50 = arith.constant 9.99999997E-7 : f32
    %128 = vector.broadcast %cst_50 : f32 to vector<1x128xf32>
    %129 = arith.addf %127, %128 : vector<1x128xf32>
    %130 = tpu.reciprocal %129 : vector<1x128xf32> -> vector<1x128xf32>
    %131 = vector.broadcast %125 : vector<1x128xf32> to vector<128x128xf32>
    %132 = arith.mulf %119, %131 : vector<128x128xf32>
    %133 = vector.broadcast %130 : vector<1x128xf32> to vector<128x128xf32>
    %134 = arith.mulf %120, %133 : vector<128x128xf32>
    %c1_51 = arith.constant 1 : index
    %c0_52 = arith.constant 0 : index
    %c0_53 = arith.constant 0 : index
    %135 = vector.load %arg5[%c1_51, %c0_52, %c0_53] : memref<3x128x128xf32, #tpu.memory_space<vmem>>, vector<1x128x128xf32>
    %136 = vector.shape_cast %135 : vector<1x128x128xf32> to vector<128x128xf32>
    %137 = vector.shape_cast %132 : vector<128x128xf32> to vector<1x128x128xf32>
    tpu.vector_store %arg5[%c1_51, %c0_52, %c0_53], %137 {strides = array<i32>} : memref<3x128x128xf32, #tpu.memory_space<vmem>>, vector<1x128x128xf32>,
    %cst_54 = arith.constant dense<0.000000e+00> : vector<128x128xf32>
    %138 = tpu.matmul %132, %134, %cst_54 {dimension_numbers = #tpu.dot_dimension_numbers<[1], [0], [0], [1], [0, 0, 1, 1], [], []>} : vector<128x128xf32>, vector<128x128xf32>, vector<128x128xf32> -> vector<128x128xf32>
    %c1_55 = arith.constant 1 : index
    %c0_56 = arith.constant 0 : index
    %c0_57 = arith.constant 0 : index
    %139 = vector.load %arg4[%c1_55, %c0_56, %c0_57] : memref<3x128x128xf32, #tpu.memory_space<vmem>>, vector<1x128x128xf32>
    %140 = vector.shape_cast %139 : vector<1x128x128xf32> to vector<128x128xf32>
    %141 = vector.shape_cast %138 : vector<128x128xf32> to vector<1x128x128xf32>
    tpu.vector_store %arg4[%c1_55, %c0_56, %c0_57], %141 {strides = array<i32>} : memref<3x128x128xf32, #tpu.memory_space<vmem>>, vector<1x128x128xf32>,
    %c3_i32_58 = arith.constant 3 : i32
    %142 = arith.muli %arg0, %c3_i32_58 : i32
    %c2_i32 = arith.constant 2 : i32
    %143 = arith.addi %142, %c2_i32 : i32
    %c0_59 = arith.constant 0 : index
    %c0_60 = arith.constant 0 : index
    %c0_61 = arith.constant 0 : index
    %144 = vector.load %arg3[%c0_59, %c0_60, %c0_61] : memref<4x128x128xf32, #tpu.memory_space<vmem>>, vector<1x128x128xf32>
    %145 = vector.shape_cast %144 : vector<1x128x128xf32> to vector<128x128xf32>
    %146 = arith.index_cast %143 : i32 to index
    %c0_62 = arith.constant 0 : index
    %147 = memref.load %arg1[%146, %c0_62] : memref<3x4xf32, #tpu.memory_space<smem>>
    %148 = vector.broadcast %147 : f32 to vector<128x128xf32>
    %149 = arith.mulf %148, %145 : vector<128x128xf32>
    %150 = arith.index_cast %143 : i32 to index
    %c0_63 = arith.constant 0 : index
    %151 = memref.load %arg2[%150, %c0_63] : memref<3x4xf32, #tpu.memory_space<smem>>
    %152 = vector.broadcast %151 : f32 to vector<128x128xf32>
    %153 = arith.mulf %152, %145 : vector<128x128xf32>
    %c1_64 = arith.constant 1 : index
    %c0_65 = arith.constant 0 : index
    %c0_66 = arith.constant 0 : index
    %154 = vector.load %arg3[%c1_64, %c0_65, %c0_66] : memref<4x128x128xf32, #tpu.memory_space<vmem>>, vector<1x128x128xf32>
    %155 = vector.shape_cast %154 : vector<1x128x128xf32> to vector<128x128xf32>
    %156 = arith.index_cast %143 : i32 to index
    %c1_67 = arith.constant 1 : index
    %157 = memref.load %arg1[%156, %c1_67] : memref<3x4xf32, #tpu.memory_space<smem>>
    %158 = vector.broadcast %157 : f32 to vector<128x128xf32>
    %159 = arith.mulf %158, %155 : vector<128x128xf32>
    %160 = arith.addf %149, %159 : vector<128x128xf32>
    %161 = arith.index_cast %143 : i32 to index
    %c1_68 = arith.constant 1 : index
    %162 = memref.load %arg2[%161, %c1_68] : memref<3x4xf32, #tpu.memory_space<smem>>
    %163 = vector.broadcast %162 : f32 to vector<128x128xf32>
    %164 = arith.mulf %163, %155 : vector<128x128xf32>
    %165 = arith.addf %153, %164 : vector<128x128xf32>
    %c2_69 = arith.constant 2 : index
    %c0_70 = arith.constant 0 : index
    %c0_71 = arith.constant 0 : index
    %166 = vector.load %arg3[%c2_69, %c0_70, %c0_71] : memref<4x128x128xf32, #tpu.memory_space<vmem>>, vector<1x128x128xf32>
    %167 = vector.shape_cast %166 : vector<1x128x128xf32> to vector<128x128xf32>
    %168 = arith.index_cast %143 : i32 to index
    %c2_72 = arith.constant 2 : index
    %169 = memref.load %arg1[%168, %c2_72] : memref<3x4xf32, #tpu.memory_space<smem>>
    %170 = vector.broadcast %169 : f32 to vector<128x128xf32>
    %171 = arith.mulf %170, %167 : vector<128x128xf32>
    %172 = arith.addf %160, %171 : vector<128x128xf32>
    %173 = arith.index_cast %143 : i32 to index
    %c2_73 = arith.constant 2 : index
    %174 = memref.load %arg2[%173, %c2_73] : memref<3x4xf32, #tpu.memory_space<smem>>
    %175 = vector.broadcast %174 : f32 to vector<128x128xf32>
    %176 = arith.mulf %175, %167 : vector<128x128xf32>
    %177 = arith.addf %165, %176 : vector<128x128xf32>
    %c3_74 = arith.constant 3 : index
    %c0_75 = arith.constant 0 : index
    %c0_76 = arith.constant 0 : index
    %178 = vector.load %arg3[%c3_74, %c0_75, %c0_76] : memref<4x128x128xf32, #tpu.memory_space<vmem>>, vector<1x128x128xf32>
    %179 = vector.shape_cast %178 : vector<1x128x128xf32> to vector<128x128xf32>
    %180 = arith.index_cast %143 : i32 to index
    %c3_77 = arith.constant 3 : index
    %181 = memref.load %arg1[%180, %c3_77] : memref<3x4xf32, #tpu.memory_space<smem>>
    %182 = vector.broadcast %181 : f32 to vector<128x128xf32>
    %183 = arith.mulf %182, %179 : vector<128x128xf32>
    %184 = arith.addf %172, %183 : vector<128x128xf32>
    %185 = arith.index_cast %143 : i32 to index
    %c3_78 = arith.constant 3 : index
    %186 = memref.load %arg2[%185, %c3_78] : memref<3x4xf32, #tpu.memory_space<smem>>
    %187 = vector.broadcast %186 : f32 to vector<128x128xf32>
    %188 = arith.mulf %187, %179 : vector<128x128xf32>
    %189 = arith.addf %177, %188 : vector<128x128xf32>
    %190 = math.exp %184 : vector<128x128xf32>
    %191 = math.exp %189 : vector<128x128xf32>
    %cst_79 = arith.constant dense<0.000000e+00> : vector<128xf32>
    %192 = vector.multi_reduction <add>, %190, %cst_79 [0] : vector<128x128xf32> to vector<128xf32>
    %193 = vector.shape_cast %192 : vector<128xf32> to vector<1x128xf32>
    %cst_80 = arith.constant 9.99999997E-7 : f32
    %194 = vector.broadcast %cst_80 : f32 to vector<1x128xf32>
    %195 = arith.addf %193, %194 : vector<1x128xf32>
    %196 = tpu.reciprocal %195 : vector<1x128xf32> -> vector<1x128xf32>
    %cst_81 = arith.constant dense<0.000000e+00> : vector<128xf32>
    %197 = vector.multi_reduction <add>, %191, %cst_81 [0] : vector<128x128xf32> to vector<128xf32>
    %198 = vector.shape_cast %197 : vector<128xf32> to vector<1x128xf32>
    %cst_82 = arith.constant 9.99999997E-7 : f32
    %199 = vector.broadcast %cst_82 : f32 to vector<1x128xf32>
    %200 = arith.addf %198, %199 : vector<1x128xf32>
    %201 = tpu.reciprocal %200 : vector<1x128xf32> -> vector<1x128xf32>
    %202 = vector.broadcast %196 : vector<1x128xf32> to vector<128x128xf32>
    %203 = arith.mulf %190, %202 : vector<128x128xf32>
    %204 = vector.broadcast %201 : vector<1x128xf32> to vector<128x128xf32>
    %205 = arith.mulf %191, %204 : vector<128x128xf32>
    %c2_83 = arith.constant 2 : index
    %c0_84 = arith.constant 0 : index
    %c0_85 = arith.constant 0 : index
    %206 = vector.load %arg5[%c2_83, %c0_84, %c0_85] : memref<3x128x128xf32, #tpu.memory_space<vmem>>, vector<1x128x128xf32>
    %207 = vector.shape_cast %206 : vector<1x128x128xf32> to vector<128x128xf32>
    %208 = vector.shape_cast %203 : vector<128x128xf32> to vector<1x128x128xf32>
    tpu.vector_store %arg5[%c2_83, %c0_84, %c0_85], %208 {strides = array<i32>} : memref<3x128x128xf32, #tpu.memory_space<vmem>>, vector<1x128x128xf32>,
    %cst_86 = arith.constant dense<0.000000e+00> : vector<128x128xf32>
    %209 = tpu.matmul %203, %205, %cst_86 {dimension_numbers = #tpu.dot_dimension_numbers<[1], [0], [0], [1], [0, 0, 1, 1], [], []>} : vector<128x128xf32>, vector<128x128xf32>, vector<128x128xf32> -> vector<128x128xf32>
    %c2_87 = arith.constant 2 : index
    %c0_88 = arith.constant 0 : index
    %c0_89 = arith.constant 0 : index
    %210 = vector.load %arg4[%c2_87, %c0_88, %c0_89] : memref<3x128x128xf32, #tpu.memory_space<vmem>>, vector<1x128x128xf32>
    %211 = vector.shape_cast %210 : vector<1x128x128xf32> to vector<128x128xf32>
    %212 = vector.shape_cast %209 : vector<128x128xf32> to vector<1x128x128xf32>
    tpu.vector_store %arg4[%c2_87, %c0_88, %c0_89], %212 {strides = array<i32>} : memref<3x128x128xf32, #tpu.memory_space<vmem>>, vector<1x128x128xf32>,
    return
  }
  func.func @transform_0(%arg0: i32) -> (i32, i32) {
    %c0_i32 = arith.constant 0 : i32
    %c0_i32_0 = arith.constant 0 : i32
    %c0_i32_1 = arith.constant 0 : i32
    return %c0_i32, %c0_i32_0 : i32, i32
  }
  func.func @transform_1(%arg0: i32) -> (i32, i32) {
    %c0_i32 = arith.constant 0 : i32
    %c0_i32_0 = arith.constant 0 : i32
    %c0_i32_1 = arith.constant 0 : i32
    return %c0_i32, %c0_i32_0 : i32, i32
  }
  func.func @transform_2(%arg0: i32) -> (i32, i32, i32) {
    %c0_i32 = arith.constant 0 : i32
    %c0_i32_0 = arith.constant 0 : i32
    %c0_i32_1 = arith.constant 0 : i32
    %c0_i32_2 = arith.constant 0 : i32
    return %c0_i32, %c0_i32_0, %c0_i32_1 : i32, i32, i32
  }
  func.func @transform_3(%arg0: i32) -> (i32, i32, i32) {
    %c0_i32 = arith.constant 0 : i32
    %c0_i32_0 = arith.constant 0 : i32
    %c0_i32_1 = arith.constant 0 : i32
    return %arg0, %c0_i32, %c0_i32_0 : i32, i32, i32
  }
  func.func @transform_4(%arg0: i32) -> (i32, i32, i32) {
    %c0_i32 = arith.constant 0 : i32
    %c0_i32_0 = arith.constant 0 : i32
    %c0_i32_1 = arith.constant 0 : i32
    return %arg0, %c0_i32, %c0_i32_0 : i32, i32, i32
  }
}

</mosaic_0001>

<llo_original>
// kernel: _hmae_pallas.1
$region0: #{_hmae_pallas.1}
  #allocation0 [shape = 'u32[]', space=smem, size = 0x4, offset = 0x4, fixed_abs, tag = 'smem constant byte address 0x4 - core index']
  #allocation1 [shape = 'u32[144,128]{1,0:T(1,128)}', space=vmem, size = 0x12000, scoped, tag = 'internal scratch']
  %s0 = inlined_call_operand.hbm [shape: f32[3,4], index: 0, kind: input, shape index: {}]
  %s1 = inlined_call_operand.hbm [shape: f32[3,4], index: 1, kind: input, shape index: {}]
  %s2 = inlined_call_operand.hbm [shape: f32[4,128,128], index: 2, kind: input, shape index: {}]
  %s3 = inlined_call_operand.hbm [shape: f32[3,128,128], index: 3, kind: output, shape index: {0}]
  %s4 = inlined_call_operand.hbm [shape: f32[3,128,128], index: 4, kind: output, shape index: {1}]
  %5 = xla_tuple %s3, %s4
  %s6 = sld [smem:[#allocation0]]
  $region42: #{_hmae_pallas.1} parent=0
    _
  %s8 = ssub.s32 1, %s6
  %s9 = scalar_select 0, %s8, %s6
  $region1: #{_hmae_pallas.1} parent=0
    #allocation2 [shape = 'u8[2048]{0}', space=smem, size = 0x800, scoped, tag = 'input window, operand 0, single buffered']
    #allocation3 [shape = 's32[1]{0}', space=sflag, size = 0x4, scoped, tag = 'scoped memory for _hmae_pallas.1']
    #allocation4 [shape = 's32[1]{0}', space=sflag, size = 0x4, scoped, tag = 'scoped memory for _hmae_pallas.1']
    #allocation5 [shape = 's32[1]{0}', space=sflag, size = 0x4, scoped, tag = 'scoped memory for _hmae_pallas.1']
    #allocation6 [shape = 'u8[2048]{0}', space=smem, size = 0x800, scoped, tag = 'input window, operand 1, single buffered']
    #allocation7 [shape = 's32[1]{0}', space=sflag, size = 0x4, scoped, tag = 'scoped memory for _hmae_pallas.1']
    #allocation8 [shape = 'u8[262144]{0}', space=vmem, size = 0x40000, scoped, tag = 'input window, operand 2, single buffered']
    #allocation9 [shape = 'u8[196608]{0}', space=vmem, size = 0x30000, scoped, tag = 'output window, operand 0, single buffered']
    #allocation10 [shape = 'u8[196608]{0}', space=vmem, size = 0x30000, scoped, tag = 'output window, operand 1, single buffered']
    #allocation11 [shape = 's32[1]{0}', space=sflag, size = 0x4, scoped, tag = 'scoped memory for _hmae_pallas.1']
    %10 = vsyncpa [#allocation5], 0
    %11 = vsyncpa [#allocation7], 0
    %12 = vsyncpa [#allocation3], 0
    %13 = vsyncpa [#allocation4], 0
    %14 = vsyncpa [#allocation11], 0
    // Predicated region
    $region2: #{_hmae_pallas.1} parent=1 // pred_check
      _
    $region3: #{_hmae_pallas.1} parent=1 // pred_check_branch
      %16 = sbr.rel (0) target = $region5
    $region4: #{_hmae_pallas.1} parent=1 // pred_region
      %s18 = ssub.s32 64, 64
      %19 = vsyncadd [#allocation5], %s18
      %22 = dma.hbm_to_smem %s0, 64, [#allocation2], [#allocation5]
    $region5: #{_hmae_pallas.1} parent=1 // pred_fallthru
      _
    // Predicated region
    $region6: #{_hmae_pallas.1} parent=1 // pred_check
      _
    $region7: #{_hmae_pallas.1} parent=1 // pred_check_branch
      %24 = sbr.rel (0) target = $region9
    $region8: #{_hmae_pallas.1} parent=1 // pred_region
      %s26 = ssub.s32 64, 64
      %27 = vsyncadd [#allocation7], %s26
      %30 = dma.hbm_to_smem %s1, 64, [#allocation6], [#allocation7]
    $region9: #{_hmae_pallas.1} parent=1 // pred_fallthru
      _
    // Predicated region
    $region10: #{_hmae_pallas.1} parent=1 // pred_check
      _
    $region11: #{_hmae_pallas.1} parent=1 // pred_check_branch
      %32 = sbr.rel (0) target = $region13
    $region12: #{_hmae_pallas.1} parent=1 // pred_region
      %s34 = ssub.s32 8192, 8192
      %35 = vsyncadd [#allocation3], %s34
      %s36 = sshll.u32 [#allocation8], 4
      %s37 = int_to_ptr.vmem [resolvable:$true] %s36
      %42 = dma.hbm_to_vmem [thread:$0]  %s2, 8192, %s37, [#allocation3], 128, 128, 8
    $region13: #{_hmae_pallas.1} parent=1 // pred_fallthru
      _
    // Predicated region
    $region14: #{_hmae_pallas.1} parent=1 // pred_check
      _
    $region15: #{_hmae_pallas.1} parent=1 // pred_check_branch
      %44 = sbr.rel (0) target = $region17
    $region16: #{_hmae_pallas.1} parent=1 // pred_region
      %45 = dma.done [#allocation5], 64
    $region17: #{_hmae_pallas.1} parent=1 // pred_fallthru
      _
    // Predicated region
    $region18: #{_hmae_pallas.1} parent=1 // pred_check
      _
    $region19: #{_hmae_pallas.1} parent=1 // pred_check_branch
      %47 = sbr.rel (0) target = $region21
    $region20: #{_hmae_pallas.1} parent=1 // pred_region
      %48 = dma.done [#allocation7], 64
    $region21: #{_hmae_pallas.1} parent=1 // pred_fallthru
      _
    // Predicated region
    $region22: #{_hmae_pallas.1} parent=1 // pred_check
      _
    $region23: #{_hmae_pallas.1} parent=1 // pred_check_branch
      %50 = sbr.rel (0) target = $region25
    $region24: #{_hmae_pallas.1} parent=1 // pred_region
      %51 = dma.done [#allocation3], 8192
    $region25: #{_hmae_pallas.1} parent=1 // pred_fallthru
      _
    %52 = sfence
    %s53 = smul.u32 0, 3
    %v54 = vld [vmem:[#allocation8] sm:$0xff]
    %v55 = vld [vmem:[#allocation8 + $0x8] sm:$0xff]
    %v56 = vld [vmem:[#allocation8 + $0x10] sm:$0xff]
    %v57 = vld [vmem:[#allocation8 + $0x18] sm:$0xff]
    %v58 = vld [vmem:[#allocation8 + $0x20] sm:$0xff]
    %v59 = vld [vmem:[#allocation8 + $0x28] sm:$0xff]
    %v60 = vld [vmem:[#allocation8 + $0x30] sm:$0xff]
    %v61 = vld [vmem:[#allocation8 + $0x38] sm:$0xff]
    %v62 = vld [vmem:[#allocation8 + $0x40] sm:$0xff]
    %v63 = vld [vmem:[#allocation8 + $0x48] sm:$0xff]
    %v64 = vld [vmem:[#allocation8 + $0x50] sm:$0xff]
    %v65 = vld [vmem:[#allocation8 + $0x58] sm:$0xff]
    %v66 = vld [vmem:[#allocation8 + $0x60] sm:$0xff]
    %v67 = vld [vmem:[#allocation8 + $0x68] sm:$0xff]
    %v68 = vld [vmem:[#allocation8 + $0x70] sm:$0xff]
    %v69 = vld [vmem:[#allocation8 + $0x78] sm:$0xff]
    %s70 = smul.u32 %s53, 128
    %s71 = sld [smem:[#allocation2 + %s70]]
    %v72 = vstv %s71
    %v73 = vmul.f32 %v72, %v54
    %v74 = vmul.f32 %v72, %v55
    %v75 = vmul.f32 %v72, %v56
    %v76 = vmul.f32 %v72, %v57
    %v77 = vmul.f32 %v72, %v58
    %v78 = vmul.f32 %v72, %v59
    %v79 = vmul.f32 %v72, %v60
    %v80 = vmul.f32 %v72, %v61
    %v81 = vmul.f32 %v72, %v62
    %v82 = vmul.f32 %v72, %v63
    %v83 = vmul.f32 %v72, %v64
    %v84 = vmul.f32 %v72, %v65
    %v85 = vmul.f32 %v72, %v66
    %v86 = vmul.f32 %v72, %v67
    %v87 = vmul.f32 %v72, %v68
    %v88 = vmul.f32 %v72, %v69
    %s89 = sld [smem:[#allocation6 + %s70]]
    %v90 = vstv %s89
    %v91 = vmul.f32 %v90, %v54
    %v92 = vmul.f32 %v90, %v55
    %v93 = vmul.f32 %v90, %v56
    %v94 = vmul.f32 %v90, %v57
    %v95 = vmul.f32 %v90, %v58
    %v96 = vmul.f32 %v90, %v59
    %v97 = vmul.f32 %v90, %v60
    %v98 = vmul.f32 %v90, %v61
    %v99 = vmul.f32 %v90, %v62
    %v100 = vmul.f32 %v90, %v63
    %v101 = vmul.f32 %v90, %v64
    %v102 = vmul.f32 %v90, %v65
    %v103 = vmul.f32 %v90, %v66
    %v104 = vmul.f32 %v90, %v67
    %v105 = vmul.f32 %v90, %v68
    %v106 = vmul.f32 %v90, %v69
    %s107 = scalar_lea.vmem [#allocation8], 128
    %v108 = vld [vmem:[%s107] sm:$0xff]
    %v109 = vld [vmem:[%s107 + $0x8] sm:$0xff]
    %v110 = vld [vmem:[%s107 + $0x10] sm:$0xff]
    %v111 = vld [vmem:[%s107 + $0x18] sm:$0xff]
    %v112 = vld [vmem:[%s107 + $0x20] sm:$0xff]
    %v113 = vld [vmem:[%s107 + $0x28] sm:$0xff]
    %v114 = vld [vmem:[%s107 + $0x30] sm:$0xff]
    %v115 = vld [vmem:[%s107 + $0x38] sm:$0xff]
    %v116 = vld [vmem:[%s107 + $0x40] sm:$0xff]
    %v117 = vld [vmem:[%s107 + $0x48] sm:$0xff]
    %v118 = vld [vmem:[%s107 + $0x50] sm:$0xff]
    %v119 = vld [vmem:[%s107 + $0x58] sm:$0xff]
    %v120 = vld [vmem:[%s107 + $0x60] sm:$0xff]
    %v121 = vld [vmem:[%s107 + $0x68] sm:$0xff]
    %v122 = vld [vmem:[%s107 + $0x70] sm:$0xff]
    %v123 = vld [vmem:[%s107 + $0x78] sm:$0xff]
    %s124 = sadd.s32 %s70, 1
    %s125 = sld [smem:[#allocation2 + %s124]]
    %v126 = vstv %s125
    %v127 = vmul.f32 %v126, %v108
    %v128 = vmul.f32 %v126, %v109
    %v129 = vmul.f32 %v126, %v110
    %v130 = vmul.f32 %v126, %v111
    %v131 = vmul.f32 %v126, %v112
    %v132 = vmul.f32 %v126, %v113
    %v133 = vmul.f32 %v126, %v114
    %v134 = vmul.f32 %v126, %v115
    %v135 = vmul.f32 %v126, %v116
    %v136 = vmul.f32 %v126, %v117
    %v137 = vmul.f32 %v126, %v118
    %v138 = vmul.f32 %v126, %v119
    %v139 = vmul.f32 %v126, %v120
    %v140 = vmul.f32 %v126, %v121
    %v141 = vmul.f32 %v126, %v122
    %v142 = vmul.f32 %v126, %v123
    %v143 = vadd.f32 %v73, %v127
    %v144 = vadd.f32 %v74, %v128
    %v145 = vadd.f32 %v75, %v129
    %v146 = vadd.f32 %v76, %v130
    %v147 = vadd.f32 %v77, %v131
    %v148 = vadd.f32 %v78, %v132
    %v149 = vadd.f32 %v79, %v133
    %v150 = vadd.f32 %v80, %v134
    %v151 = vadd.f32 %v81, %v135
    %v152 = vadd.f32 %v82, %v136
    %v153 = vadd.f32 %v83, %v137
    %v154 = vadd.f32 %v84, %v138
    %v155 = vadd.f32 %v85, %v139
    %v156 = vadd.f32 %v86, %v140
    %v157 = vadd.f32 %v87, %v141
    %v158 = vadd.f32 %v88, %v142
    %s159 = sld [smem:[#allocation6 + %s124]]
    %v160 = vstv %s159
    %v161 = vmul.f32 %v160, %v108
    %v162 = vmul.f32 %v160, %v109
    %v163 = vmul.f32 %v160, %v110
    %v164 = vmul.f32 %v160, %v111
    %v165 = vmul.f32 %v160, %v112
    %v166 = vmul.f32 %v160, %v113
    %v167 = vmul.f32 %v160, %v114
    %v168 = vmul.f32 %v160, %v115
    %v169 = vmul.f32 %v160, %v116
    %v170 = vmul.f32 %v160, %v117
    %v171 = vmul.f32 %v160, %v118
    %v172 = vmul.f32 %v160, %v119
    %v173 = vmul.f32 %v160, %v120
    %v174 = vmul.f32 %v160, %v121
    %v175 = vmul.f32 %v160, %v122
    %v176 = vmul.f32 %v160, %v123
    %v177 = vadd.f32 %v91, %v161
    %v178 = vadd.f32 %v92, %v162
    %v179 = vadd.f32 %v93, %v163
    %v180 = vadd.f32 %v94, %v164
    %v181 = vadd.f32 %v95, %v165
    %v182 = vadd.f32 %v96, %v166
    %v183 = vadd.f32 %v97, %v167
    %v184 = vadd.f32 %v98, %v168
    %v185 = vadd.f32 %v99, %v169
    %v186 = vadd.f32 %v100, %v170
    %v187 = vadd.f32 %v101, %v171
    %v188 = vadd.f32 %v102, %v172
    %v189 = vadd.f32 %v103, %v173
    %v190 = vadd.f32 %v104, %v174
    %v191 = vadd.f32 %v105, %v175
    %v192 = vadd.f32 %v106, %v176
    %s193 = scalar_lea.vmem [#allocation8], 256
    %v194 = vld [vmem:[%s193] sm:$0xff]
    %v195 = vld [vmem:[%s193 + $0x8] sm:$0xff]
    %v196 = vld [vmem:[%s193 + $0x10] sm:$0xff]
    %v197 = vld [vmem:[%s193 + $0x18] sm:$0xff]
    %v198 = vld [vmem:[%s193 + $0x20] sm:$0xff]
    %v199 = vld [vmem:[%s193 + $0x28] sm:$0xff]
    %v200 = vld [vmem:[%s193 + $0x30] sm:$0xff]
    %v201 = vld [vmem:[%s193 + $0x38] sm:$0xff]
    %v202 = vld [vmem:[%s193 + $0x40] sm:$0xff]
    %v203 = vld [vmem:[%s193 + $0x48] sm:$0xff]
    %v204 = vld [vmem:[%s193 + $0x50] sm:$0xff]
    %v205 = vld [vmem:[%s193 + $0x58] sm:$0xff]
    %v206 = vld [vmem:[%s193 + $0x60] sm:$0xff]
    %v207 = vld [vmem:[%s193 + $0x68] sm:$0xff]
    %v208 = vld [vmem:[%s193 + $0x70] sm:$0xff]
    %v209 = vld [vmem:[%s193 + $0x78] sm:$0xff]
    %s210 = sadd.s32 %s70, 2
    %s211 = sld [smem:[#allocation2 + %s210]]
    %v212 = vstv %s211
    %v213 = vmul.f32 %v212, %v194
    %v214 = vmul.f32 %v212, %v195
    %v215 = vmul.f32 %v212, %v196
    %v216 = vmul.f32 %v212, %v197
    %v217 = vmul.f32 %v212, %v198
    %v218 = vmul.f32 %v212, %v199
    %v219 = vmul.f32 %v212, %v200
    %v220 = vmul.f32 %v212, %v201
    %v221 = vmul.f32 %v212, %v202
    %v222 = vmul.f32 %v212, %v203
    %v223 = vmul.f32 %v212, %v204
    %v224 = vmul.f32 %v212, %v205
    %v225 = vmul.f32 %v212, %v206
    %v226 = vmul.f32 %v212, %v207
    %v227 = vmul.f32 %v212, %v208
    %v228 = vmul.f32 %v212, %v209
    %v229 = vadd.f32 %v143, %v213
    %v230 = vadd.f32 %v144, %v214
    %v231 = vadd.f32 %v145, %v215
    %v232 = vadd.f32 %v146, %v216
    %v233 = vadd.f32 %v147, %v217
    %v234 = vadd.f32 %v148, %v218
    %v235 = vadd.f32 %v149, %v219
    %v236 = vadd.f32 %v150, %v220
    %v237 = vadd.f32 %v151, %v221
    %v238 = vadd.f32 %v152, %v222
    %v239 = vadd.f32 %v153, %v223
    %v240 = vadd.f32 %v154, %v224
    %v241 = vadd.f32 %v155, %v225
    %v242 = vadd.f32 %v156, %v226
    %v243 = vadd.f32 %v157, %v227
    %v244 = vadd.f32 %v158, %v228
    %s245 = sld [smem:[#allocation6 + %s210]]
    %v246 = vstv %s245
    %v247 = vmul.f32 %v246, %v194
    %v248 = vmul.f32 %v246, %v195
    %v249 = vmul.f32 %v246, %v196
    %v250 = vmul.f32 %v246, %v197
    %v251 = vmul.f32 %v246, %v198
    %v252 = vmul.f32 %v246, %v199
    %v253 = vmul.f32 %v246, %v200
    %v254 = vmul.f32 %v246, %v201
    %v255 = vmul.f32 %v246, %v202
    %v256 = vmul.f32 %v246, %v203
    %v257 = vmul.f32 %v246, %v204
    %v258 = vmul.f32 %v246, %v205
    %v259 = vmul.f32 %v246, %v206
    %v260 = vmul.f32 %v246, %v207
    %v261 = vmul.f32 %v246, %v208
    %v262 = vmul.f32 %v246, %v209
    %v263 = vadd.f32 %v177, %v247
    %v264 = vadd.f32 %v178, %v248
    %v265 = vadd.f32 %v179, %v249
    %v266 = vadd.f32 %v180, %v250
    %v267 = vadd.f32 %v181, %v251
    %v268 = vadd.f32 %v182, %v252
    %v269 = vadd.f32 %v183, %v253
    %v270 = vadd.f32 %v184, %v254
    %v271 = vadd.f32 %v185, %v255
    %v272 = vadd.f32 %v186, %v256
    %v273 = vadd.f32 %v187, %v257
    %v274 = vadd.f32 %v188, %v258
    %v275 = vadd.f32 %v189, %v259
    %v276 = vadd.f32 %v190, %v260
    %v277 = vadd.f32 %v191, %v261
    %v278 = vadd.f32 %v192, %v262
    %s279 = scalar_lea.vmem [#allocation8], 384
    %v280 = vld [vmem:[%s279] sm:$0xff]
    %v281 = vld [vmem:[%s279 + $0x8] sm:$0xff]
    %v282 = vld [vmem:[%s279 + $0x10] sm:$0xff]
    %v283 = vld [vmem:[%s279 + $0x18] sm:$0xff]
    %v284 = vld [vmem:[%s279 + $0x20] sm:$0xff]
    %v285 = vld [vmem:[%s279 + $0x28] sm:$0xff]
    %v286 = vld [vmem:[%s279 + $0x30] sm:$0xff]
    %v287 = vld [vmem:[%s279 + $0x38] sm:$0xff]
    %v288 = vld [vmem:[%s279 + $0x40] sm:$0xff]
    %v289 = vld [vmem:[%s279 + $0x48] sm:$0xff]
    %v290 = vld [vmem:[%s279 + $0x50] sm:$0xff]
    %v291 = vld [vmem:[%s279 + $0x58] sm:$0xff]
    %v292 = vld [vmem:[%s279 + $0x60] sm:$0xff]
    %v293 = vld [vmem:[%s279 + $0x68] sm:$0xff]
    %v294 = vld [vmem:[%s279 + $0x70] sm:$0xff]
    %v295 = vld [vmem:[%s279 + $0x78] sm:$0xff]
    %s296 = sadd.s32 %s70, 3
    %s297 = sld [smem:[#allocation2 + %s296]]
    %v298 = vstv %s297
    %v299 = vmul.f32 %v298, %v280
    %v300 = vmul.f32 %v298, %v281
    %v301 = vmul.f32 %v298, %v282
    %v302 = vmul.f32 %v298, %v283
    %v303 = vmul.f32 %v298, %v284
    %v304 = vmul.f32 %v298, %v285
    %v305 = vmul.f32 %v298, %v286
    %v306 = vmul.f32 %v298, %v287
    %v307 = vmul.f32 %v298, %v288
    %v308 = vmul.f32 %v298, %v289
    %v309 = vmul.f32 %v298, %v290
    %v310 = vmul.f32 %v298, %v291
    %v311 = vmul.f32 %v298, %v292
    %v312 = vmul.f32 %v298, %v293
    %v313 = vmul.f32 %v298, %v294
    %v314 = vmul.f32 %v298, %v295
    %v315 = vadd.f32 %v229, %v299
    %v316 = vadd.f32 %v230, %v300
    %v317 = vadd.f32 %v231, %v301
    %v318 = vadd.f32 %v232, %v302
    %v319 = vadd.f32 %v233, %v303
    %v320 = vadd.f32 %v234, %v304
    %v321 = vadd.f32 %v235, %v305
    %v322 = vadd.f32 %v236, %v306
    %v323 = vadd.f32 %v237, %v307
    %v324 = vadd.f32 %v238, %v308
    %v325 = vadd.f32 %v239, %v309
    %v326 = vadd.f32 %v240, %v310
    %v327 = vadd.f32 %v241, %v311
    %v328 = vadd.f32 %v242, %v312
    %v329 = vadd.f32 %v243, %v313
    %v330 = vadd.f32 %v244, %v314
    %s331 = sld [smem:[#allocation6 + %s296]]
    %v332 = vstv %s331
    %v333 = vmul.f32 %v332, %v280
    %v334 = vmul.f32 %v332, %v281
    %v335 = vmul.f32 %v332, %v282
    %v336 = vmul.f32 %v332, %v283
    %v337 = vmul.f32 %v332, %v284
    %v338 = vmul.f32 %v332, %v285
    %v339 = vmul.f32 %v332, %v286
    %v340 = vmul.f32 %v332, %v287
    %v341 = vmul.f32 %v332, %v288
    %v342 = vmul.f32 %v332, %v289
    %v343 = vmul.f32 %v332, %v290
    %v344 = vmul.f32 %v332, %v291
    %v345 = vmul.f32 %v332, %v292
    %v346 = vmul.f32 %v332, %v293
    %v347 = vmul.f32 %v332, %v294
    %v348 = vmul.f32 %v332, %v295
    %v349 = vadd.f32 %v263, %v333
    %v350 = vadd.f32 %v264, %v334
    %v351 = vadd.f32 %v265, %v335
    %v352 = vadd.f32 %v266, %v336
    %v353 = vadd.f32 %v267, %v337
    %v354 = vadd.f32 %v268, %v338
    %v355 = vadd.f32 %v269, %v339
    %v356 = vadd.f32 %v270, %v340
    %v357 = vadd.f32 %v271, %v341
    %v358 = vadd.f32 %v272, %v342
    %v359 = vadd.f32 %v273, %v343
    %v360 = vadd.f32 %v274, %v344
    %v361 = vadd.f32 %v275, %v345
    %v362 = vadd.f32 %v276, %v346
    %v363 = vadd.f32 %v277, %v347
    %v364 = vadd.f32 %v278, %v348
    %v365 = vmul.f32 %v315, 1.442695
    %v366 = vpow.pop %v365
    %v367 = vmul.f32 %v316, 1.442695
    %v368 = vpow.pop %v367
    %v369 = vmul.f32 %v317, 1.442695
    %v370 = vpow.pop %v369
    %v371 = vmul.f32 %v318, 1.442695
    %v372 = vpow.pop %v371
    %v373 = vmul.f32 %v319, 1.442695
    %v374 = vpow.pop %v373
    %v375 = vmul.f32 %v320, 1.442695
    %v376 = vpow.pop %v375
    %v377 = vmul.f32 %v321, 1.442695
    %v378 = vpow.pop %v377
    %v379 = vmul.f32 %v322, 1.442695
    %v380 = vpow.pop %v379
    %v381 = vmul.f32 %v323, 1.442695
    %v382 = vpow.pop %v381
    %v383 = vmul.f32 %v324, 1.442695
    %v384 = vpow.pop %v383
    %v385 = vmul.f32 %v325, 1.442695
    %v386 = vpow.pop %v385
    %v387 = vmul.f32 %v326, 1.442695
    %v388 = vpow.pop %v387
    %v389 = vmul.f32 %v327, 1.442695
    %v390 = vpow.pop %v389
    %v391 = vmul.f32 %v328, 1.442695
    %v392 = vpow.pop %v391
    %v393 = vmul.f32 %v329, 1.442695
    %v394 = vpow.pop %v393
    %v395 = vmul.f32 %v330, 1.442695
    %v396 = vpow.pop %v395
    %v397 = vmul.f32 %v349, 1.442695
    %v398 = vpow.pop %v397
    %v399 = vmul.f32 %v350, 1.442695
    %v400 = vpow.pop %v399
    %v401 = vmul.f32 %v351, 1.442695
    %v402 = vpow.pop %v401
    %v403 = vmul.f32 %v352, 1.442695
    %v404 = vpow.pop %v403
    %v405 = vmul.f32 %v353, 1.442695
    %v406 = vpow.pop %v405
    %v407 = vmul.f32 %v354, 1.442695
    %v408 = vpow.pop %v407
    %v409 = vmul.f32 %v355, 1.442695
    %v410 = vpow.pop %v409
    %v411 = vmul.f32 %v356, 1.442695
    %v412 = vpow.pop %v411
    %v413 = vmul.f32 %v357, 1.442695
    %v414 = vpow.pop %v413
    %v415 = vmul.f32 %v358, 1.442695
    %v416 = vpow.pop %v415
    %v417 = vmul.f32 %v359, 1.442695
    %v418 = vpow.pop %v417
    %v419 = vmul.f32 %v360, 1.442695
    %v420 = vpow.pop %v419
    %v421 = vmul.f32 %v361, 1.442695
    %v422 = vpow.pop %v421
    %v423 = vmul.f32 %v362, 1.442695
    %v424 = vpow.pop %v423
    %v425 = vmul.f32 %v363, 1.442695
    %v426 = vpow.pop %v425
    %v427 = vmul.f32 %v364, 1.442695
    %v428 = vpow.pop %v427
    %v429 = vadd.f32 %v366, %v368
    %v430 = vadd.f32 %v429, %v370
    %v431 = vadd.f32 %v430, %v372
    %v432 = vadd.f32 %v431, %v374
    %v433 = vadd.f32 %v432, %v376
    %v434 = vadd.f32 %v433, %v378
    %v435 = vadd.f32 %v434, %v380
    %v436 = vadd.f32 %v435, %v382
    %v437 = vadd.f32 %v436, %v384
    %v438 = vadd.f32 %v437, %v386
    %v439 = vadd.f32 %v438, %v388
    %v440 = vadd.f32 %v439, %v390
    %v441 = vadd.f32 %v440, %v392
    %v442 = vadd.f32 %v441, %v394
    %v443 = vadd.f32 %v442, %v396
    %v444 = vrot.slane %v443, 4
    %v445 = vadd.f32 %v443, %v444
    %v446 = vrot.slane %v445, 2
    %v447 = vadd.f32 %v445, %v446
    %v448 = vrot.slane %v447, 1
    %v449 = vadd.f32 %v447, %v448
    %v450 = vadd.f32 %v449, 1e-06
    %v451 = vrcp.pop %v450
    %v452 = vadd.f32 %v398, %v400
    %v453 = vadd.f32 %v452, %v402
    %v454 = vadd.f32 %v453, %v404
    %v455 = vadd.f32 %v454, %v406
    %v456 = vadd.f32 %v455, %v408
    %v457 = vadd.f32 %v456, %v410
    %v458 = vadd.f32 %v457, %v412
    %v459 = vadd.f32 %v458, %v414
    %v460 = vadd.f32 %v459, %v416
    %v461 = vadd.f32 %v460, %v418
    %v462 = vadd.f32 %v461, %v420
    %v463 = vadd.f32 %v462, %v422
    %v464 = vadd.f32 %v463, %v424
    %v465 = vadd.f32 %v464, %v426
    %v466 = vadd.f32 %v465, %v428
    %v467 = vrot.slane %v466, 4
    %v468 = vadd.f32 %v466, %v467
    %v469 = vrot.slane %v468, 2
    %v470 = vadd.f32 %v468, %v469
    %v471 = vrot.slane %v470, 1
    %v472 = vadd.f32 %v470, %v471
    %v473 = vadd.f32 %v472, 1e-06
    %v474 = vrcp.pop %v473
    %v475 = vmul.f32 %v366, %v451
    %v476 = vmul.f32 %v368, %v451
    %v477 = vmul.f32 %v370, %v451
    %v478 = vmul.f32 %v372, %v451
    %v479 = vmul.f32 %v374, %v451
    %v480 = vmul.f32 %v376, %v451
    %v481 = vmul.f32 %v378, %v451
    %v482 = vmul.f32 %v380, %v451
    %v483 = vmul.f32 %v382, %v451
    %v484 = vmul.f32 %v384, %v451
    %v485 = vmul.f32 %v386, %v451
    %v486 = vmul.f32 %v388, %v451
    %v487 = vmul.f32 %v390, %v451
    %v488 = vmul.f32 %v392, %v451
    %v489 = vmul.f32 %v394, %v451
    %v490 = vmul.f32 %v396, %v451
    %v491 = vmul.f32 %v398, %v474
    %v492 = vmul.f32 %v400, %v474
    %v493 = vmul.f32 %v402, %v474
    %v494 = vmul.f32 %v404, %v474
    %v495 = vmul.f32 %v406, %v474
    %v496 = vmul.f32 %v408, %v474
    %v497 = vmul.f32 %v410, %v474
    %v498 = vmul.f32 %v412, %v474
    %v499 = vmul.f32 %v414, %v474
    %v500 = vmul.f32 %v416, %v474
    %v501 = vmul.f32 %v418, %v474
    %v502 = vmul.f32 %v420, %v474
    %v503 = vmul.f32 %v422, %v474
    %v504 = vmul.f32 %v424, %v474
    %v505 = vmul.f32 %v426, %v474
    %v506 = vmul.f32 %v428, %v474
    %507 = vst [vmem:[#allocation10] sm:$0xff] %v475
    %508 = vst [vmem:[#allocation10 + $0x8] sm:$0xff] %v476
    %509 = vst [vmem:[#allocation10 + $0x10] sm:$0xff] %v477
    %510 = vst [vmem:[#allocation10 + $0x18] sm:$0xff] %v478
    %511 = vst [vmem:[#allocation10 + $0x20] sm:$0xff] %v479
    %512 = vst [vmem:[#allocation10 + $0x28] sm:$0xff] %v480
    %513 = vst [vmem:[#allocation10 + $0x30] sm:$0xff] %v481
    %514 = vst [vmem:[#allocation10 + $0x38] sm:$0xff] %v482
    %515 = vst [vmem:[#allocation10 + $0x40] sm:$0xff] %v483
    %516 = vst [vmem:[#allocation10 + $0x48] sm:$0xff] %v484
    %517 = vst [vmem:[#allocation10 + $0x50] sm:$0xff] %v485
    %518 = vst [vmem:[#allocation10 + $0x58] sm:$0xff] %v486
    %519 = vst [vmem:[#allocation10 + $0x60] sm:$0xff] %v487
    %520 = vst [vmem:[#allocation10 + $0x68] sm:$0xff] %v488
    %521 = vst [vmem:[#allocation10 + $0x70] sm:$0xff] %v489
    %522 = vst [vmem:[#allocation10 + $0x78] sm:$0xff] %v490
    %523 = vmatprep.subr.mxu0 0.0
    %524 = vmatpush1.msra.mxu0 %v506
    %525 = vmatprep.subr.mxu0 0.0
    %526 = vmatpush1.msra.mxu0 %v505
    %527 = vmatprep.subr.mxu0 0.0
    %528 = vmatpush1.msra.mxu0 %v504
    %529 = vmatprep.subr.mxu0 0.0
    %530 = vmatpush1.msra.mxu0 %v503
    %531 = vmatprep.subr.mxu0 0.0
    %532 = vmatpush1.msra.mxu0 %v502
    %533 = vmatprep.subr.mxu0 0.0
    %534 = vmatpush1.msra.mxu0 %v501
    %535 = vmatprep.subr.mxu0 0.0
    %536 = vmatpush1.msra.mxu0 %v500
    %537 = vmatprep.subr.mxu0 0.0
    %538 = vmatpush1.msra.mxu0 %v499
    %539 = vmatprep.subr.mxu0 0.0
    %540 = vmatpush1.msra.mxu0 %v498
    %541 = vmatprep.subr.mxu0 0.0
    %542 = vmatpush1.msra.mxu0 %v497
    %543 = vmatprep.subr.mxu0 0.0
    %544 = vmatpush1.msra.mxu0 %v496
    %545 = vmatprep.subr.mxu0 0.0
    %546 = vmatpush1.msra.mxu0 %v495
    %547 = vmatprep.subr.mxu0 0.0
    %548 = vmatpush1.msra.mxu0 %v494
    %549 = vmatprep.subr.mxu0 0.0
    %550 = vmatpush1.msra.mxu0 %v493
    %551 = vmatprep.subr.mxu0 0.0
    %552 = vmatpush1.msra.mxu0 %v492
    %553 = vmatprep.subr.mxu0 0.0
    %554 = vmatpush1.msra.mxu0 %v491
    %555 = vmatprep.subr.mxu0 0.0
    %556 = vmatpush2.msra.mxu0 0.0
    %557 = vmatprep.subr.mxu0 0.0
    %558 = vmatpush2.msra.mxu0 0.0
    %559 = vmatprep.subr.mxu0 0.0
    %560 = vmatpush2.msra.mxu0 0.0
    %561 = vmatprep.subr.mxu0 0.0
    %562 = vmatpush2.msra.mxu0 0.0
    %563 = vmatprep.subr.mxu0 0.0
    %564 = vmatpush2.msra.mxu0 0.0
    %565 = vmatprep.subr.mxu0 0.0
    %566 = vmatpush2.msra.mxu0 0.0
    %567 = vmatprep.subr.mxu0 0.0
    %568 = vmatpush2.msra.mxu0 0.0
    %569 = vmatprep.subr.mxu0 0.0
    %570 = vmatpush2.msra.mxu0 0.0
    %571 = vmatprep.subr.mxu0 0.0
    %572 = vmatpush2.msra.mxu0 0.0
    %573 = vmatprep.subr.mxu0 0.0
    %574 = vmatpush2.msra.mxu0 0.0
    %575 = vmatprep.subr.mxu0 0.0
    %576 = vmatpush2.msra.mxu0 0.0
    %577 = vmatprep.subr.mxu0 0.0
    %578 = vmatpush2.msra.mxu0 0.0
    %579 = vmatprep.subr.mxu0 0.0
    %580 = vmatpush2.msra.mxu0 0.0
    %581 = vmatprep.subr.mxu0 0.0
    %582 = vmatpush2.msra.mxu0 0.0
    %583 = vmatprep.subr.mxu0 0.0
    %584 = vmatpush2.msra.mxu0 0.0
    %585 = vmatprep.subr.mxu0 0.0
    %586 = vmatpush2.msra.mxu0 0.0
    %587 = vmatprep.mubr.f32.mxu0 0.0
    %588 = vmatmul.mubr.f32.gmra.mxu0 %v475
    %v589 = vpop.f32.mrf.mxu0
    %v590 = vadd.f32 0.0, %v589
    %v591 = vpop.f32.mrf.mxu0
    %592 = vmatprep.mubr.f32.mxu0 0.0
    %593 = vmatmul.mubr.f32.gmra.mxu0 %v476
    %v594 = vpop.f32.mrf.mxu0
    %v595 = vadd.f32 0.0, %v594
    %v596 = vpop.f32.mrf.mxu0
    %597 = vmatprep.mubr.f32.mxu0 0.0
    %598 = vmatmul.mubr.f32.gmra.mxu0 %v477
    %v599 = vpop.f32.mrf.mxu0
    %v600 = vadd.f32 0.0, %v599
    %v601 = vpop.f32.mrf.mxu0
    %602 = vmatprep.mubr.f32.mxu0 0.0
    %603 = vmatmul.mubr.f32.gmra.mxu0 %v478
    %v604 = vpop.f32.mrf.mxu0
    %v605 = vadd.f32 0.0, %v604
    %v606 = vpop.f32.mrf.mxu0
    %607 = vmatprep.mubr.f32.mxu0 0.0
    %608 = vmatmul.mubr.f32.gmra.mxu0 %v479
    %v609 = vpop.f32.mrf.mxu0
    %v610 = vadd.f32 0.0, %v609
    %v611 = vpop.f32.mrf.mxu0
    %612 = vmatprep.mubr.f32.mxu0 0.0
    %613 = vmatmul.mubr.f32.gmra.mxu0 %v480
    %v614 = vpop.f32.mrf.mxu0
    %v615 = vadd.f32 0.0, %v614
    %v616 = vpop.f32.mrf.mxu0
    %617 = vmatprep.mubr.f32.mxu0 0.0
    %618 = vmatmul.mubr.f32.gmra.mxu0 %v481
    %v619 = vpop.f32.mrf.mxu0
    %v620 = vadd.f32 0.0, %v619
    %v621 = vpop.f32.mrf.mxu0
    %622 = vmatprep.mubr.f32.mxu0 0.0
    %623 = vmatmul.mubr.f32.gmra.mxu0 %v482
    %v624 = vpop.f32.mrf.mxu0
    %v625 = vadd.f32 0.0, %v624
    %v626 = vpop.f32.mrf.mxu0
    %627 = vmatprep.mubr.f32.mxu0 0.0
    %628 = vmatmul.mubr.f32.gmra.mxu0 %v483
    %v629 = vpop.f32.mrf.mxu0
    %v630 = vadd.f32 0.0, %v629
    %v631 = vpop.f32.mrf.mxu0
    %632 = vmatprep.mubr.f32.mxu0 0.0
    %633 = vmatmul.mubr.f32.gmra.mxu0 %v484
    %v634 = vpop.f32.mrf.mxu0
    %v635 = vadd.f32 0.0, %v634
    %v636 = vpop.f32.mrf.mxu0
    %637 = vmatprep.mubr.f32.mxu0 0.0
    %638 = vmatmul.mubr.f32.gmra.mxu0 %v485
    %v639 = vpop.f32.mrf.mxu0
    %v640 = vadd.f32 0.0, %v639
    %v641 = vpop.f32.mrf.mxu0
    %642 = vmatprep.mubr.f32.mxu0 0.0
    %643 = vmatmul.mubr.f32.gmra.mxu0 %v486
    %v644 = vpop.f32.mrf.mxu0
    %v645 = vadd.f32 0.0, %v644
    %v646 = vpop.f32.mrf.mxu0
    %647 = vmatprep.mubr.f32.mxu0 0.0
    %648 = vmatmul.mubr.f32.gmra.mxu0 %v487
    %v649 = vpop.f32.mrf.mxu0
    %v650 = vadd.f32 0.0, %v649
    %v651 = vpop.f32.mrf.mxu0
    %652 = vmatprep.mubr.f32.mxu0 0.0
    %653 = vmatmul.mubr.f32.gmra.mxu0 %v488
    %v654 = vpop.f32.mrf.mxu0
    %v655 = vadd.f32 0.0, %v654
    %v656 = vpop.f32.mrf.mxu0
    %657 = vmatprep.mubr.f32.mxu0 0.0
    %658 = vmatmul.mubr.f32.gmra.mxu0 %v489
    %v659 = vpop.f32.mrf.mxu0
    %v660 = vadd.f32 0.0, %v659
    %v661 = vpop.f32.mrf.mxu0
    %662 = vmatprep.mubr.f32.mxu0 0.0
    %663 = vmatmul.mubr.f32.gmra.mxu0 %v490
    %v664 = vpop.f32.mrf.mxu0
    %v665 = vadd.f32 0.0, %v664
    %v666 = vpop.f32.mrf.mxu0
    %667 = vdwg.mxu0
    %668 = vst [vmem:[#allocation9] sm:$0xff] %v590
    %669 = vst [vmem:[#allocation9 + $0x8] sm:$0xff] %v595
    %670 = vst [vmem:[#allocation9 + $0x10] sm:$0xff] %v600
    %671 = vst [vmem:[#allocation9 + $0x18] sm:$0xff] %v605
    %672 = vst [vmem:[#allocation9 + $0x20] sm:$0xff] %v610
    %673 = vst [vmem:[#allocation9 + $0x28] sm:$0xff] %v615
    %674 = vst [vmem:[#allocation9 + $0x30] sm:$0xff] %v620
    %675 = vst [vmem:[#allocation9 + $0x38] sm:$0xff] %v625
    %676 = vst [vmem:[#allocation9 + $0x40] sm:$0xff] %v630
    %677 = vst [vmem:[#allocation9 + $0x48] sm:$0xff] %v635
    %678 = vst [vmem:[#allocation9 + $0x50] sm:$0xff] %v640
    %679 = vst [vmem:[#allocation9 + $0x58] sm:$0xff] %v645
    %680 = vst [vmem:[#allocation9 + $0x60] sm:$0xff] %v650
    %681 = vst [vmem:[#allocation9 + $0x68] sm:$0xff] %v655
    %682 = vst [vmem:[#allocation9 + $0x70] sm:$0xff] %v660
    %683 = vst [vmem:[#allocation9 + $0x78] sm:$0xff] %v665
    %s684 = sadd.s32 %s53, 1
    %v685 = vld [vmem:[#allocation8] sm:$0xff]
    %v686 = vld [vmem:[#allocation8 + $0x8] sm:$0xff]
    %v687 = vld [vmem:[#allocation8 + $0x10] sm:$0xff]
    %v688 = vld [vmem:[#allocation8 + $0x18] sm:$0xff]
    %v689 = vld [vmem:[#allocation8 + $0x20] sm:$0xff]
    %v690 = vld [vmem:[#allocation8 + $0x28] sm:$0xff]
    %v691 = vld [vmem:[#allocation8 + $0x30] sm:$0xff]
    %v692 = vld [vmem:[#allocation8 + $0x38] sm:$0xff]
    %v693 = vld [vmem:[#allocation8 + $0x40] sm:$0xff]
    %v694 = vld [vmem:[#allocation8 + $0x48] sm:$0xff]
    %v695 = vld [vmem:[#allocation8 + $0x50] sm:$0xff]
    %v696 = vld [vmem:[#allocation8 + $0x58] sm:$0xff]
    %v697 = vld [vmem:[#allocation8 + $0x60] sm:$0xff]
    %v698 = vld [vmem:[#allocation8 + $0x68] sm:$0xff]
    %v699 = vld [vmem:[#allocation8 + $0x70] sm:$0xff]
    %v700 = vld [vmem:[#allocation8 + $0x78] sm:$0xff]
    %s701 = smul.u32 %s684, 128
    %s702 = sld [smem:[#allocation2 + %s701]]
    %v703 = vstv %s702
    %v704 = vmul.f32 %v703, %v685
    %v705 = vmul.f32 %v703, %v686
    %v706 = vmul.f32 %v703, %v687
    %v707 = vmul.f32 %v703, %v688
    %v708 = vmul.f32 %v703, %v689
    %v709 = vmul.f32 %v703, %v690
    %v710 = vmul.f32 %v703, %v691
    %v711 = vmul.f32 %v703, %v692
    %v712 = vmul.f32 %v703, %v693
    %v713 = vmul.f32 %v703, %v694
    %v714 = vmul.f32 %v703, %v695
    %v715 = vmul.f32 %v703, %v696
    %v716 = vmul.f32 %v703, %v697
    %v717 = vmul.f32 %v703, %v698
    %v718 = vmul.f32 %v703, %v699
    %v719 = vmul.f32 %v703, %v700
    %s720 = sld [smem:[#allocation6 + %s701]]
    %v721 = vstv %s720
    %v722 = vmul.f32 %v721, %v685
    %v723 = vmul.f32 %v721, %v686
    %v724 = vmul.f32 %v721, %v687
    %v725 = vmul.f32 %v721, %v688
    %v726 = vmul.f32 %v721, %v689
    %v727 = vmul.f32 %v721, %v690
    %v728 = vmul.f32 %v721, %v691
    %v729 = vmul.f32 %v721, %v692
    %v730 = vmul.f32 %v721, %v693
    %v731 = vmul.f32 %v721, %v694
    %v732 = vmul.f32 %v721, %v695
    %v733 = vmul.f32 %v721, %v696
    %v734 = vmul.f32 %v721, %v697
    %v735 = vmul.f32 %v721, %v698
    %v736 = vmul.f32 %v721, %v699
    %v737 = vmul.f32 %v721, %v700
    %v738 = vld [vmem:[%s107] sm:$0xff]
    %v739 = vld [vmem:[%s107 + $0x8] sm:$0xff]
    %v740 = vld [vmem:[%s107 + $0x10] sm:$0xff]
    %v741 = vld [vmem:[%s107 + $0x18] sm:$0xff]
    %v742 = vld [vmem:[%s107 + $0x20] sm:$0xff]
    %v743 = vld [vmem:[%s107 + $0x28] sm:$0xff]
    %v744 = vld [vmem:[%s107 + $0x30] sm:$0xff]
    %v745 = vld [vmem:[%s107 + $0x38] sm:$0xff]
    %v746 = vld [vmem:[%s107 + $0x40] sm:$0xff]
    %v747 = vld [vmem:[%s107 + $0x48] sm:$0xff]
    %v748 = vld [vmem:[%s107 + $0x50] sm:$0xff]
    %v749 = vld [vmem:[%s107 + $0x58] sm:$0xff]
    %v750 = vld [vmem:[%s107 + $0x60] sm:$0xff]
    %v751 = vld [vmem:[%s107 + $0x68] sm:$0xff]
    %v752 = vld [vmem:[%s107 + $0x70] sm:$0xff]
    %v753 = vld [vmem:[%s107 + $0x78] sm:$0xff]
    %s754 = sadd.s32 %s701, 1
    %s755 = sld [smem:[#allocation2 + %s754]]
    %v756 = vstv %s755
    %v757 = vmul.f32 %v756, %v738
    %v758 = vmul.f32 %v756, %v739
    %v759 = vmul.f32 %v756, %v740
    %v760 = vmul.f32 %v756, %v741
    %v761 = vmul.f32 %v756, %v742
    %v762 = vmul.f32 %v756, %v743
    %v763 = vmul.f32 %v756, %v744
    %v764 = vmul.f32 %v756, %v745
    %v765 = vmul.f32 %v756, %v746
    %v766 = vmul.f32 %v756, %v747
    %v767 = vmul.f32 %v756, %v748
    %v768 = vmul.f32 %v756, %v749
    %v769 = vmul.f32 %v756, %v750
    %v770 = vmul.f32 %v756, %v751
    %v771 = vmul.f32 %v756, %v752
    %v772 = vmul.f32 %v756, %v753
    %v773 = vadd.f32 %v704, %v757
    %v774 = vadd.f32 %v705, %v758
    %v775 = vadd.f32 %v706, %v759
    %v776 = vadd.f32 %v707, %v760
    %v777 = vadd.f32 %v708, %v761
    %v778 = vadd.f32 %v709, %v762
    %v779 = vadd.f32 %v710, %v763
    %v780 = vadd.f32 %v711, %v764
    %v781 = vadd.f32 %v712, %v765
    %v782 = vadd.f32 %v713, %v766
    %v783 = vadd.f32 %v714, %v767
    %v784 = vadd.f32 %v715, %v768
    %v785 = vadd.f32 %v716, %v769
    %v786 = vadd.f32 %v717, %v770
    %v787 = vadd.f32 %v718, %v771
    %v788 = vadd.f32 %v719, %v772
    %s789 = sld [smem:[#allocation6 + %s754]]
    %v790 = vstv %s789
    %v791 = vmul.f32 %v790, %v738
    %v792 = vmul.f32 %v790, %v739
    %v793 = vmul.f32 %v790, %v740
    %v794 = vmul.f32 %v790, %v741
    %v795 = vmul.f32 %v790, %v742
    %v796 = vmul.f32 %v790, %v743
    %v797 = vmul.f32 %v790, %v744
    %v798 = vmul.f32 %v790, %v745
    %v799 = vmul.f32 %v790, %v746
    %v800 = vmul.f32 %v790, %v747
    %v801 = vmul.f32 %v790, %v748
    %v802 = vmul.f32 %v790, %v749
    %v803 = vmul.f32 %v790, %v750
    %v804 = vmul.f32 %v790, %v751
    %v805 = vmul.f32 %v790, %v752
    %v806 = vmul.f32 %v790, %v753
    %v807 = vadd.f32 %v722, %v791
    %v808 = vadd.f32 %v723, %v792
    %v809 = vadd.f32 %v724, %v793
    %v810 = vadd.f32 %v725, %v794
    %v811 = vadd.f32 %v726, %v795
    %v812 = vadd.f32 %v727, %v796
    %v813 = vadd.f32 %v728, %v797
    %v814 = vadd.f32 %v729, %v798
    %v815 = vadd.f32 %v730, %v799
    %v816 = vadd.f32 %v731, %v800
    %v817 = vadd.f32 %v732, %v801
    %v818 = vadd.f32 %v733, %v802
    %v819 = vadd.f32 %v734, %v803
    %v820 = vadd.f32 %v735, %v804
    %v821 = vadd.f32 %v736, %v805
    %v822 = vadd.f32 %v737, %v806
    %v823 = vld [vmem:[%s193] sm:$0xff]
    %v824 = vld [vmem:[%s193 + $0x8] sm:$0xff]
    %v825 = vld [vmem:[%s193 + $0x10] sm:$0xff]
    %v826 = vld [vmem:[%s193 + $0x18] sm:$0xff]
    %v827 = vld [vmem:[%s193 + $0x20] sm:$0xff]
    %v828 = vld [vmem:[%s193 + $0x28] sm:$0xff]
    %v829 = vld [vmem:[%s193 + $0x30] sm:$0xff]
    %v830 = vld [vmem:[%s193 + $0x38] sm:$0xff]
    %v831 = vld [vmem:[%s193 + $0x40] sm:$0xff]
    %v832 = vld [vmem:[%s193 + $0x48] sm:$0xff]
    %v833 = vld [vmem:[%s193 + $0x50] sm:$0xff]
    %v834 = vld [vmem:[%s193 + $0x58] sm:$0xff]
    %v835 = vld [vmem:[%s193 + $0x60] sm:$0xff]
    %v836 = vld [vmem:[%s193 + $0x68] sm:$0xff]
    %v837 = vld [vmem:[%s193 + $0x70] sm:$0xff]
    %v838 = vld [vmem:[%s193 + $0x78] sm:$0xff]
    %s839 = sadd.s32 %s701, 2
    %s840 = sld [smem:[#allocation2 + %s839]]
    %v841 = vstv %s840
    %v842 = vmul.f32 %v841, %v823
    %v843 = vmul.f32 %v841, %v824
    %v844 = vmul.f32 %v841, %v825
    %v845 = vmul.f32 %v841, %v826
    %v846 = vmul.f32 %v841, %v827
    %v847 = vmul.f32 %v841, %v828
    %v848 = vmul.f32 %v841, %v829
    %v849 = vmul.f32 %v841, %v830
    %v850 = vmul.f32 %v841, %v831
    %v851 = vmul.f32 %v841, %v832
    %v852 = vmul.f32 %v841, %v833
    %v853 = vmul.f32 %v841, %v834
    %v854 = vmul.f32 %v841, %v835
    %v855 = vmul.f32 %v841, %v836
    %v856 = vmul.f32 %v841, %v837
    %v857 = vmul.f32 %v841, %v838
    %v858 = vadd.f32 %v773, %v842
    %v859 = vadd.f32 %v774, %v843
    %v860 = vadd.f32 %v775, %v844
    %v861 = vadd.f32 %v776, %v845
    %v862 = vadd.f32 %v777, %v846
    %v863 = vadd.f32 %v778, %v847
    %v864 = vadd.f32 %v779, %v848
    %v865 = vadd.f32 %v780, %v849
    %v866 = vadd.f32 %v781, %v850
    %v867 = vadd.f32 %v782, %v851
    %v868 = vadd.f32 %v783, %v852
    %v869 = vadd.f32 %v784, %v853
    %v870 = vadd.f32 %v785, %v854
    %v871 = vadd.f32 %v786, %v855
    %v872 = vadd.f32 %v787, %v856
    %v873 = vadd.f32 %v788, %v857
    %s874 = sld [smem:[#allocation6 + %s839]]
    %v875 = vstv %s874
    %v876 = vmul.f32 %v875, %v823
    %v877 = vmul.f32 %v875, %v824
    %v878 = vmul.f32 %v875, %v825
    %v879 = vmul.f32 %v875, %v826
    %v880 = vmul.f32 %v875, %v827
    %v881 = vmul.f32 %v875, %v828
    %v882 = vmul.f32 %v875, %v829
    %v883 = vmul.f32 %v875, %v830
    %v884 = vmul.f32 %v875, %v831
    %v885 = vmul.f32 %v875, %v832
    %v886 = vmul.f32 %v875, %v833
    %v887 = vmul.f32 %v875, %v834
    %v888 = vmul.f32 %v875, %v835
    %v889 = vmul.f32 %v875, %v836
    %v890 = vmul.f32 %v875, %v837
    %v891 = vmul.f32 %v875, %v838
    %v892 = vadd.f32 %v807, %v876
    %v893 = vadd.f32 %v808, %v877
    %v894 = vadd.f32 %v809, %v878
    %v895 = vadd.f32 %v810, %v879
    %v896 = vadd.f32 %v811, %v880
    %v897 = vadd.f32 %v812, %v881
    %v898 = vadd.f32 %v813, %v882
    %v899 = vadd.f32 %v814, %v883
    %v900 = vadd.f32 %v815, %v884
    %v901 = vadd.f32 %v816, %v885
    %v902 = vadd.f32 %v817, %v886
    %v903 = vadd.f32 %v818, %v887
    %v904 = vadd.f32 %v819, %v888
    %v905 = vadd.f32 %v820, %v889
    %v906 = vadd.f32 %v821, %v890
    %v907 = vadd.f32 %v822, %v891
    %v908 = vld [vmem:[%s279] sm:$0xff]
    %v909 = vld [vmem:[%s279 + $0x8] sm:$0xff]
    %v910 = vld [vmem:[%s279 + $0x10] sm:$0xff]
    %v911 = vld [vmem:[%s279 + $0x18] sm:$0xff]
    %v912 = vld [vmem:[%s279 + $0x20] sm:$0xff]
    %v913 = vld [vmem:[%s279 + $0x28] sm:$0xff]
    %v914 = vld [vmem:[%s279 + $0x30] sm:$0xff]
    %v915 = vld [vmem:[%s279 + $0x38] sm:$0xff]
    %v916 = vld [vmem:[%s279 + $0x40] sm:$0xff]
    %v917 = vld [vmem:[%s279 + $0x48] sm:$0xff]
    %v918 = vld [vmem:[%s279 + $0x50] sm:$0xff]
    %v919 = vld [vmem:[%s279 + $0x58] sm:$0xff]
    %v920 = vld [vmem:[%s279 + $0x60] sm:$0xff]
    %v921 = vld [vmem:[%s279 + $0x68] sm:$0xff]
    %v922 = vld [vmem:[%s279 + $0x70] sm:$0xff]
    %v923 = vld [vmem:[%s279 + $0x78] sm:$0xff]
    %s924 = sadd.s32 %s701, 3
    %s925 = sld [smem:[#allocation2 + %s924]]
    %v926 = vstv %s925
    %v927 = vmul.f32 %v926, %v908
    %v928 = vmul.f32 %v926, %v909
    %v929 = vmul.f32 %v926, %v910
    %v930 = vmul.f32 %v926, %v911
    %v931 = vmul.f32 %v926, %v912
    %v932 = vmul.f32 %v926, %v913
    %v933 = vmul.f32 %v926, %v914
    %v934 = vmul.f32 %v926, %v915
    %v935 = vmul.f32 %v926, %v916
    %v936 = vmul.f32 %v926, %v917
    %v937 = vmul.f32 %v926, %v918
    %v938 = vmul.f32 %v926, %v919
    %v939 = vmul.f32 %v926, %v920
    %v940 = vmul.f32 %v926, %v921
    %v941 = vmul.f32 %v926, %v922
    %v942 = vmul.f32 %v926, %v923
    %v943 = vadd.f32 %v858, %v927
    %v944 = vadd.f32 %v859, %v928
    %v945 = vadd.f32 %v860, %v929
    %v946 = vadd.f32 %v861, %v930
    %v947 = vadd.f32 %v862, %v931
    %v948 = vadd.f32 %v863, %v932
    %v949 = vadd.f32 %v864, %v933
    %v950 = vadd.f32 %v865, %v934
    %v951 = vadd.f32 %v866, %v935
    %v952 = vadd.f32 %v867, %v936
    %v953 = vadd.f32 %v868, %v937
    %v954 = vadd.f32 %v869, %v938
    %v955 = vadd.f32 %v870, %v939
    %v956 = vadd.f32 %v871, %v940
    %v957 = vadd.f32 %v872, %v941
    %v958 = vadd.f32 %v873, %v942
    %s959 = sld [smem:[#allocation6 + %s924]]
    %v960 = vstv %s959
    %v961 = vmul.f32 %v960, %v908
    %v962 = vmul.f32 %v960, %v909
    %v963 = vmul.f32 %v960, %v910
    %v964 = vmul.f32 %v960, %v911
    %v965 = vmul.f32 %v960, %v912
    %v966 = vmul.f32 %v960, %v913
    %v967 = vmul.f32 %v960, %v914
    %v968 = vmul.f32 %v960, %v915
    %v969 = vmul.f32 %v960, %v916
    %v970 = vmul.f32 %v960, %v917
    %v971 = vmul.f32 %v960, %v918
    %v972 = vmul.f32 %v960, %v919
    %v973 = vmul.f32 %v960, %v920
    %v974 = vmul.f32 %v960, %v921
    %v975 = vmul.f32 %v960, %v922
    %v976 = vmul.f32 %v960, %v923
    %v977 = vadd.f32 %v892, %v961
    %v978 = vadd.f32 %v893, %v962
    %v979 = vadd.f32 %v894, %v963
    %v980 = vadd.f32 %v895, %v964
    %v981 = vadd.f32 %v896, %v965
    %v982 = vadd.f32 %v897, %v966
    %v983 = vadd.f32 %v898, %v967
    %v984 = vadd.f32 %v899, %v968
    %v985 = vadd.f32 %v900, %v969
    %v986 = vadd.f32 %v901, %v970
    %v987 = vadd.f32 %v902, %v971
    %v988 = vadd.f32 %v903, %v972
    %v989 = vadd.f32 %v904, %v973
    %v990 = vadd.f32 %v905, %v974
    %v991 = vadd.f32 %v906, %v975
    %v992 = vadd.f32 %v907, %v976
    %v993 = vmul.f32 %v943, 1.442695
    %v994 = vpow.pop %v993
    %v995 = vmul.f32 %v944, 1.442695
    %v996 = vpow.pop %v995
    %v997 = vmul.f32 %v945, 1.442695
    %v998 = vpow.pop %v997
    %v999 = vmul.f32 %v946, 1.442695
    %v1000 = vpow.pop %v999
    %v1001 = vmul.f32 %v947, 1.442695
    %v1002 = vpow.pop %v1001
    %v1003 = vmul.f32 %v948, 1.442695
    %v1004 = vpow.pop %v1003
    %v1005 = vmul.f32 %v949, 1.442695
    %v1006 = vpow.pop %v1005
    %v1007 = vmul.f32 %v950, 1.442695
    %v1008 = vpow.pop %v1007
    %v1009 = vmul.f32 %v951, 1.442695
    %v1010 = vpow.pop %v1009
    %v1011 = vmul.f32 %v952, 1.442695
    %v1012 = vpow.pop %v1011
    %v1013 = vmul.f32 %v953, 1.442695
    %v1014 = vpow.pop %v1013
    %v1015 = vmul.f32 %v954, 1.442695
    %v1016 = vpow.pop %v1015
    %v1017 = vmul.f32 %v955, 1.442695
    %v1018 = vpow.pop %v1017
    %v1019 = vmul.f32 %v956, 1.442695
    %v1020 = vpow.pop %v1019
    %v1021 = vmul.f32 %v957, 1.442695
    %v1022 = vpow.pop %v1021
    %v1023 = vmul.f32 %v958, 1.442695
    %v1024 = vpow.pop %v1023
    %v1025 = vmul.f32 %v977, 1.442695
    %v1026 = vpow.pop %v1025
    %v1027 = vmul.f32 %v978, 1.442695
    %v1028 = vpow.pop %v1027
    %v1029 = vmul.f32 %v979, 1.442695
    %v1030 = vpow.pop %v1029
    %v1031 = vmul.f32 %v980, 1.442695
    %v1032 = vpow.pop %v1031
    %v1033 = vmul.f32 %v981, 1.442695
    %v1034 = vpow.pop %v1033
    %v1035 = vmul.f32 %v982, 1.442695
    %v1036 = vpow.pop %v1035
    %v1037 = vmul.f32 %v983, 1.442695
    %v1038 = vpow.pop %v1037
    %v1039 = vmul.f32 %v984, 1.442695
    %v1040 = vpow.pop %v1039
    %v1041 = vmul.f32 %v985, 1.442695
    %v1042 = vpow.pop %v1041
    %v1043 = vmul.f32 %v986, 1.442695
    %v1044 = vpow.pop %v1043
    %v1045 = vmul.f32 %v987, 1.442695
    %v1046 = vpow.pop %v1045
    %v1047 = vmul.f32 %v988, 1.442695
    %v1048 = vpow.pop %v1047
    %v1049 = vmul.f32 %v989, 1.442695
    %v1050 = vpow.pop %v1049
    %v1051 = vmul.f32 %v990, 1.442695
    %v1052 = vpow.pop %v1051
    %v1053 = vmul.f32 %v991, 1.442695
    %v1054 = vpow.pop %v1053
    %v1055 = vmul.f32 %v992, 1.442695
    %v1056 = vpow.pop %v1055
    %v1057 = vadd.f32 %v994, %v996
    %v1058 = vadd.f32 %v1057, %v998
    %v1059 = vadd.f32 %v1058, %v1000
    %v1060 = vadd.f32 %v1059, %v1002
    %v1061 = vadd.f32 %v1060, %v1004
    %v1062 = vadd.f32 %v1061, %v1006
    %v1063 = vadd.f32 %v1062, %v1008
    %v1064 = vadd.f32 %v1063, %v1010
    %v1065 = vadd.f32 %v1064, %v1012
    %v1066 = vadd.f32 %v1065, %v1014
    %v1067 = vadd.f32 %v1066, %v1016
    %v1068 = vadd.f32 %v1067, %v1018
    %v1069 = vadd.f32 %v1068, %v1020
    %v1070 = vadd.f32 %v1069, %v1022
    %v1071 = vadd.f32 %v1070, %v1024
    %v1072 = vrot.slane %v1071, 4
    %v1073 = vadd.f32 %v1071, %v1072
    %v1074 = vrot.slane %v1073, 2
    %v1075 = vadd.f32 %v1073, %v1074
    %v1076 = vrot.slane %v1075, 1
    %v1077 = vadd.f32 %v1075, %v1076
    %v1078 = vadd.f32 %v1077, 1e-06
    %v1079 = vrcp.pop %v1078
    %v1080 = vadd.f32 %v1026, %v1028
    %v1081 = vadd.f32 %v1080, %v1030
    %v1082 = vadd.f32 %v1081, %v1032
    %v1083 = vadd.f32 %v1082, %v1034
    %v1084 = vadd.f32 %v1083, %v1036
    %v1085 = vadd.f32 %v1084, %v1038
    %v1086 = vadd.f32 %v1085, %v1040
    %v1087 = vadd.f32 %v1086, %v1042
    %v1088 = vadd.f32 %v1087, %v1044
    %v1089 = vadd.f32 %v1088, %v1046
    %v1090 = vadd.f32 %v1089, %v1048
    %v1091 = vadd.f32 %v1090, %v1050
    %v1092 = vadd.f32 %v1091, %v1052
    %v1093 = vadd.f32 %v1092, %v1054
    %v1094 = vadd.f32 %v1093, %v1056
    %v1095 = vrot.slane %v1094, 4
    %v1096 = vadd.f32 %v1094, %v1095
    %v1097 = vrot.slane %v1096, 2
    %v1098 = vadd.f32 %v1096, %v1097
    %v1099 = vrot.slane %v1098, 1
    %v1100 = vadd.f32 %v1098, %v1099
    %v1101 = vadd.f32 %v1100, 1e-06
    %v1102 = vrcp.pop %v1101
    %v1103 = vmul.f32 %v994, %v1079
    %v1104 = vmul.f32 %v996, %v1079
    %v1105 = vmul.f32 %v998, %v1079
    %v1106 = vmul.f32 %v1000, %v1079
    %v1107 = vmul.f32 %v1002, %v1079
    %v1108 = vmul.f32 %v1004, %v1079
    %v1109 = vmul.f32 %v1006, %v1079
    %v1110 = vmul.f32 %v1008, %v1079
    %v1111 = vmul.f32 %v1010, %v1079
    %v1112 = vmul.f32 %v1012, %v1079
    %v1113 = vmul.f32 %v1014, %v1079
    %v1114 = vmul.f32 %v1016, %v1079
    %v1115 = vmul.f32 %v1018, %v1079
    %v1116 = vmul.f32 %v1020, %v1079
    %v1117 = vmul.f32 %v1022, %v1079
    %v1118 = vmul.f32 %v1024, %v1079
    %v1119 = vmul.f32 %v1026, %v1102
    %v1120 = vmul.f32 %v1028, %v1102
    %v1121 = vmul.f32 %v1030, %v1102
    %v1122 = vmul.f32 %v1032, %v1102
    %v1123 = vmul.f32 %v1034, %v1102
    %v1124 = vmul.f32 %v1036, %v1102
    %v1125 = vmul.f32 %v1038, %v1102
    %v1126 = vmul.f32 %v1040, %v1102
    %v1127 = vmul.f32 %v1042, %v1102
    %v1128 = vmul.f32 %v1044, %v1102
    %v1129 = vmul.f32 %v1046, %v1102
    %v1130 = vmul.f32 %v1048, %v1102
    %v1131 = vmul.f32 %v1050, %v1102
    %v1132 = vmul.f32 %v1052, %v1102
    %v1133 = vmul.f32 %v1054, %v1102
    %v1134 = vmul.f32 %v1056, %v1102
    %s1135 = scalar_lea.vmem [#allocation10], 128
    %1136 = vst [vmem:[%s1135] sm:$0xff] %v1103
    %1137 = vst [vmem:[%s1135 + $0x8] sm:$0xff] %v1104
    %1138 = vst [vmem:[%s1135 + $0x10] sm:$0xff] %v1105
    %1139 = vst [vmem:[%s1135 + $0x18] sm:$0xff] %v1106
    %1140 = vst [vmem:[%s1135 + $0x20] sm:$0xff] %v1107
    %1141 = vst [vmem:[%s1135 + $0x28] sm:$0xff] %v1108
    %1142 = vst [vmem:[%s1135 + $0x30] sm:$0xff] %v1109
    %1143 = vst [vmem:[%s1135 + $0x38] sm:$0xff] %v1110
    %1144 = vst [vmem:[%s1135 + $0x40] sm:$0xff] %v1111
    %1145 = vst [vmem:[%s1135 + $0x48] sm:$0xff] %v1112
    %1146 = vst [vmem:[%s1135 + $0x50] sm:$0xff] %v1113
    %1147 = vst [vmem:[%s1135 + $0x58] sm:$0xff] %v1114
    %1148 = vst [vmem:[%s1135 + $0x60] sm:$0xff] %v1115
    %1149 = vst [vmem:[%s1135 + $0x68] sm:$0xff] %v1116
    %1150 = vst [vmem:[%s1135 + $0x70] sm:$0xff] %v1117
    %1151 = vst [vmem:[%s1135 + $0x78] sm:$0xff] %v1118
    %1152 = vmatprep.subr.mxu0 0.0
    %1153 = vmatpush1.msra.mxu0 %v1134
    %1154 = vmatprep.subr.mxu0 0.0
    %1155 = vmatpush1.msra.mxu0 %v1133
    %1156 = vmatprep.subr.mxu0 0.0
    %1157 = vmatpush1.msra.mxu0 %v1132
    %1158 = vmatprep.subr.mxu0 0.0
    %1159 = vmatpush1.msra.mxu0 %v1131
    %1160 = vmatprep.subr.mxu0 0.0
    %1161 = vmatpush1.msra.mxu0 %v1130
    %1162 = vmatprep.subr.mxu0 0.0
    %1163 = vmatpush1.msra.mxu0 %v1129
    %1164 = vmatprep.subr.mxu0 0.0
    %1165 = vmatpush1.msra.mxu0 %v1128
    %1166 = vmatprep.subr.mxu0 0.0
    %1167 = vmatpush1.msra.mxu0 %v1127
    %1168 = vmatprep.subr.mxu0 0.0
    %1169 = vmatpush1.msra.mxu0 %v1126
    %1170 = vmatprep.subr.mxu0 0.0
    %1171 = vmatpush1.msra.mxu0 %v1125
    %1172 = vmatprep.subr.mxu0 0.0
    %1173 = vmatpush1.msra.mxu0 %v1124
    %1174 = vmatprep.subr.mxu0 0.0
    %1175 = vmatpush1.msra.mxu0 %v1123
    %1176 = vmatprep.subr.mxu0 0.0
    %1177 = vmatpush1.msra.mxu0 %v1122
    %1178 = vmatprep.subr.mxu0 0.0
    %1179 = vmatpush1.msra.mxu0 %v1121
    %1180 = vmatprep.subr.mxu0 0.0
    %1181 = vmatpush1.msra.mxu0 %v1120
    %1182 = vmatprep.subr.mxu0 0.0
    %1183 = vmatpush1.msra.mxu0 %v1119
    %1184 = vmatprep.subr.mxu0 0.0
    %1185 = vmatpush2.msra.mxu0 0.0
    %1186 = vmatprep.subr.mxu0 0.0
    %1187 = vmatpush2.msra.mxu0 0.0
    %1188 = vmatprep.subr.mxu0 0.0
    %1189 = vmatpush2.msra.mxu0 0.0
    %1190 = vmatprep.subr.mxu0 0.0
    %1191 = vmatpush2.msra.mxu0 0.0
    %1192 = vmatprep.subr.mxu0 0.0
    %1193 = vmatpush2.msra.mxu0 0.0
    %1194 = vmatprep.subr.mxu0 0.0
    %1195 = vmatpush2.msra.mxu0 0.0
    %1196 = vmatprep.subr.mxu0 0.0
    %1197 = vmatpush2.msra.mxu0 0.0
    %1198 = vmatprep.subr.mxu0 0.0
    %1199 = vmatpush2.msra.mxu0 0.0
    %1200 = vmatprep.subr.mxu0 0.0
    %1201 = vmatpush2.msra.mxu0 0.0
    %1202 = vmatprep.subr.mxu0 0.0
    %1203 = vmatpush2.msra.mxu0 0.0
    %1204 = vmatprep.subr.mxu0 0.0
    %1205 = vmatpush2.msra.mxu0 0.0
    %1206 = vmatprep.subr.mxu0 0.0
    %1207 = vmatpush2.msra.mxu0 0.0
    %1208 = vmatprep.subr.mxu0 0.0
    %1209 = vmatpush2.msra.mxu0 0.0
    %1210 = vmatprep.subr.mxu0 0.0
    %1211 = vmatpush2.msra.mxu0 0.0
    %1212 = vmatprep.subr.mxu0 0.0
    %1213 = vmatpush2.msra.mxu0 0.0
    %1214 = vmatprep.subr.mxu0 0.0
    %1215 = vmatpush2.msra.mxu0 0.0
    %1216 = vmatprep.mubr.f32.mxu0 0.0
    %1217 = vmatmul.mubr.f32.gmra.mxu0 %v1103
    %v1218 = vpop.f32.mrf.mxu0
    %v1219 = vadd.f32 0.0, %v1218
    %v1220 = vpop.f32.mrf.mxu0
    %1221 = vmatprep.mubr.f32.mxu0 0.0
    %1222 = vmatmul.mubr.f32.gmra.mxu0 %v1104
    %v1223 = vpop.f32.mrf.mxu0
    %v1224 = vadd.f32 0.0, %v1223
    %v1225 = vpop.f32.mrf.mxu0
    %1226 = vmatprep.mubr.f32.mxu0 0.0
    %1227 = vmatmul.mubr.f32.gmra.mxu0 %v1105
    %v1228 = vpop.f32.mrf.mxu0
    %v1229 = vadd.f32 0.0, %v1228
    %v1230 = vpop.f32.mrf.mxu0
    %1231 = vmatprep.mubr.f32.mxu0 0.0
    %1232 = vmatmul.mubr.f32.gmra.mxu0 %v1106
    %v1233 = vpop.f32.mrf.mxu0
    %v1234 = vadd.f32 0.0, %v1233
    %v1235 = vpop.f32.mrf.mxu0
    %1236 = vmatprep.mubr.f32.mxu0 0.0
    %1237 = vmatmul.mubr.f32.gmra.mxu0 %v1107
    %v1238 = vpop.f32.mrf.mxu0
    %v1239 = vadd.f32 0.0, %v1238
    %v1240 = vpop.f32.mrf.mxu0
    %1241 = vmatprep.mubr.f32.mxu0 0.0
    %1242 = vmatmul.mubr.f32.gmra.mxu0 %v1108
    %v1243 = vpop.f32.mrf.mxu0
    %v1244 = vadd.f32 0.0, %v1243
    %v1245 = vpop.f32.mrf.mxu0
    %1246 = vmatprep.mubr.f32.mxu0 0.0
    %1247 = vmatmul.mubr.f32.gmra.mxu0 %v1109
    %v1248 = vpop.f32.mrf.mxu0
    %v1249 = vadd.f32 0.0, %v1248
    %v1250 = vpop.f32.mrf.mxu0
    %1251 = vmatprep.mubr.f32.mxu0 0.0
    %1252 = vmatmul.mubr.f32.gmra.mxu0 %v1110
    %v1253 = vpop.f32.mrf.mxu0
    %v1254 = vadd.f32 0.0, %v1253
    %v1255 = vpop.f32.mrf.mxu0
    %1256 = vmatprep.mubr.f32.mxu0 0.0
    %1257 = vmatmul.mubr.f32.gmra.mxu0 %v1111
    %v1258 = vpop.f32.mrf.mxu0
    %v1259 = vadd.f32 0.0, %v1258
    %v1260 = vpop.f32.mrf.mxu0
    %1261 = vmatprep.mubr.f32.mxu0 0.0
    %1262 = vmatmul.mubr.f32.gmra.mxu0 %v1112
    %v1263 = vpop.f32.mrf.mxu0
    %v1264 = vadd.f32 0.0, %v1263
    %v1265 = vpop.f32.mrf.mxu0
    %1266 = vmatprep.mubr.f32.mxu0 0.0
    %1267 = vmatmul.mubr.f32.gmra.mxu0 %v1113
    %v1268 = vpop.f32.mrf.mxu0
    %v1269 = vadd.f32 0.0, %v1268
    %v1270 = vpop.f32.mrf.mxu0
    %1271 = vmatprep.mubr.f32.mxu0 0.0
    %1272 = vmatmul.mubr.f32.gmra.mxu0 %v1114
    %v1273 = vpop.f32.mrf.mxu0
    %v1274 = vadd.f32 0.0, %v1273
    %v1275 = vpop.f32.mrf.mxu0
    %1276 = vmatprep.mubr.f32.mxu0 0.0
    %1277 = vmatmul.mubr.f32.gmra.mxu0 %v1115
    %v1278 = vpop.f32.mrf.mxu0
    %v1279 = vadd.f32 0.0, %v1278
    %v1280 = vpop.f32.mrf.mxu0
    %1281 = vmatprep.mubr.f32.mxu0 0.0
    %1282 = vmatmul.mubr.f32.gmra.mxu0 %v1116
    %v1283 = vpop.f32.mrf.mxu0
    %v1284 = vadd.f32 0.0, %v1283
    %v1285 = vpop.f32.mrf.mxu0
    %1286 = vmatprep.mubr.f32.mxu0 0.0
    %1287 = vmatmul.mubr.f32.gmra.mxu0 %v1117
    %v1288 = vpop.f32.mrf.mxu0
    %v1289 = vadd.f32 0.0, %v1288
    %v1290 = vpop.f32.mrf.mxu0
    %1291 = vmatprep.mubr.f32.mxu0 0.0
    %1292 = vmatmul.mubr.f32.gmra.mxu0 %v1118
    %v1293 = vpop.f32.mrf.mxu0
    %v1294 = vadd.f32 0.0, %v1293
    %v1295 = vpop.f32.mrf.mxu0
    %1296 = vdwg.mxu0
    %s1297 = scalar_lea.vmem [#allocation9], 128
    %1298 = vst [vmem:[%s1297] sm:$0xff] %v1219
    %1299 = vst [vmem:[%s1297 + $0x8] sm:$0xff] %v1224
    %1300 = vst [vmem:[%s1297 + $0x10] sm:$0xff] %v1229
    %1301 = vst [vmem:[%s1297 + $0x18] sm:$0xff] %v1234
    %1302 = vst [vmem:[%s1297 + $0x20] sm:$0xff] %v1239
    %1303 = vst [vmem:[%s1297 + $0x28] sm:$0xff] %v1244
    %1304 = vst [vmem:[%s1297 + $0x30] sm:$0xff] %v1249
    %1305 = vst [vmem:[%s1297 + $0x38] sm:$0xff] %v1254
    %1306 = vst [vmem:[%s1297 + $0x40] sm:$0xff] %v1259
    %1307 = vst [vmem:[%s1297 + $0x48] sm:$0xff] %v1264
    %1308 = vst [vmem:[%s1297 + $0x50] sm:$0xff] %v1269
    %1309 = vst [vmem:[%s1297 + $0x58] sm:$0xff] %v1274
    %1310 = vst [vmem:[%s1297 + $0x60] sm:$0xff] %v1279
    %1311 = vst [vmem:[%s1297 + $0x68] sm:$0xff] %v1284
    %1312 = vst [vmem:[%s1297 + $0x70] sm:$0xff] %v1289
    %1313 = vst [vmem:[%s1297 + $0x78] sm:$0xff] %v1294
    %s1314 = sadd.s32 %s53, 2
    %v1315 = vld [vmem:[#allocation8] sm:$0xff]
    %v1316 = vld [vmem:[#allocation8 + $0x8] sm:$0xff]
    %v1317 = vld [vmem:[#allocation8 + $0x10] sm:$0xff]
    %v1318 = vld [vmem:[#allocation8 + $0x18] sm:$0xff]
    %v1319 = vld [vmem:[#allocation8 + $0x20] sm:$0xff]
    %v1320 = vld [vmem:[#allocation8 + $0x28] sm:$0xff]
    %v1321 = vld [vmem:[#allocation8 + $0x30] sm:$0xff]
    %v1322 = vld [vmem:[#allocation8 + $0x38] sm:$0xff]
    %v1323 = vld [vmem:[#allocation8 + $0x40] sm:$0xff]
    %v1324 = vld [vmem:[#allocation8 + $0x48] sm:$0xff]
    %v1325 = vld [vmem:[#allocation8 + $0x50] sm:$0xff]
    %v1326 = vld [vmem:[#allocation8 + $0x58] sm:$0xff]
    %v1327 = vld [vmem:[#allocation8 + $0x60] sm:$0xff]
    %v1328 = vld [vmem:[#allocation8 + $0x68] sm:$0xff]
    %v1329 = vld [vmem:[#allocation8 + $0x70] sm:$0xff]
    %v1330 = vld [vmem:[#allocation8 + $0x78] sm:$0xff]
    %s1331 = smul.u32 %s1314, 128
    %s1332 = sld [smem:[#allocation2 + %s1331]]
    %v1333 = vstv %s1332
    %v1334 = vmul.f32 %v1333, %v1315
    %v1335 = vmul.f32 %v1333, %v1316
    %v1336 = vmul.f32 %v1333, %v1317
    %v1337 = vmul.f32 %v1333, %v1318
    %v1338 = vmul.f32 %v1333, %v1319
    %v1339 = vmul.f32 %v1333, %v1320
    %v1340 = vmul.f32 %v1333, %v1321
    %v1341 = vmul.f32 %v1333, %v1322
    %v1342 = vmul.f32 %v1333, %v1323
    %v1343 = vmul.f32 %v1333, %v1324
    %v1344 = vmul.f32 %v1333, %v1325
    %v1345 = vmul.f32 %v1333, %v1326
    %v1346 = vmul.f32 %v1333, %v1327
    %v1347 = vmul.f32 %v1333, %v1328
    %v1348 = vmul.f32 %v1333, %v1329
    %v1349 = vmul.f32 %v1333, %v1330
    %s1350 = sld [smem:[#allocation6 + %s1331]]
    %v1351 = vstv %s1350
    %v1352 = vmul.f32 %v1351, %v1315
    %v1353 = vmul.f32 %v1351, %v1316
    %v1354 = vmul.f32 %v1351, %v1317
    %v1355 = vmul.f32 %v1351, %v1318
    %v1356 = vmul.f32 %v1351, %v1319
    %v1357 = vmul.f32 %v1351, %v1320
    %v1358 = vmul.f32 %v1351, %v1321
    %v1359 = vmul.f32 %v1351, %v1322
    %v1360 = vmul.f32 %v1351, %v1323
    %v1361 = vmul.f32 %v1351, %v1324
    %v1362 = vmul.f32 %v1351, %v1325
    %v1363 = vmul.f32 %v1351, %v1326
    %v1364 = vmul.f32 %v1351, %v1327
    %v1365 = vmul.f32 %v1351, %v1328
    %v1366 = vmul.f32 %v1351, %v1329
    %v1367 = vmul.f32 %v1351, %v1330
    %v1368 = vld [vmem:[%s107] sm:$0xff]
    %v1369 = vld [vmem:[%s107 + $0x8] sm:$0xff]
    %v1370 = vld [vmem:[%s107 + $0x10] sm:$0xff]
    %v1371 = vld [vmem:[%s107 + $0x18] sm:$0xff]
    %v1372 = vld [vmem:[%s107 + $0x20] sm:$0xff]
    %v1373 = vld [vmem:[%s107 + $0x28] sm:$0xff]
    %v1374 = vld [vmem:[%s107 + $0x30] sm:$0xff]
    %v1375 = vld [vmem:[%s107 + $0x38] sm:$0xff]
    %v1376 = vld [vmem:[%s107 + $0x40] sm:$0xff]
    %v1377 = vld [vmem:[%s107 + $0x48] sm:$0xff]
    %v1378 = vld [vmem:[%s107 + $0x50] sm:$0xff]
    %v1379 = vld [vmem:[%s107 + $0x58] sm:$0xff]
    %v1380 = vld [vmem:[%s107 + $0x60] sm:$0xff]
    %v1381 = vld [vmem:[%s107 + $0x68] sm:$0xff]
    %v1382 = vld [vmem:[%s107 + $0x70] sm:$0xff]
    %v1383 = vld [vmem:[%s107 + $0x78] sm:$0xff]
    %s1384 = sadd.s32 %s1331, 1
    %s1385 = sld [smem:[#allocation2 + %s1384]]
    %v1386 = vstv %s1385
    %v1387 = vmul.f32 %v1386, %v1368
    %v1388 = vmul.f32 %v1386, %v1369
    %v1389 = vmul.f32 %v1386, %v1370
    %v1390 = vmul.f32 %v1386, %v1371
    %v1391 = vmul.f32 %v1386, %v1372
    %v1392 = vmul.f32 %v1386, %v1373
    %v1393 = vmul.f32 %v1386, %v1374
    %v1394 = vmul.f32 %v1386, %v1375
    %v1395 = vmul.f32 %v1386, %v1376
    %v1396 = vmul.f32 %v1386, %v1377
    %v1397 = vmul.f32 %v1386, %v1378
    %v1398 = vmul.f32 %v1386, %v1379
    %v1399 = vmul.f32 %v1386, %v1380
    %v1400 = vmul.f32 %v1386, %v1381
    %v1401 = vmul.f32 %v1386, %v1382
    %v1402 = vmul.f32 %v1386, %v1383
    %v1403 = vadd.f32 %v1334, %v1387
    %v1404 = vadd.f32 %v1335, %v1388
    %v1405 = vadd.f32 %v1336, %v1389
    %v1406 = vadd.f32 %v1337, %v1390
    %v1407 = vadd.f32 %v1338, %v1391
    %v1408 = vadd.f32 %v1339, %v1392
    %v1409 = vadd.f32 %v1340, %v1393
    %v1410 = vadd.f32 %v1341, %v1394
    %v1411 = vadd.f32 %v1342, %v1395
    %v1412 = vadd.f32 %v1343, %v1396
    %v1413 = vadd.f32 %v1344, %v1397
    %v1414 = vadd.f32 %v1345, %v1398
    %v1415 = vadd.f32 %v1346, %v1399
    %v1416 = vadd.f32 %v1347, %v1400
    %v1417 = vadd.f32 %v1348, %v1401
    %v1418 = vadd.f32 %v1349, %v1402
    %s1419 = sld [smem:[#allocation6 + %s1384]]
    %v1420 = vstv %s1419
    %v1421 = vmul.f32 %v1420, %v1368
    %v1422 = vmul.f32 %v1420, %v1369
    %v1423 = vmul.f32 %v1420, %v1370
    %v1424 = vmul.f32 %v1420, %v1371
    %v1425 = vmul.f32 %v1420, %v1372
    %v1426 = vmul.f32 %v1420, %v1373
    %v1427 = vmul.f32 %v1420, %v1374
    %v1428 = vmul.f32 %v1420, %v1375
    %v1429 = vmul.f32 %v1420, %v1376
    %v1430 = vmul.f32 %v1420, %v1377
    %v1431 = vmul.f32 %v1420, %v1378
    %v1432 = vmul.f32 %v1420, %v1379
    %v1433 = vmul.f32 %v1420, %v1380
    %v1434 = vmul.f32 %v1420, %v1381
    %v1435 = vmul.f32 %v1420, %v1382
    %v1436 = vmul.f32 %v1420, %v1383
    %v1437 = vadd.f32 %v1352, %v1421
    %v1438 = vadd.f32 %v1353, %v1422
    %v1439 = vadd.f32 %v1354, %v1423
    %v1440 = vadd.f32 %v1355, %v1424
    %v1441 = vadd.f32 %v1356, %v1425
    %v1442 = vadd.f32 %v1357, %v1426
    %v1443 = vadd.f32 %v1358, %v1427
    %v1444 = vadd.f32 %v1359, %v1428
    %v1445 = vadd.f32 %v1360, %v1429
    %v1446 = vadd.f32 %v1361, %v1430
    %v1447 = vadd.f32 %v1362, %v1431
    %v1448 = vadd.f32 %v1363, %v1432
    %v1449 = vadd.f32 %v1364, %v1433
    %v1450 = vadd.f32 %v1365, %v1434
    %v1451 = vadd.f32 %v1366, %v1435
    %v1452 = vadd.f32 %v1367, %v1436
    %v1453 = vld [vmem:[%s193] sm:$0xff]
    %v1454 = vld [vmem:[%s193 + $0x8] sm:$0xff]
    %v1455 = vld [vmem:[%s193 + $0x10] sm:$0xff]
    %v1456 = vld [vmem:[%s193 + $0x18] sm:$0xff]
    %v1457 = vld [vmem:[%s193 + $0x20] sm:$0xff]
    %v1458 = vld [vmem:[%s193 + $0x28] sm:$0xff]
    %v1459 = vld [vmem:[%s193 + $0x30] sm:$0xff]
    %v1460 = vld [vmem:[%s193 + $0x38] sm:$0xff]
    %v1461 = vld [vmem:[%s193 + $0x40] sm:$0xff]
    %v1462 = vld [vmem:[%s193 + $0x48] sm:$0xff]
    %v1463 = vld [vmem:[%s193 + $0x50] sm:$0xff]
    %v1464 = vld [vmem:[%s193 + $0x58] sm:$0xff]
    %v1465 = vld [vmem:[%s193 + $0x60] sm:$0xff]
    %v1466 = vld [vmem:[%s193 + $0x68] sm:$0xff]
    %v1467 = vld [vmem:[%s193 + $0x70] sm:$0xff]
    %v1468 = vld [vmem:[%s193 + $0x78] sm:$0xff]
    %s1469 = sadd.s32 %s1331, 2
    %s1470 = sld [smem:[#allocation2 + %s1469]]
    %v1471 = vstv %s1470
    %v1472 = vmul.f32 %v1471, %v1453
    %v1473 = vmul.f32 %v1471, %v1454
    %v1474 = vmul.f32 %v1471, %v1455
    %v1475 = vmul.f32 %v1471, %v1456
    %v1476 = vmul.f32 %v1471, %v1457
    %v1477 = vmul.f32 %v1471, %v1458
    %v1478 = vmul.f32 %v1471, %v1459
    %v1479 = vmul.f32 %v1471, %v1460
    %v1480 = vmul.f32 %v1471, %v1461
    %v1481 = vmul.f32 %v1471, %v1462
    %v1482 = vmul.f32 %v1471, %v1463
    %v1483 = vmul.f32 %v1471, %v1464
    %v1484 = vmul.f32 %v1471, %v1465
    %v1485 = vmul.f32 %v1471, %v1466
    %v1486 = vmul.f32 %v1471, %v1467
    %v1487 = vmul.f32 %v1471, %v1468
    %v1488 = vadd.f32 %v1403, %v1472
    %v1489 = vadd.f32 %v1404, %v1473
    %v1490 = vadd.f32 %v1405, %v1474
    %v1491 = vadd.f32 %v1406, %v1475
    %v1492 = vadd.f32 %v1407, %v1476
    %v1493 = vadd.f32 %v1408, %v1477
    %v1494 = vadd.f32 %v1409, %v1478
    %v1495 = vadd.f32 %v1410, %v1479
    %v1496 = vadd.f32 %v1411, %v1480
    %v1497 = vadd.f32 %v1412, %v1481
    %v1498 = vadd.f32 %v1413, %v1482
    %v1499 = vadd.f32 %v1414, %v1483
    %v1500 = vadd.f32 %v1415, %v1484
    %v1501 = vadd.f32 %v1416, %v1485
    %v1502 = vadd.f32 %v1417, %v1486
    %v1503 = vadd.f32 %v1418, %v1487
    %s1504 = sld [smem:[#allocation6 + %s1469]]
    %v1505 = vstv %s1504
    %v1506 = vmul.f32 %v1505, %v1453
    %v1507 = vmul.f32 %v1505, %v1454
    %v1508 = vmul.f32 %v1505, %v1455
    %v1509 = vmul.f32 %v1505, %v1456
    %v1510 = vmul.f32 %v1505, %v1457
    %v1511 = vmul.f32 %v1505, %v1458
    %v1512 = vmul.f32 %v1505, %v1459
    %v1513 = vmul.f32 %v1505, %v1460
    %v1514 = vmul.f32 %v1505, %v1461
    %v1515 = vmul.f32 %v1505, %v1462
    %v1516 = vmul.f32 %v1505, %v1463
    %v1517 = vmul.f32 %v1505, %v1464
    %v1518 = vmul.f32 %v1505, %v1465
    %v1519 = vmul.f32 %v1505, %v1466
    %v1520 = vmul.f32 %v1505, %v1467
    %v1521 = vmul.f32 %v1505, %v1468
    %v1522 = vadd.f32 %v1437, %v1506
    %v1523 = vadd.f32 %v1438, %v1507
    %v1524 = vadd.f32 %v1439, %v1508
    %v1525 = vadd.f32 %v1440, %v1509
    %v1526 = vadd.f32 %v1441, %v1510
    %v1527 = vadd.f32 %v1442, %v1511
    %v1528 = vadd.f32 %v1443, %v1512
    %v1529 = vadd.f32 %v1444, %v1513
    %v1530 = vadd.f32 %v1445, %v1514
    %v1531 = vadd.f32 %v1446, %v1515
    %v1532 = vadd.f32 %v1447, %v1516
    %v1533 = vadd.f32 %v1448, %v1517
    %v1534 = vadd.f32 %v1449, %v1518
    %v1535 = vadd.f32 %v1450, %v1519
    %v1536 = vadd.f32 %v1451, %v1520
    %v1537 = vadd.f32 %v1452, %v1521
    %v1538 = vld [vmem:[%s279] sm:$0xff]
    %v1539 = vld [vmem:[%s279 + $0x8] sm:$0xff]
    %v1540 = vld [vmem:[%s279 + $0x10] sm:$0xff]
    %v1541 = vld [vmem:[%s279 + $0x18] sm:$0xff]
    %v1542 = vld [vmem:[%s279 + $0x20] sm:$0xff]
    %v1543 = vld [vmem:[%s279 + $0x28] sm:$0xff]
    %v1544 = vld [vmem:[%s279 + $0x30] sm:$0xff]
    %v1545 = vld [vmem:[%s279 + $0x38] sm:$0xff]
    %v1546 = vld [vmem:[%s279 + $0x40] sm:$0xff]
    %v1547 = vld [vmem:[%s279 + $0x48] sm:$0xff]
    %v1548 = vld [vmem:[%s279 + $0x50] sm:$0xff]
    %v1549 = vld [vmem:[%s279 + $0x58] sm:$0xff]
    %v1550 = vld [vmem:[%s279 + $0x60] sm:$0xff]
    %v1551 = vld [vmem:[%s279 + $0x68] sm:$0xff]
    %v1552 = vld [vmem:[%s279 + $0x70] sm:$0xff]
    %v1553 = vld [vmem:[%s279 + $0x78] sm:$0xff]
    %s1554 = sadd.s32 %s1331, 3
    %s1555 = sld [smem:[#allocation2 + %s1554]]
    %v1556 = vstv %s1555
    %v1557 = vmul.f32 %v1556, %v1538
    %v1558 = vmul.f32 %v1556, %v1539
    %v1559 = vmul.f32 %v1556, %v1540
    %v1560 = vmul.f32 %v1556, %v1541
    %v1561 = vmul.f32 %v1556, %v1542
    %v1562 = vmul.f32 %v1556, %v1543
    %v1563 = vmul.f32 %v1556, %v1544
    %v1564 = vmul.f32 %v1556, %v1545
    %v1565 = vmul.f32 %v1556, %v1546
    %v1566 = vmul.f32 %v1556, %v1547
    %v1567 = vmul.f32 %v1556, %v1548
    %v1568 = vmul.f32 %v1556, %v1549
    %v1569 = vmul.f32 %v1556, %v1550
    %v1570 = vmul.f32 %v1556, %v1551
    %v1571 = vmul.f32 %v1556, %v1552
    %v1572 = vmul.f32 %v1556, %v1553
    %v1573 = vadd.f32 %v1488, %v1557
    %v1574 = vadd.f32 %v1489, %v1558
    %v1575 = vadd.f32 %v1490, %v1559
    %v1576 = vadd.f32 %v1491, %v1560
    %v1577 = vadd.f32 %v1492, %v1561
    %v1578 = vadd.f32 %v1493, %v1562
    %v1579 = vadd.f32 %v1494, %v1563
    %v1580 = vadd.f32 %v1495, %v1564
    %v1581 = vadd.f32 %v1496, %v1565
    %v1582 = vadd.f32 %v1497, %v1566
    %v1583 = vadd.f32 %v1498, %v1567
    %v1584 = vadd.f32 %v1499, %v1568
    %v1585 = vadd.f32 %v1500, %v1569
    %v1586 = vadd.f32 %v1501, %v1570
    %v1587 = vadd.f32 %v1502, %v1571
    %v1588 = vadd.f32 %v1503, %v1572
    %s1589 = sld [smem:[#allocation6 + %s1554]]
    %v1590 = vstv %s1589
    %v1591 = vmul.f32 %v1590, %v1538
    %v1592 = vmul.f32 %v1590, %v1539
    %v1593 = vmul.f32 %v1590, %v1540
    %v1594 = vmul.f32 %v1590, %v1541
    %v1595 = vmul.f32 %v1590, %v1542
    %v1596 = vmul.f32 %v1590, %v1543
    %v1597 = vmul.f32 %v1590, %v1544
    %v1598 = vmul.f32 %v1590, %v1545
    %v1599 = vmul.f32 %v1590, %v1546
    %v1600 = vmul.f32 %v1590, %v1547
    %v1601 = vmul.f32 %v1590, %v1548
    %v1602 = vmul.f32 %v1590, %v1549
    %v1603 = vmul.f32 %v1590, %v1550
    %v1604 = vmul.f32 %v1590, %v1551
    %v1605 = vmul.f32 %v1590, %v1552
    %v1606 = vmul.f32 %v1590, %v1553
    %v1607 = vadd.f32 %v1522, %v1591
    %v1608 = vadd.f32 %v1523, %v1592
    %v1609 = vadd.f32 %v1524, %v1593
    %v1610 = vadd.f32 %v1525, %v1594
    %v1611 = vadd.f32 %v1526, %v1595
    %v1612 = vadd.f32 %v1527, %v1596
    %v1613 = vadd.f32 %v1528, %v1597
    %v1614 = vadd.f32 %v1529, %v1598
    %v1615 = vadd.f32 %v1530, %v1599
    %v1616 = vadd.f32 %v1531, %v1600
    %v1617 = vadd.f32 %v1532, %v1601
    %v1618 = vadd.f32 %v1533, %v1602
    %v1619 = vadd.f32 %v1534, %v1603
    %v1620 = vadd.f32 %v1535, %v1604
    %v1621 = vadd.f32 %v1536, %v1605
    %v1622 = vadd.f32 %v1537, %v1606
    %v1623 = vmul.f32 %v1573, 1.442695
    %v1624 = vpow.pop %v1623
    %v1625 = vmul.f32 %v1574, 1.442695
    %v1626 = vpow.pop %v1625
    %v1627 = vmul.f32 %v1575, 1.442695
    %v1628 = vpow.pop %v1627
    %v1629 = vmul.f32 %v1576, 1.442695
    %v1630 = vpow.pop %v1629
    %v1631 = vmul.f32 %v1577, 1.442695
    %v1632 = vpow.pop %v1631
    %v1633 = vmul.f32 %v1578, 1.442695
    %v1634 = vpow.pop %v1633
    %v1635 = vmul.f32 %v1579, 1.442695
    %v1636 = vpow.pop %v1635
    %v1637 = vmul.f32 %v1580, 1.442695
    %v1638 = vpow.pop %v1637
    %v1639 = vmul.f32 %v1581, 1.442695
    %v1640 = vpow.pop %v1639
    %v1641 = vmul.f32 %v1582, 1.442695
    %v1642 = vpow.pop %v1641
    %v1643 = vmul.f32 %v1583, 1.442695
    %v1644 = vpow.pop %v1643
    %v1645 = vmul.f32 %v1584, 1.442695
    %v1646 = vpow.pop %v1645
    %v1647 = vmul.f32 %v1585, 1.442695
    %v1648 = vpow.pop %v1647
    %v1649 = vmul.f32 %v1586, 1.442695
    %v1650 = vpow.pop %v1649
    %v1651 = vmul.f32 %v1587, 1.442695
    %v1652 = vpow.pop %v1651
    %v1653 = vmul.f32 %v1588, 1.442695
    %v1654 = vpow.pop %v1653
    %v1655 = vmul.f32 %v1607, 1.442695
    %v1656 = vpow.pop %v1655
    %v1657 = vmul.f32 %v1608, 1.442695
    %v1658 = vpow.pop %v1657
    %v1659 = vmul.f32 %v1609, 1.442695
    %v1660 = vpow.pop %v1659
    %v1661 = vmul.f32 %v1610, 1.442695
    %v1662 = vpow.pop %v1661
    %v1663 = vmul.f32 %v1611, 1.442695
    %v1664 = vpow.pop %v1663
    %v1665 = vmul.f32 %v1612, 1.442695
    %v1666 = vpow.pop %v1665
    %v1667 = vmul.f32 %v1613, 1.442695
    %v1668 = vpow.pop %v1667
    %v1669 = vmul.f32 %v1614, 1.442695
    %v1670 = vpow.pop %v1669
    %v1671 = vmul.f32 %v1615, 1.442695
    %v1672 = vpow.pop %v1671
    %v1673 = vmul.f32 %v1616, 1.442695
    %v1674 = vpow.pop %v1673
    %v1675 = vmul.f32 %v1617, 1.442695
    %v1676 = vpow.pop %v1675
    %v1677 = vmul.f32 %v1618, 1.442695
    %v1678 = vpow.pop %v1677
    %v1679 = vmul.f32 %v1619, 1.442695
    %v1680 = vpow.pop %v1679
    %v1681 = vmul.f32 %v1620, 1.442695
    %v1682 = vpow.pop %v1681
    %v1683 = vmul.f32 %v1621, 1.442695
    %v1684 = vpow.pop %v1683
    %v1685 = vmul.f32 %v1622, 1.442695
    %v1686 = vpow.pop %v1685
    %v1687 = vadd.f32 %v1624, %v1626
    %v1688 = vadd.f32 %v1687, %v1628
    %v1689 = vadd.f32 %v1688, %v1630
    %v1690 = vadd.f32 %v1689, %v1632
    %v1691 = vadd.f32 %v1690, %v1634
    %v1692 = vadd.f32 %v1691, %v1636
    %v1693 = vadd.f32 %v1692, %v1638
    %v1694 = vadd.f32 %v1693, %v1640
    %v1695 = vadd.f32 %v1694, %v1642
    %v1696 = vadd.f32 %v1695, %v1644
    %v1697 = vadd.f32 %v1696, %v1646
    %v1698 = vadd.f32 %v1697, %v1648
    %v1699 = vadd.f32 %v1698, %v1650
    %v1700 = vadd.f32 %v1699, %v1652
    %v1701 = vadd.f32 %v1700, %v1654
    %v1702 = vrot.slane %v1701, 4
    %v1703 = vadd.f32 %v1701, %v1702
    %v1704 = vrot.slane %v1703, 2
    %v1705 = vadd.f32 %v1703, %v1704
    %v1706 = vrot.slane %v1705, 1
    %v1707 = vadd.f32 %v1705, %v1706
    %v1708 = vadd.f32 %v1707, 1e-06
    %v1709 = vrcp.pop %v1708
    %v1710 = vadd.f32 %v1656, %v1658
    %v1711 = vadd.f32 %v1710, %v1660
    %v1712 = vadd.f32 %v1711, %v1662
    %v1713 = vadd.f32 %v1712, %v1664
    %v1714 = vadd.f32 %v1713, %v1666
    %v1715 = vadd.f32 %v1714, %v1668
    %v1716 = vadd.f32 %v1715, %v1670
    %v1717 = vadd.f32 %v1716, %v1672
    %v1718 = vadd.f32 %v1717, %v1674
    %v1719 = vadd.f32 %v1718, %v1676
    %v1720 = vadd.f32 %v1719, %v1678
    %v1721 = vadd.f32 %v1720, %v1680
    %v1722 = vadd.f32 %v1721, %v1682
    %v1723 = vadd.f32 %v1722, %v1684
    %v1724 = vadd.f32 %v1723, %v1686
    %v1725 = vrot.slane %v1724, 4
    %v1726 = vadd.f32 %v1724, %v1725
    %v1727 = vrot.slane %v1726, 2
    %v1728 = vadd.f32 %v1726, %v1727
    %v1729 = vrot.slane %v1728, 1
    %v1730 = vadd.f32 %v1728, %v1729
    %v1731 = vadd.f32 %v1730, 1e-06
    %v1732 = vrcp.pop %v1731
    %v1733 = vmul.f32 %v1624, %v1709
    %v1734 = vmul.f32 %v1626, %v1709
    %v1735 = vmul.f32 %v1628, %v1709
    %v1736 = vmul.f32 %v1630, %v1709
    %v1737 = vmul.f32 %v1632, %v1709
    %v1738 = vmul.f32 %v1634, %v1709
    %v1739 = vmul.f32 %v1636, %v1709
    %v1740 = vmul.f32 %v1638, %v1709
    %v1741 = vmul.f32 %v1640, %v1709
    %v1742 = vmul.f32 %v1642, %v1709
    %v1743 = vmul.f32 %v1644, %v1709
    %v1744 = vmul.f32 %v1646, %v1709
    %v1745 = vmul.f32 %v1648, %v1709
    %v1746 = vmul.f32 %v1650, %v1709
    %v1747 = vmul.f32 %v1652, %v1709
    %v1748 = vmul.f32 %v1654, %v1709
    %v1749 = vmul.f32 %v1656, %v1732
    %v1750 = vmul.f32 %v1658, %v1732
    %v1751 = vmul.f32 %v1660, %v1732
    %v1752 = vmul.f32 %v1662, %v1732
    %v1753 = vmul.f32 %v1664, %v1732
    %v1754 = vmul.f32 %v1666, %v1732
    %v1755 = vmul.f32 %v1668, %v1732
    %v1756 = vmul.f32 %v1670, %v1732
    %v1757 = vmul.f32 %v1672, %v1732
    %v1758 = vmul.f32 %v1674, %v1732
    %v1759 = vmul.f32 %v1676, %v1732
    %v1760 = vmul.f32 %v1678, %v1732
    %v1761 = vmul.f32 %v1680, %v1732
    %v1762 = vmul.f32 %v1682, %v1732
    %v1763 = vmul.f32 %v1684, %v1732
    %v1764 = vmul.f32 %v1686, %v1732
    %s1765 = scalar_lea.vmem [#allocation10], 256
    %1766 = vst [vmem:[%s1765] sm:$0xff] %v1733
    %1767 = vst [vmem:[%s1765 + $0x8] sm:$0xff] %v1734
    %1768 = vst [vmem:[%s1765 + $0x10] sm:$0xff] %v1735
    %1769 = vst [vmem:[%s1765 + $0x18] sm:$0xff] %v1736
    %1770 = vst [vmem:[%s1765 + $0x20] sm:$0xff] %v1737
    %1771 = vst [vmem:[%s1765 + $0x28] sm:$0xff] %v1738
    %1772 = vst [vmem:[%s1765 + $0x30] sm:$0xff] %v1739
    %1773 = vst [vmem:[%s1765 + $0x38] sm:$0xff] %v1740
    %1774 = vst [vmem:[%s1765 + $0x40] sm:$0xff] %v1741
    %1775 = vst [vmem:[%s1765 + $0x48] sm:$0xff] %v1742
    %1776 = vst [vmem:[%s1765 + $0x50] sm:$0xff] %v1743
    %1777 = vst [vmem:[%s1765 + $0x58] sm:$0xff] %v1744
    %1778 = vst [vmem:[%s1765 + $0x60] sm:$0xff] %v1745
    %1779 = vst [vmem:[%s1765 + $0x68] sm:$0xff] %v1746
    %1780 = vst [vmem:[%s1765 + $0x70] sm:$0xff] %v1747
    %1781 = vst [vmem:[%s1765 + $0x78] sm:$0xff] %v1748
    %1782 = vmatprep.subr.mxu0 0.0
    %1783 = vmatpush1.msra.mxu0 %v1764
    %1784 = vmatprep.subr.mxu0 0.0
    %1785 = vmatpush1.msra.mxu0 %v1763
    %1786 = vmatprep.subr.mxu0 0.0
    %1787 = vmatpush1.msra.mxu0 %v1762
    %1788 = vmatprep.subr.mxu0 0.0
    %1789 = vmatpush1.msra.mxu0 %v1761
    %1790 = vmatprep.subr.mxu0 0.0
    %1791 = vmatpush1.msra.mxu0 %v1760
    %1792 = vmatprep.subr.mxu0 0.0
    %1793 = vmatpush1.msra.mxu0 %v1759
    %1794 = vmatprep.subr.mxu0 0.0
    %1795 = vmatpush1.msra.mxu0 %v1758
    %1796 = vmatprep.subr.mxu0 0.0
    %1797 = vmatpush1.msra.mxu0 %v1757
    %1798 = vmatprep.subr.mxu0 0.0
    %1799 = vmatpush1.msra.mxu0 %v1756
    %1800 = vmatprep.subr.mxu0 0.0
    %1801 = vmatpush1.msra.mxu0 %v1755
    %1802 = vmatprep.subr.mxu0 0.0
    %1803 = vmatpush1.msra.mxu0 %v1754
    %1804 = vmatprep.subr.mxu0 0.0
    %1805 = vmatpush1.msra.mxu0 %v1753
    %1806 = vmatprep.subr.mxu0 0.0
    %1807 = vmatpush1.msra.mxu0 %v1752
    %1808 = vmatprep.subr.mxu0 0.0
    %1809 = vmatpush1.msra.mxu0 %v1751
    %1810 = vmatprep.subr.mxu0 0.0
    %1811 = vmatpush1.msra.mxu0 %v1750
    %1812 = vmatprep.subr.mxu0 0.0
    %1813 = vmatpush1.msra.mxu0 %v1749
    %1814 = vmatprep.subr.mxu0 0.0
    %1815 = vmatpush2.msra.mxu0 0.0
    %1816 = vmatprep.subr.mxu0 0.0
    %1817 = vmatpush2.msra.mxu0 0.0
    %1818 = vmatprep.subr.mxu0 0.0
    %1819 = vmatpush2.msra.mxu0 0.0
    %1820 = vmatprep.subr.mxu0 0.0
    %1821 = vmatpush2.msra.mxu0 0.0
    %1822 = vmatprep.subr.mxu0 0.0
    %1823 = vmatpush2.msra.mxu0 0.0
    %1824 = vmatprep.subr.mxu0 0.0
    %1825 = vmatpush2.msra.mxu0 0.0
    %1826 = vmatprep.subr.mxu0 0.0
    %1827 = vmatpush2.msra.mxu0 0.0
    %1828 = vmatprep.subr.mxu0 0.0
    %1829 = vmatpush2.msra.mxu0 0.0
    %1830 = vmatprep.subr.mxu0 0.0
    %1831 = vmatpush2.msra.mxu0 0.0
    %1832 = vmatprep.subr.mxu0 0.0
    %1833 = vmatpush2.msra.mxu0 0.0
    %1834 = vmatprep.subr.mxu0 0.0
    %1835 = vmatpush2.msra.mxu0 0.0
    %1836 = vmatprep.subr.mxu0 0.0
    %1837 = vmatpush2.msra.mxu0 0.0
    %1838 = vmatprep.subr.mxu0 0.0
    %1839 = vmatpush2.msra.mxu0 0.0
    %1840 = vmatprep.subr.mxu0 0.0
    %1841 = vmatpush2.msra.mxu0 0.0
    %1842 = vmatprep.subr.mxu0 0.0
    %1843 = vmatpush2.msra.mxu0 0.0
    %1844 = vmatprep.subr.mxu0 0.0
    %1845 = vmatpush2.msra.mxu0 0.0
    %1846 = vmatprep.mubr.f32.mxu0 0.0
    %1847 = vmatmul.mubr.f32.gmra.mxu0 %v1733
    %v1848 = vpop.f32.mrf.mxu0
    %v1849 = vadd.f32 0.0, %v1848
    %v1850 = vpop.f32.mrf.mxu0
    %1851 = vmatprep.mubr.f32.mxu0 0.0
    %1852 = vmatmul.mubr.f32.gmra.mxu0 %v1734
    %v1853 = vpop.f32.mrf.mxu0
    %v1854 = vadd.f32 0.0, %v1853
    %v1855 = vpop.f32.mrf.mxu0
    %1856 = vmatprep.mubr.f32.mxu0 0.0
    %1857 = vmatmul.mubr.f32.gmra.mxu0 %v1735
    %v1858 = vpop.f32.mrf.mxu0
    %v1859 = vadd.f32 0.0, %v1858
    %v1860 = vpop.f32.mrf.mxu0
    %1861 = vmatprep.mubr.f32.mxu0 0.0
    %1862 = vmatmul.mubr.f32.gmra.mxu0 %v1736
    %v1863 = vpop.f32.mrf.mxu0
    %v1864 = vadd.f32 0.0, %v1863
    %v1865 = vpop.f32.mrf.mxu0
    %1866 = vmatprep.mubr.f32.mxu0 0.0
    %1867 = vmatmul.mubr.f32.gmra.mxu0 %v1737
    %v1868 = vpop.f32.mrf.mxu0
    %v1869 = vadd.f32 0.0, %v1868
    %v1870 = vpop.f32.mrf.mxu0
    %1871 = vmatprep.mubr.f32.mxu0 0.0
    %1872 = vmatmul.mubr.f32.gmra.mxu0 %v1738
    %v1873 = vpop.f32.mrf.mxu0
    %v1874 = vadd.f32 0.0, %v1873
    %v1875 = vpop.f32.mrf.mxu0
    %1876 = vmatprep.mubr.f32.mxu0 0.0
    %1877 = vmatmul.mubr.f32.gmra.mxu0 %v1739
    %v1878 = vpop.f32.mrf.mxu0
    %v1879 = vadd.f32 0.0, %v1878
    %v1880 = vpop.f32.mrf.mxu0
    %1881 = vmatprep.mubr.f32.mxu0 0.0
    %1882 = vmatmul.mubr.f32.gmra.mxu0 %v1740
    %v1883 = vpop.f32.mrf.mxu0
    %v1884 = vadd.f32 0.0, %v1883
    %v1885 = vpop.f32.mrf.mxu0
    %1886 = vmatprep.mubr.f32.mxu0 0.0
    %1887 = vmatmul.mubr.f32.gmra.mxu0 %v1741
    %v1888 = vpop.f32.mrf.mxu0
    %v1889 = vadd.f32 0.0, %v1888
    %v1890 = vpop.f32.mrf.mxu0
    %1891 = vmatprep.mubr.f32.mxu0 0.0
    %1892 = vmatmul.mubr.f32.gmra.mxu0 %v1742
    %v1893 = vpop.f32.mrf.mxu0
    %v1894 = vadd.f32 0.0, %v1893
    %v1895 = vpop.f32.mrf.mxu0
    %1896 = vmatprep.mubr.f32.mxu0 0.0
    %1897 = vmatmul.mubr.f32.gmra.mxu0 %v1743
    %v1898 = vpop.f32.mrf.mxu0
    %v1899 = vadd.f32 0.0, %v1898
    %v1900 = vpop.f32.mrf.mxu0
    %1901 = vmatprep.mubr.f32.mxu0 0.0
    %1902 = vmatmul.mubr.f32.gmra.mxu0 %v1744
    %v1903 = vpop.f32.mrf.mxu0
    %v1904 = vadd.f32 0.0, %v1903
    %v1905 = vpop.f32.mrf.mxu0
    %1906 = vmatprep.mubr.f32.mxu0 0.0
    %1907 = vmatmul.mubr.f32.gmra.mxu0 %v1745
    %v1908 = vpop.f32.mrf.mxu0
    %v1909 = vadd.f32 0.0, %v1908
    %v1910 = vpop.f32.mrf.mxu0
    %1911 = vmatprep.mubr.f32.mxu0 0.0
    %1912 = vmatmul.mubr.f32.gmra.mxu0 %v1746
    %v1913 = vpop.f32.mrf.mxu0
    %v1914 = vadd.f32 0.0, %v1913
    %v1915 = vpop.f32.mrf.mxu0
    %1916 = vmatprep.mubr.f32.mxu0 0.0
    %1917 = vmatmul.mubr.f32.gmra.mxu0 %v1747
    %v1918 = vpop.f32.mrf.mxu0
    %v1919 = vadd.f32 0.0, %v1918
    %v1920 = vpop.f32.mrf.mxu0
    %1921 = vmatprep.mubr.f32.mxu0 0.0
    %1922 = vmatmul.mubr.f32.gmra.mxu0 %v1748
    %v1923 = vpop.f32.mrf.mxu0
    %v1924 = vadd.f32 0.0, %v1923
    %v1925 = vpop.f32.mrf.mxu0
    %1926 = vdwg.mxu0
    %s1927 = scalar_lea.vmem [#allocation9], 256
    %1928 = vst [vmem:[%s1927] sm:$0xff] %v1849
    %1929 = vst [vmem:[%s1927 + $0x8] sm:$0xff] %v1854
    %1930 = vst [vmem:[%s1927 + $0x10] sm:$0xff] %v1859
    %1931 = vst [vmem:[%s1927 + $0x18] sm:$0xff] %v1864
    %1932 = vst [vmem:[%s1927 + $0x20] sm:$0xff] %v1869
    %1933 = vst [vmem:[%s1927 + $0x28] sm:$0xff] %v1874
    %1934 = vst [vmem:[%s1927 + $0x30] sm:$0xff] %v1879
    %1935 = vst [vmem:[%s1927 + $0x38] sm:$0xff] %v1884
    %1936 = vst [vmem:[%s1927 + $0x40] sm:$0xff] %v1889
    %1937 = vst [vmem:[%s1927 + $0x48] sm:$0xff] %v1894
    %1938 = vst [vmem:[%s1927 + $0x50] sm:$0xff] %v1899
    %1939 = vst [vmem:[%s1927 + $0x58] sm:$0xff] %v1904
    %1940 = vst [vmem:[%s1927 + $0x60] sm:$0xff] %v1909
    %1941 = vst [vmem:[%s1927 + $0x68] sm:$0xff] %v1914
    %1942 = vst [vmem:[%s1927 + $0x70] sm:$0xff] %v1919
    %1943 = vst [vmem:[%s1927 + $0x78] sm:$0xff] %v1924
    // Predicated region
    $region26: #{_hmae_pallas.1} parent=1 // pred_check
      _
    $region27: #{_hmae_pallas.1} parent=1 // pred_check_branch
      %1945 = sbr.rel (0) target = $region29
    $region28: #{_hmae_pallas.1} parent=1 // pred_region
      %s1947 = ssub.s32 6144, 6144
      %1948 = vsyncadd [#allocation4], %s1947
      %s1949 = sshll.u32 [#allocation9], 4
      %s1950 = int_to_ptr.vmem [resolvable:$true] %s1949
      %1955 = dma.vmem_to_hbm [thread:$0]  %s1950, 6144, %s3, [#allocation4], 128, 128, 8
    $region29: #{_hmae_pallas.1} parent=1 // pred_fallthru
      _
    // Predicated region
    $region30: #{_hmae_pallas.1} parent=1 // pred_check
      _
    $region31: #{_hmae_pallas.1} parent=1 // pred_check_branch
      %1957 = sbr.rel (0) target = $region33
    $region32: #{_hmae_pallas.1} parent=1 // pred_region
      %s1959 = ssub.s32 6144, 6144
      %1960 = vsyncadd [#allocation11], %s1959
      %s1961 = sshll.u32 [#allocation10], 4
      %s1962 = int_to_ptr.vmem [resolvable:$true] %s1961
      %1967 = dma.vmem_to_hbm [thread:$0]  %s1962, 6144, %s4, [#allocation11], 128, 128, 8
    $region33: #{_hmae_pallas.1} parent=1 // pred_fallthru
      _
    // Predicated region
    $region34: #{_hmae_pallas.1} parent=1 // pred_check
      _
    $region35: #{_hmae_pallas.1} parent=1 // pred_check_branch
      %1969 = sbr.rel (0) target = $region37
    $region36: #{_hmae_pallas.1} parent=1 // pred_region
      %1970 = dma.done [#allocation4], 6144
    $region37: #{_hmae_pallas.1} parent=1 // pred_fallthru
      _
    // Predicated region
    $region38: #{_hmae_pallas.1} parent=1 // pred_check
      _
    $region39: #{_hmae_pallas.1} parent=1 // pred_check_branch
      %1972 = sbr.rel (0) target = $region41
    $region40: #{_hmae_pallas.1} parent=1 // pred_region
      %1973 = dma.done [#allocation11], 6144
    $region41: #{_hmae_pallas.1} parent=1 // pred_fallthru
      _
    %1974 = vsyncpa [#allocation3], 1
    %1975 = vsyncpa [#allocation4], 1
    %1976 = vsyncpa [#allocation11], 1
    %1977 = vsyncpa [#allocation5], 1
    %1978 = vsyncpa [#allocation7], 1

// kernel: _hmae_pallas.1
$region0: #{_hmae_pallas.1}
  #allocation0 [shape = 'u32[]', space=smem, size = 0x4, offset = 0x4, fixed_abs, tag = 'smem constant byte address 0x4 - core index']
  #allocation1 [shape = 'u32[144,128]{1,0:T(1,128)}', space=vmem, size = 0x12000, scoped, tag = 'internal scratch']
  %s0 = inlined_call_operand.hbm [shape: f32[3,4], index: 0, kind: input, shape index: {}]
  %s1 = inlined_call_operand.hbm [shape: f32[3,4], index: 1, kind: input, shape index: {}]
  %s2 = inlined_call_operand.hbm [shape: f32[4,128,128], index: 2, kind: input, shape index: {}]
  %s3 = inlined_call_operand.hbm [shape: f32[3,128,128], index: 3, kind: output, shape index: {0}]
  %s4 = inlined_call_operand.hbm [shape: f32[3,128,128], index: 4, kind: output, shape index: {1}]
  %5 = xla_tuple %s3, %s4
  %s6 = sld [smem:[#allocation0]]
  $region42: #{_hmae_pallas.1} parent=0
    _
  %s8 = ssub.s32 1, %s6
  %s9 = scalar_select 0, %s8, %s6
  $region1: #{_hmae_pallas.1} parent=0
    #allocation2 [shape = 'u8[2048]{0}', space=smem, size = 0x800, scoped, tag = 'input window, operand 0, single buffered']
    #allocation3 [shape = 's32[1]{0}', space=sflag, size = 0x4, scoped, tag = 'scoped memory for _hmae_pallas.1']
    #allocation4 [shape = 's32[1]{0}', space=sflag, size = 0x4, scoped, tag = 'scoped memory for _hmae_pallas.1']
    #allocation5 [shape = 's32[1]{0}', space=sflag, size = 0x4, scoped, tag = 'scoped memory for _hmae_pallas.1']
    #allocation6 [shape = 'u8[2048]{0}', space=smem, size = 0x800, scoped, tag = 'input window, operand 1, single buffered']
    #allocation7 [shape = 's32[1]{0}', space=sflag, size = 0x4, scoped, tag = 'scoped memory for _hmae_pallas.1']
    #allocation8 [shape = 'u8[262144]{0}', space=vmem, size = 0x40000, scoped, tag = 'input window, operand 2, single buffered']
    #allocation9 [shape = 'u8[196608]{0}', space=vmem, size = 0x30000, scoped, tag = 'output window, operand 0, single buffered']
    #allocation10 [shape = 'u8[196608]{0}', space=vmem, size = 0x30000, scoped, tag = 'output window, operand 1, single buffered']
    #allocation11 [shape = 's32[1]{0}', space=sflag, size = 0x4, scoped, tag = 'scoped memory for _hmae_pallas.1']
    %10 = vsyncpa [#allocation5], 0
    %11 = vsyncpa [#allocation7], 0
    %12 = vsyncpa [#allocation3], 0
    %13 = vsyncpa [#allocation4], 0
    %14 = vsyncpa [#allocation11], 0
    // Predicated region
    $region2: #{_hmae_pallas.1} parent=1 // pred_check
      _
    $region3: #{_hmae_pallas.1} parent=1 // pred_check_branch
      %16 = sbr.rel (0) target = $region5
    $region4: #{_hmae_pallas.1} parent=1 // pred_region
      %s18 = ssub.s32 64, 64
      %19 = vsyncadd [#allocation5], %s18
      %22 = dma.hbm_to_smem %s0, 64, [#allocation2], [#allocation5]
    $region5: #{_hmae_pallas.1} parent=1 // pred_fallthru
      _
    // Predicated region
    $region6: #{_hmae_pallas.1} parent=1 // pred_check
      _
    $region7: #{_hmae_pallas.1} parent=1 // pred_check_branch
      %24 = sbr.rel (0) target = $region9
    $region8: #{_hmae_pallas.1} parent=1 // pred_region
      %s26 = ssub.s32 64, 64
      %27 = vsyncadd [#allocation7], %s26
      %30 = dma.hbm_to_smem %s1, 64, [#allocation6], [#allocation7]
    $region9: #{_hmae_pallas.1} parent=1 // pred_fallthru
      _
    // Predicated region
    $region10: #{_hmae_pallas.1} parent=1 // pred_check
      _
    $region11: #{_hmae_pallas.1} parent=1 // pred_check_branch
      %32 = sbr.rel (0) target = $region13
    $region12: #{_hmae_pallas.1} parent=1 // pred_region
      %s34 = ssub.s32 8192, 8192
      %35 = vsyncadd [#allocation3], %s34
      %s36 = sshll.u32 [#allocation8], 4
      %s37 = int_to_ptr.vmem [resolvable:$true] %s36
      %42 = dma.hbm_to_vmem [thread:$0]  %s2, 8192, %s37, [#allocation3], 128, 128, 8
    $region13: #{_hmae_pallas.1} parent=1 // pred_fallthru
      _
    // Predicated region
    $region14: #{_hmae_pallas.1} parent=1 // pred_check
      _
    $region15: #{_hmae_pallas.1} parent=1 // pred_check_branch
      %44 = sbr.rel (0) target = $region17
    $region16: #{_hmae_pallas.1} parent=1 // pred_region
      %45 = dma.done [#allocation5], 64
    $region17: #{_hmae_pallas.1} parent=1 // pred_fallthru
      _
    // Predicated region
    $region18: #{_hmae_pallas.1} parent=1 // pred_check
      _
    $region19: #{_hmae_pallas.1} parent=1 // pred_check_branch
      %47 = sbr.rel (0) target = $region21
    $region20: #{_hmae_pallas.1} parent=1 // pred_region
      %48 = dma.done [#allocation7], 64
    $region21: #{_hmae_pallas.1} parent=1 // pred_fallthru
      _
    // Predicated region
    $region22: #{_hmae_pallas.1} parent=1 // pred_check
      _
    $region23: #{_hmae_pallas.1} parent=1 // pred_check_branch
      %50 = sbr.rel (0) target = $region25
    $region24: #{_hmae_pallas.1} parent=1 // pred_region
      %51 = dma.done [#allocation3], 8192
    $region25: #{_hmae_pallas.1} parent=1 // pred_fallthru
      _
    %52 = sfence
    %s53 = smul.u32 0, 3
    %v54 = vld [vmem:[#allocation8] sm:$0xff]
    %v55 = vld [vmem:[#allocation8 + $0x8] sm:$0xff]
    %v56 = vld [vmem:[#allocation8 + $0x10] sm:$0xff]
    %v57 = vld [vmem:[#allocation8 + $0x18] sm:$0xff]
    %v58 = vld [vmem:[#allocation8 + $0x20] sm:$0xff]
    %v59 = vld [vmem:[#allocation8 + $0x28] sm:$0xff]
    %v60 = vld [vmem:[#allocation8 + $0x30] sm:$0xff]
    %v61 = vld [vmem:[#allocation8 + $0x38] sm:$0xff]
    %v62 = vld [vmem:[#allocation8 + $0x40] sm:$0xff]
    %v63 = vld [vmem:[#allocation8 + $0x48] sm:$0xff]
    %v64 = vld [vmem:[#allocation8 + $0x50] sm:$0xff]
    %v65 = vld [vmem:[#allocation8 + $0x58] sm:$0xff]
    %v66 = vld [vmem:[#allocation8 + $0x60] sm:$0xff]
    %v67 = vld [vmem:[#allocation8 + $0x68] sm:$0xff]
    %v68 = vld [vmem:[#allocation8 + $0x70] sm:$0xff]
    %v69 = vld [vmem:[#allocation8 + $0x78] sm:$0xff]
    %s70 = smul.u32 %s53, 128
    %s71 = sld [smem:[#allocation2 + %s70]]
    %v72 = vstv %s71
    %v73 = vmul.f32 %v72, %v54
    %v74 = vmul.f32 %v72, %v55
    %v75 = vmul.f32 %v72, %v56
    %v76 = vmul.f32 %v72, %v57
    %v77 = vmul.f32 %v72, %v58
    %v78 = vmul.f32 %v72, %v59
    %v79 = vmul.f32 %v72, %v60
    %v80 = vmul.f32 %v72, %v61
    %v81 = vmul.f32 %v72, %v62
    %v82 = vmul.f32 %v72, %v63
    %v83 = vmul.f32 %v72, %v64
    %v84 = vmul.f32 %v72, %v65
    %v85 = vmul.f32 %v72, %v66
    %v86 = vmul.f32 %v72, %v67
    %v87 = vmul.f32 %v72, %v68
    %v88 = vmul.f32 %v72, %v69
    %s89 = sld [smem:[#allocation6 + %s70]]
    %v90 = vstv %s89
    %v91 = vmul.f32 %v90, %v54
    %v92 = vmul.f32 %v90, %v55
    %v93 = vmul.f32 %v90, %v56
    %v94 = vmul.f32 %v90, %v57
    %v95 = vmul.f32 %v90, %v58
    %v96 = vmul.f32 %v90, %v59
    %v97 = vmul.f32 %v90, %v60
    %v98 = vmul.f32 %v90, %v61
    %v99 = vmul.f32 %v90, %v62
    %v100 = vmul.f32 %v90, %v63
    %v101 = vmul.f32 %v90, %v64
    %v102 = vmul.f32 %v90, %v65
    %v103 = vmul.f32 %v90, %v66
    %v104 = vmul.f32 %v90, %v67
    %v105 = vmul.f32 %v90, %v68
    %v106 = vmul.f32 %v90, %v69
    %s107 = scalar_lea.vmem [#allocation8], 128
    %v108 = vld [vmem:[%s107] sm:$0xff]
    %v109 = vld [vmem:[%s107 + $0x8] sm:$0xff]
    %v110 = vld [vmem:[%s107 + $0x10] sm:$0xff]
    %v111 = vld [vmem:[%s107 + $0x18] sm:$0xff]
    %v112 = vld [vmem:[%s107 + $0x20] sm:$0xff]
    %v113 = vld [vmem:[%s107 + $0x28] sm:$0xff]
    %v114 = vld [vmem:[%s107 + $0x30] sm:$0xff]
    %v115 = vld [vmem:[%s107 + $0x38] sm:$0xff]
    %v116 = vld [vmem:[%s107 + $0x40] sm:$0xff]
    %v117 = vld [vmem:[%s107 + $0x48] sm:$0xff]
    %v118 = vld [vmem:[%s107 + $0x50] sm:$0xff]
    %v119 = vld [vmem:[%s107 + $0x58] sm:$0xff]
    %v120 = vld [vmem:[%s107 + $0x60] sm:$0xff]
    %v121 = vld [vmem:[%s107 + $0x68] sm:$0xff]
    %v122 = vld [vmem:[%s107 + $0x70] sm:$0xff]
    %v123 = vld [vmem:[%s107 + $0x78] sm:$0xff]
    %s124 = sadd.s32 %s70, 1
    %s125 = sld [smem:[#allocation2 + %s124]]
    %v126 = vstv %s125
    %v127 = vmul.f32 %v126, %v108
    %v128 = vmul.f32 %v126, %v109
    %v129 = vmul.f32 %v126, %v110
    %v130 = vmul.f32 %v126, %v111
    %v131 = vmul.f32 %v126, %v112
    %v132 = vmul.f32 %v126, %v113
    %v133 = vmul.f32 %v126, %v114
    %v134 = vmul.f32 %v126, %v115
    %v135 = vmul.f32 %v126, %v116
    %v136 = vmul.f32 %v126, %v117
    %v137 = vmul.f32 %v126, %v118
    %v138 = vmul.f32 %v126, %v119
    %v139 = vmul.f32 %v126, %v120
    %v140 = vmul.f32 %v126, %v121
    %v141 = vmul.f32 %v126, %v122
    %v142 = vmul.f32 %v126, %v123
    %v143 = vadd.f32 %v73, %v127
    %v144 = vadd.f32 %v74, %v128
    %v145 = vadd.f32 %v75, %v129
    %v146 = vadd.f32 %v76, %v130
    %v147 = vadd.f32 %v77, %v131
    %v148 = vadd.f32 %v78, %v132
    %v149 = vadd.f32 %v79, %v133
    %v150 = vadd.f32 %v80, %v134
    %v151 = vadd.f32 %v81, %v135
    %v152 = vadd.f32 %v82, %v136
    %v153 = vadd.f32 %v83, %v137
    %v154 = vadd.f32 %v84, %v138
    %v155 = vadd.f32 %v85, %v139
    %v156 = vadd.f32 %v86, %v140
    %v157 = vadd.f32 %v87, %v141
    %v158 = vadd.f32 %v88, %v142
    %s159 = sld [smem:[#allocation6 + %s124]]
    %v160 = vstv %s159
    %v161 = vmul.f32 %v160, %v108
    %v162 = vmul.f32 %v160, %v109
    %v163 = vmul.f32 %v160, %v110
    %v164 = vmul.f32 %v160, %v111
    %v165 = vmul.f32 %v160, %v112
    %v166 = vmul.f32 %v160, %v113
    %v167 = vmul.f32 %v160, %v114
    %v168 = vmul.f32 %v160, %v115
    %v169 = vmul.f32 %v160, %v116
    %v170 = vmul.f32 %v160, %v117
    %v171 = vmul.f32 %v160, %v118
    %v172 = vmul.f32 %v160, %v119
    %v173 = vmul.f32 %v160, %v120
    %v174 = vmul.f32 %v160, %v121
    %v175 = vmul.f32 %v160, %v122
    %v176 = vmul.f32 %v160, %v123
    %v177 = vadd.f32 %v91, %v161
    %v178 = vadd.f32 %v92, %v162
    %v179 = vadd.f32 %v93, %v163
    %v180 = vadd.f32 %v94, %v164
    %v181 = vadd.f32 %v95, %v165
    %v182 = vadd.f32 %v96, %v166
    %v183 = vadd.f32 %v97, %v167
    %v184 = vadd.f32 %v98, %v168
    %v185 = vadd.f32 %v99, %v169
    %v186 = vadd.f32 %v100, %v170
    %v187 = vadd.f32 %v101, %v171
    %v188 = vadd.f32 %v102, %v172
    %v189 = vadd.f32 %v103, %v173
    %v190 = vadd.f32 %v104, %v174
    %v191 = vadd.f32 %v105, %v175
    %v192 = vadd.f32 %v106, %v176
    %s193 = scalar_lea.vmem [#allocation8], 256
    %v194 = vld [vmem:[%s193] sm:$0xff]
    %v195 = vld [vmem:[%s193 + $0x8] sm:$0xff]
    %v196 = vld [vmem:[%s193 + $0x10] sm:$0xff]
    %v197 = vld [vmem:[%s193 + $0x18] sm:$0xff]
    %v198 = vld [vmem:[%s193 + $0x20] sm:$0xff]
    %v199 = vld [vmem:[%s193 + $0x28] sm:$0xff]
    %v200 = vld [vmem:[%s193 + $0x30] sm:$0xff]
    %v201 = vld [vmem:[%s193 + $0x38] sm:$0xff]
    %v202 = vld [vmem:[%s193 + $0x40] sm:$0xff]
    %v203 = vld [vmem:[%s193 + $0x48] sm:$0xff]
    %v204 = vld [vmem:[%s193 + $0x50] sm:$0xff]
    %v205 = vld [vmem:[%s193 + $0x58] sm:$0xff]
    %v206 = vld [vmem:[%s193 + $0x60] sm:$0xff]
    %v207 = vld [vmem:[%s193 + $0x68] sm:$0xff]
    %v208 = vld [vmem:[%s193 + $0x70] sm:$0xff]
    %v209 = vld [vmem:[%s193 + $0x78] sm:$0xff]
    %s210 = sadd.s32 %s70, 2
    %s211 = sld [smem:[#allocation2 + %s210]]
    %v212 = vstv %s211
    %v213 = vmul.f32 %v212, %v194
    %v214 = vmul.f32 %v212, %v195
    %v215 = vmul.f32 %v212, %v196
    %v216 = vmul.f32 %v212, %v197
    %v217 = vmul.f32 %v212, %v198
    %v218 = vmul.f32 %v212, %v199
    %v219 = vmul.f32 %v212, %v200
    %v220 = vmul.f32 %v212, %v201
    %v221 = vmul.f32 %v212, %v202
    %v222 = vmul.f32 %v212, %v203
    %v223 = vmul.f32 %v212, %v204
    %v224 = vmul.f32 %v212, %v205
    %v225 = vmul.f32 %v212, %v206
    %v226 = vmul.f32 %v212, %v207
    %v227 = vmul.f32 %v212, %v208
    %v228 = vmul.f32 %v212, %v209
    %v229 = vadd.f32 %v143, %v213
    %v230 = vadd.f32 %v144, %v214
    %v231 = vadd.f32 %v145, %v215
    %v232 = vadd.f32 %v146, %v216
    %v233 = vadd.f32 %v147, %v217
    %v234 = vadd.f32 %v148, %v218
    %v235 = vadd.f32 %v149, %v219
    %v236 = vadd.f32 %v150, %v220
    %v237 = vadd.f32 %v151, %v221
    %v238 = vadd.f32 %v152, %v222
    %v239 = vadd.f32 %v153, %v223
    %v240 = vadd.f32 %v154, %v224
    %v241 = vadd.f32 %v155, %v225
    %v242 = vadd.f32 %v156, %v226
    %v243 = vadd.f32 %v157, %v227
    %v244 = vadd.f32 %v158, %v228
    %s245 = sld [smem:[#allocation6 + %s210]]
    %v246 = vstv %s245
    %v247 = vmul.f32 %v246, %v194
    %v248 = vmul.f32 %v246, %v195
    %v249 = vmul.f32 %v246, %v196
    %v250 = vmul.f32 %v246, %v197
    %v251 = vmul.f32 %v246, %v198
    %v252 = vmul.f32 %v246, %v199
    %v253 = vmul.f32 %v246, %v200
    %v254 = vmul.f32 %v246, %v201
    %v255 = vmul.f32 %v246, %v202
    %v256 = vmul.f32 %v246, %v203
    %v257 = vmul.f32 %v246, %v204
    %v258 = vmul.f32 %v246, %v205
    %v259 = vmul.f32 %v246, %v206
    %v260 = vmul.f32 %v246, %v207
    %v261 = vmul.f32 %v246, %v208
    %v262 = vmul.f32 %v246, %v209
    %v263 = vadd.f32 %v177, %v247
    %v264 = vadd.f32 %v178, %v248
    %v265 = vadd.f32 %v179, %v249
    %v266 = vadd.f32 %v180, %v250
    %v267 = vadd.f32 %v181, %v251
    %v268 = vadd.f32 %v182, %v252
    %v269 = vadd.f32 %v183, %v253
    %v270 = vadd.f32 %v184, %v254
    %v271 = vadd.f32 %v185, %v255
    %v272 = vadd.f32 %v186, %v256
    %v273 = vadd.f32 %v187, %v257
    %v274 = vadd.f32 %v188, %v258
    %v275 = vadd.f32 %v189, %v259
    %v276 = vadd.f32 %v190, %v260
    %v277 = vadd.f32 %v191, %v261
    %v278 = vadd.f32 %v192, %v262
    %s279 = scalar_lea.vmem [#allocation8], 384
    %v280 = vld [vmem:[%s279] sm:$0xff]
    %v281 = vld [vmem:[%s279 + $0x8] sm:$0xff]
    %v282 = vld [vmem:[%s279 + $0x10] sm:$0xff]
    %v283 = vld [vmem:[%s279 + $0x18] sm:$0xff]
    %v284 = vld [vmem:[%s279 + $0x20] sm:$0xff]
    %v285 = vld [vmem:[%s279 + $0x28] sm:$0xff]
    %v286 = vld [vmem:[%s279 + $0x30] sm:$0xff]
    %v287 = vld [vmem:[%s279 + $0x38] sm:$0xff]
    %v288 = vld [vmem:[%s279 + $0x40] sm:$0xff]
    %v289 = vld [vmem:[%s279 + $0x48] sm:$0xff]
    %v290 = vld [vmem:[%s279 + $0x50] sm:$0xff]
    %v291 = vld [vmem:[%s279 + $0x58] sm:$0xff]
    %v292 = vld [vmem:[%s279 + $0x60] sm:$0xff]
    %v293 = vld [vmem:[%s279 + $0x68] sm:$0xff]
    %v294 = vld [vmem:[%s279 + $0x70] sm:$0xff]
    %v295 = vld [vmem:[%s279 + $0x78] sm:$0xff]
    %s296 = sadd.s32 %s70, 3
    %s297 = sld [smem:[#allocation2 + %s296]]
    %v298 = vstv %s297
    %v299 = vmul.f32 %v298, %v280
    %v300 = vmul.f32 %v298, %v281
    %v301 = vmul.f32 %v298, %v282
    %v302 = vmul.f32 %v298, %v283
    %v303 = vmul.f32 %v298, %v284
    %v304 = vmul.f32 %v298, %v285
    %v305 = vmul.f32 %v298, %v286
    %v306 = vmul.f32 %v298, %v287
    %v307 = vmul.f32 %v298, %v288
    %v308 = vmul.f32 %v298, %v289
    %v309 = vmul.f32 %v298, %v290
    %v310 = vmul.f32 %v298, %v291
    %v311 = vmul.f32 %v298, %v292
    %v312 = vmul.f32 %v298, %v293
    %v313 = vmul.f32 %v298, %v294
    %v314 = vmul.f32 %v298, %v295
    %v315 = vadd.f32 %v229, %v299
    %v316 = vadd.f32 %v230, %v300
    %v317 = vadd.f32 %v231, %v301
    %v318 = vadd.f32 %v232, %v302
    %v319 = vadd.f32 %v233, %v303
    %v320 = vadd.f32 %v234, %v304
    %v321 = vadd.f32 %v235, %v305
    %v322 = vadd.f32 %v236, %v306
    %v323 = vadd.f32 %v237, %v307
    %v324 = vadd.f32 %v238, %v308
    %v325 = vadd.f32 %v239, %v309
    %v326 = vadd.f32 %v240, %v310
    %v327 = vadd.f32 %v241, %v311
    %v328 = vadd.f32 %v242, %v312
    %v329 = vadd.f32 %v243, %v313
    %v330 = vadd.f32 %v244, %v314
    %s331 = sld [smem:[#allocation6 + %s296]]
    %v332 = vstv %s331
    %v333 = vmul.f32 %v332, %v280
    %v334 = vmul.f32 %v332, %v281
    %v335 = vmul.f32 %v332, %v282
    %v336 = vmul.f32 %v332, %v283
    %v337 = vmul.f32 %v332, %v284
    %v338 = vmul.f32 %v332, %v285
    %v339 = vmul.f32 %v332, %v286
    %v340 = vmul.f32 %v332, %v287
    %v341 = vmul.f32 %v332, %v288
    %v342 = vmul.f32 %v332, %v289
    %v343 = vmul.f32 %v332, %v290
    %v344 = vmul.f32 %v332, %v291
    %v345 = vmul.f32 %v332, %v292
    %v346 = vmul.f32 %v332, %v293
    %v347 = vmul.f32 %v332, %v294
    %v348 = vmul.f32 %v332, %v295
    %v349 = vadd.f32 %v263, %v333
    %v350 = vadd.f32 %v264, %v334
    %v351 = vadd.f32 %v265, %v335
    %v352 = vadd.f32 %v266, %v336
    %v353 = vadd.f32 %v267, %v337
    %v354 = vadd.f32 %v268, %v338
    %v355 = vadd.f32 %v269, %v339
    %v356 = vadd.f32 %v270, %v340
    %v357 = vadd.f32 %v271, %v341
    %v358 = vadd.f32 %v272, %v342
    %v359 = vadd.f32 %v273, %v343
    %v360 = vadd.f32 %v274, %v344
    %v361 = vadd.f32 %v275, %v345
    %v362 = vadd.f32 %v276, %v346
    %v363 = vadd.f32 %v277, %v347
    %v364 = vadd.f32 %v278, %v348
    %v365 = vmul.f32 %v315, 1.442695
    %v366 = vpow.pop %v365
    %v367 = vmul.f32 %v316, 1.442695
    %v368 = vpow.pop %v367
    %v369 = vmul.f32 %v317, 1.442695
    %v370 = vpow.pop %v369
    %v371 = vmul.f32 %v318, 1.442695
    %v372 = vpow.pop %v371
    %v373 = vmul.f32 %v319, 1.442695
    %v374 = vpow.pop %v373
    %v375 = vmul.f32 %v320, 1.442695
    %v376 = vpow.pop %v375
    %v377 = vmul.f32 %v321, 1.442695
    %v378 = vpow.pop %v377
    %v379 = vmul.f32 %v322, 1.442695
    %v380 = vpow.pop %v379
    %v381 = vmul.f32 %v323, 1.442695
    %v382 = vpow.pop %v381
    %v383 = vmul.f32 %v324, 1.442695
    %v384 = vpow.pop %v383
    %v385 = vmul.f32 %v325, 1.442695
    %v386 = vpow.pop %v385
    %v387 = vmul.f32 %v326, 1.442695
    %v388 = vpow.pop %v387
    %v389 = vmul.f32 %v327, 1.442695
    %v390 = vpow.pop %v389
    %v391 = vmul.f32 %v328, 1.442695
    %v392 = vpow.pop %v391
    %v393 = vmul.f32 %v329, 1.442695
    %v394 = vpow.pop %v393
    %v395 = vmul.f32 %v330, 1.442695
    %v396 = vpow.pop %v395
    %v397 = vmul.f32 %v349, 1.442695
    %v398 = vpow.pop %v397
    %v399 = vmul.f32 %v350, 1.442695
    %v400 = vpow.pop %v399
    %v401 = vmul.f32 %v351, 1.442695
    %v402 = vpow.pop %v401
    %v403 = vmul.f32 %v352, 1.442695
    %v404 = vpow.pop %v403
    %v405 = vmul.f32 %v353, 1.442695
    %v406 = vpow.pop %v405
    %v407 = vmul.f32 %v354, 1.442695
    %v408 = vpow.pop %v407
    %v409 = vmul.f32 %v355, 1.442695
    %v410 = vpow.pop %v409
    %v411 = vmul.f32 %v356, 1.442695
    %v412 = vpow.pop %v411
    %v413 = vmul.f32 %v357, 1.442695
    %v414 = vpow.pop %v413
    %v415 = vmul.f32 %v358, 1.442695
    %v416 = vpow.pop %v415
    %v417 = vmul.f32 %v359, 1.442695
    %v418 = vpow.pop %v417
    %v419 = vmul.f32 %v360, 1.442695
    %v420 = vpow.pop %v419
    %v421 = vmul.f32 %v361, 1.442695
    %v422 = vpow.pop %v421
    %v423 = vmul.f32 %v362, 1.442695
    %v424 = vpow.pop %v423
    %v425 = vmul.f32 %v363, 1.442695
    %v426 = vpow.pop %v425
    %v427 = vmul.f32 %v364, 1.442695
    %v428 = vpow.pop %v427
    %v429 = vadd.f32 %v366, %v368
    %v430 = vadd.f32 %v429, %v370
    %v431 = vadd.f32 %v430, %v372
    %v432 = vadd.f32 %v431, %v374
    %v433 = vadd.f32 %v432, %v376
    %v434 = vadd.f32 %v433, %v378
    %v435 = vadd.f32 %v434, %v380
    %v436 = vadd.f32 %v435, %v382
    %v437 = vadd.f32 %v436, %v384
    %v438 = vadd.f32 %v437, %v386
    %v439 = vadd.f32 %v438, %v388
    %v440 = vadd.f32 %v439, %v390
    %v441 = vadd.f32 %v440, %v392
    %v442 = vadd.f32 %v441, %v394
    %v443 = vadd.f32 %v442, %v396
    %v444 = vrot.slane %v443, 4
    %v445 = vadd.f32 %v443, %v444
    %v446 = vrot.slane %v445, 2
    %v447 = vadd.f32 %v445, %v446
    %v448 = vrot.slane %v447, 1
    %v449 = vadd.f32 %v447, %v448
    %v450 = vadd.f32 %v449, 1e-06
    %v451 = vrcp.pop %v450
    %v452 = vadd.f32 %v398, %v400
    %v453 = vadd.f32 %v452, %v402
    %v454 = vadd.f32 %v453, %v404
    %v455 = vadd.f32 %v454, %v406
    %v456 = vadd.f32 %v455, %v408
    %v457 = vadd.f32 %v456, %v410
    %v458 = vadd.f32 %v457, %v412
    %v459 = vadd.f32 %v458, %v414
    %v460 = vadd.f32 %v459, %v416
    %v461 = vadd.f32 %v460, %v418
    %v462 = vadd.f32 %v461, %v420
    %v463 = vadd.f32 %v462, %v422
    %v464 = vadd.f32 %v463, %v424
    %v465 = vadd.f32 %v464, %v426
    %v466 = vadd.f32 %v465, %v428
    %v467 = vrot.slane %v466, 4
    %v468 = vadd.f32 %v466, %v467
    %v469 = vrot.slane %v468, 2
    %v470 = vadd.f32 %v468, %v469
    %v471 = vrot.slane %v470, 1
    %v472 = vadd.f32 %v470, %v471
    %v473 = vadd.f32 %v472, 1e-06
    %v474 = vrcp.pop %v473
    %v475 = vmul.f32 %v366, %v451
    %v476 = vmul.f32 %v368, %v451
    %v477 = vmul.f32 %v370, %v451
    %v478 = vmul.f32 %v372, %v451
    %v479 = vmul.f32 %v374, %v451
    %v480 = vmul.f32 %v376, %v451
    %v481 = vmul.f32 %v378, %v451
    %v482 = vmul.f32 %v380, %v451
    %v483 = vmul.f32 %v382, %v451
    %v484 = vmul.f32 %v384, %v451
    %v485 = vmul.f32 %v386, %v451
    %v486 = vmul.f32 %v388, %v451
    %v487 = vmul.f32 %v390, %v451
    %v488 = vmul.f32 %v392, %v451
    %v489 = vmul.f32 %v394, %v451
    %v490 = vmul.f32 %v396, %v451
    %v491 = vmul.f32 %v398, %v474
    %v492 = vmul.f32 %v400, %v474
    %v493 = vmul.f32 %v402, %v474
    %v494 = vmul.f32 %v404, %v474
    %v495 = vmul.f32 %v406, %v474
    %v496 = vmul.f32 %v408, %v474
    %v497 = vmul.f32 %v410, %v474
    %v498 = vmul.f32 %v412, %v474
    %v499 = vmul.f32 %v414, %v474
    %v500 = vmul.f32 %v416, %v474
    %v501 = vmul.f32 %v418, %v474
    %v502 = vmul.f32 %v420, %v474
    %v503 = vmul.f32 %v422, %v474
    %v504 = vmul.f32 %v424, %v474
    %v505 = vmul.f32 %v426, %v474
    %v506 = vmul.f32 %v428, %v474
    %507 = vst [vmem:[#allocation10] sm:$0xff] %v475
    %508 = vst [vmem:[#allocation10 + $0x8] sm:$0xff] %v476
    %509 = vst [vmem:[#allocation10 + $0x10] sm:$0xff] %v477
    %510 = vst [vmem:[#allocation10 + $0x18] sm:$0xff] %v478
    %511 = vst [vmem:[#allocation10 + $0x20] sm:$0xff] %v479
    %512 = vst [vmem:[#allocation10 + $0x28] sm:$0xff] %v480
    %513 = vst [vmem:[#allocation10 + $0x30] sm:$0xff] %v481
    %514 = vst [vmem:[#allocation10 + $0x38] sm:$0xff] %v482
    %515 = vst [vmem:[#allocation10 + $0x40] sm:$0xff] %v483
    %516 = vst [vmem:[#allocation10 + $0x48] sm:$0xff] %v484
    %517 = vst [vmem:[#allocation10 + $0x50] sm:$0xff] %v485
    %518 = vst [vmem:[#allocation10 + $0x58] sm:$0xff] %v486
    %519 = vst [vmem:[#allocation10 + $0x60] sm:$0xff] %v487
    %520 = vst [vmem:[#allocation10 + $0x68] sm:$0xff] %v488
    %521 = vst [vmem:[#allocation10 + $0x70] sm:$0xff] %v489
    %522 = vst [vmem:[#allocation10 + $0x78] sm:$0xff] %v490
    %523 = vmatprep.subr.mxu0 0.0
    %524 = vmatpush1.msra.mxu0 %v506
    %525 = vmatprep.subr.mxu0 0.0
    %526 = vmatpush1.msra.mxu0 %v505
    %527 = vmatprep.subr.mxu0 0.0
    %528 = vmatpush1.msra.mxu0 %v504
    %529 = vmatprep.subr.mxu0 0.0
    %530 = vmatpush1.msra.mxu0 %v503
    %531 = vmatprep.subr.mxu0 0.0
    %532 = vmatpush1.msra.mxu0 %v502
    %533 = vmatprep.subr.mxu0 0.0
    %534 = vmatpush1.msra.mxu0 %v501
    %535 = vmatprep.subr.mxu0 0.0
    %536 = vmatpush1.msra.mxu0 %v500
    %537 = vmatprep.subr.mxu0 0.0
    %538 = vmatpush1.msra.mxu0 %v499
    %539 = vmatprep.subr.mxu0 0.0
    %540 = vmatpush1.msra.mxu0 %v498
    %541 = vmatprep.subr.mxu0 0.0
    %542 = vmatpush1.msra.mxu0 %v497
    %543 = vmatprep.subr.mxu0 0.0
    %544 = vmatpush1.msra.mxu0 %v496
    %545 = vmatprep.subr.mxu0 0.0
    %546 = vmatpush1.msra.mxu0 %v495
    %547 = vmatprep.subr.mxu0 0.0
    %548 = vmatpush1.msra.mxu0 %v494
    %549 = vmatprep.subr.mxu0 0.0
    %550 = vmatpush1.msra.mxu0 %v493
    %551 = vmatprep.subr.mxu0 0.0
    %552 = vmatpush1.msra.mxu0 %v492
    %553 = vmatprep.subr.mxu0 0.0
    %554 = vmatpush1.msra.mxu0 %v491
    %555 = vmatprep.subr.mxu0 0.0
    %556 = vmatpush2.msra.mxu0 0.0
    %557 = vmatprep.subr.mxu0 0.0
    %558 = vmatpush2.msra.mxu0 0.0
    %559 = vmatprep.subr.mxu0 0.0
    %560 = vmatpush2.msra.mxu0 0.0
    %561 = vmatprep.subr.mxu0 0.0
    %562 = vmatpush2.msra.mxu0 0.0
    %563 = vmatprep.subr.mxu0 0.0
    %564 = vmatpush2.msra.mxu0 0.0
    %565 = vmatprep.subr.mxu0 0.0
    %566 = vmatpush2.msra.mxu0 0.0
    %567 = vmatprep.subr.mxu0 0.0
    %568 = vmatpush2.msra.mxu0 0.0
    %569 = vmatprep.subr.mxu0 0.0
    %570 = vmatpush2.msra.mxu0 0.0
    %571 = vmatprep.subr.mxu0 0.0
    %572 = vmatpush2.msra.mxu0 0.0
    %573 = vmatprep.subr.mxu0 0.0
    %574 = vmatpush2.msra.mxu0 0.0
    %575 = vmatprep.subr.mxu0 0.0
    %576 = vmatpush2.msra.mxu0 0.0
    %577 = vmatprep.subr.mxu0 0.0
    %578 = vmatpush2.msra.mxu0 0.0
    %579 = vmatprep.subr.mxu0 0.0
    %580 = vmatpush2.msra.mxu0 0.0
    %581 = vmatprep.subr.mxu0 0.0
    %582 = vmatpush2.msra.mxu0 0.0
    %583 = vmatprep.subr.mxu0 0.0
    %584 = vmatpush2.msra.mxu0 0.0
    %585 = vmatprep.subr.mxu0 0.0
    %586 = vmatpush2.msra.mxu0 0.0
    %587 = vmatprep.mubr.f32.mxu0 0.0
    %588 = vmatmul.mubr.f32.gmra.mxu0 %v475
    %v589 = vpop.f32.mrf.mxu0
    %v590 = vadd.f32 0.0, %v589
    %v591 = vpop.f32.mrf.mxu0
    %592 = vmatprep.mubr.f32.mxu0 0.0
    %593 = vmatmul.mubr.f32.gmra.mxu0 %v476
    %v594 = vpop.f32.mrf.mxu0
    %v595 = vadd.f32 0.0, %v594
    %v596 = vpop.f32.mrf.mxu0
    %597 = vmatprep.mubr.f32.mxu0 0.0
    %598 = vmatmul.mubr.f32.gmra.mxu0 %v477
    %v599 = vpop.f32.mrf.mxu0
    %v600 = vadd.f32 0.0, %v599
    %v601 = vpop.f32.mrf.mxu0
    %602 = vmatprep.mubr.f32.mxu0 0.0
    %603 = vmatmul.mubr.f32.gmra.mxu0 %v478
    %v604 = vpop.f32.mrf.mxu0
    %v605 = vadd.f32 0.0, %v604
    %v606 = vpop.f32.mrf.mxu0
    %607 = vmatprep.mubr.f32.mxu0 0.0
    %608 = vmatmul.mubr.f32.gmra.mxu0 %v479
    %v609 = vpop.f32.mrf.mxu0
    %v610 = vadd.f32 0.0, %v609
    %v611 = vpop.f32.mrf.mxu0
    %612 = vmatprep.mubr.f32.mxu0 0.0
    %613 = vmatmul.mubr.f32.gmra.mxu0 %v480
    %v614 = vpop.f32.mrf.mxu0
    %v615 = vadd.f32 0.0, %v614
    %v616 = vpop.f32.mrf.mxu0
    %617 = vmatprep.mubr.f32.mxu0 0.0
    %618 = vmatmul.mubr.f32.gmra.mxu0 %v481
    %v619 = vpop.f32.mrf.mxu0
    %v620 = vadd.f32 0.0, %v619
    %v621 = vpop.f32.mrf.mxu0
    %622 = vmatprep.mubr.f32.mxu0 0.0
    %623 = vmatmul.mubr.f32.gmra.mxu0 %v482
    %v624 = vpop.f32.mrf.mxu0
    %v625 = vadd.f32 0.0, %v624
    %v626 = vpop.f32.mrf.mxu0
    %627 = vmatprep.mubr.f32.mxu0 0.0
    %628 = vmatmul.mubr.f32.gmra.mxu0 %v483
    %v629 = vpop.f32.mrf.mxu0
    %v630 = vadd.f32 0.0, %v629
    %v631 = vpop.f32.mrf.mxu0
    %632 = vmatprep.mubr.f32.mxu0 0.0
    %633 = vmatmul.mubr.f32.gmra.mxu0 %v484
    %v634 = vpop.f32.mrf.mxu0
    %v635 = vadd.f32 0.0, %v634
    %v636 = vpop.f32.mrf.mxu0
    %637 = vmatprep.mubr.f32.mxu0 0.0
    %638 = vmatmul.mubr.f32.gmra.mxu0 %v485
    %v639 = vpop.f32.mrf.mxu0
    %v640 = vadd.f32 0.0, %v639
    %v641 = vpop.f32.mrf.mxu0
    %642 = vmatprep.mubr.f32.mxu0 0.0
    %643 = vmatmul.mubr.f32.gmra.mxu0 %v486
    %v644 = vpop.f32.mrf.mxu0
    %v645 = vadd.f32 0.0, %v644
    %v646 = vpop.f32.mrf.mxu0
    %647 = vmatprep.mubr.f32.mxu0 0.0
    %648 = vmatmul.mubr.f32.gmra.mxu0 %v487
    %v649 = vpop.f32.mrf.mxu0
    %v650 = vadd.f32 0.0, %v649
    %v651 = vpop.f32.mrf.mxu0
    %652 = vmatprep.mubr.f32.mxu0 0.0
    %653 = vmatmul.mubr.f32.gmra.mxu0 %v488
    %v654 = vpop.f32.mrf.mxu0
    %v655 = vadd.f32 0.0, %v654
    %v656 = vpop.f32.mrf.mxu0
    %657 = vmatprep.mubr.f32.mxu0 0.0
    %658 = vmatmul.mubr.f32.gmra.mxu0 %v489
    %v659 = vpop.f32.mrf.mxu0
    %v660 = vadd.f32 0.0, %v659
    %v661 = vpop.f32.mrf.mxu0
    %662 = vmatprep.mubr.f32.mxu0 0.0
    %663 = vmatmul.mubr.f32.gmra.mxu0 %v490
    %v664 = vpop.f32.mrf.mxu0
    %v665 = vadd.f32 0.0, %v664
    %v666 = vpop.f32.mrf.mxu0
    %667 = vdwg.mxu0
    %668 = vst [vmem:[#allocation9] sm:$0xff] %v590
    %669 = vst [vmem:[#allocation9 + $0x8] sm:$0xff] %v595
    %670 = vst [vmem:[#allocation9 + $0x10] sm:$0xff] %v600
    %671 = vst [vmem:[#allocation9 + $0x18] sm:$0xff] %v605
    %672 = vst [vmem:[#allocation9 + $0x20] sm:$0xff] %v610
    %673 = vst [vmem:[#allocation9 + $0x28] sm:$0xff] %v615
    %674 = vst [vmem:[#allocation9 + $0x30] sm:$0xff] %v620
    %675 = vst [vmem:[#allocation9 + $0x38] sm:$0xff] %v625
    %676 = vst [vmem:[#allocation9 + $0x40] sm:$0xff] %v630
    %677 = vst [vmem:[#allocation9 + $0x48] sm:$0xff] %v635
    %678 = vst [vmem:[#allocation9 + $0x50] sm:$0xff] %v640
    %679 = vst [vmem:[#allocation9 + $0x58] sm:$0xff] %v645
    %680 = vst [vmem:[#allocation9 + $0x60] sm:$0xff] %v650
    %681 = vst [vmem:[#allocation9 + $0x68] sm:$0xff] %v655
    %682 = vst [vmem:[#allocation9 + $0x70] sm:$0xff] %v660
    %683 = vst [vmem:[#allocation9 + $0x78] sm:$0xff] %v665
    %s684 = sadd.s32 %s53, 1
    %v685 = vld [vmem:[#allocation8] sm:$0xff]
    %v686 = vld [vmem:[#allocation8 + $0x8] sm:$0xff]
    %v687 = vld [vmem:[#allocation8 + $0x10] sm:$0xff]
    %v688 = vld [vmem:[#allocation8 + $0x18] sm:$0xff]
    %v689 = vld [vmem:[#allocation8 + $0x20] sm:$0xff]
    %v690 = vld [vmem:[#allocation8 + $0x28] sm:$0xff]
    %v691 = vld [vmem:[#allocation8 + $0x30] sm:$0xff]
    %v692 = vld [vmem:[#allocation8 + $0x38] sm:$0xff]
    %v693 = vld [vmem:[#allocation8 + $0x40] sm:$0xff]
    %v694 = vld [vmem:[#allocation8 + $0x48] sm:$0xff]
    %v695 = vld [vmem:[#allocation8 + $0x50] sm:$0xff]
    %v696 = vld [vmem:[#allocation8 + $0x58] sm:$0xff]
    %v697 = vld [vmem:[#allocation8 + $0x60] sm:$0xff]
    %v698 = vld [vmem:[#allocation8 + $0x68] sm:$0xff]
    %v699 = vld [vmem:[#allocation8 + $0x70] sm:$0xff]
    %v700 = vld [vmem:[#allocation8 + $0x78] sm:$0xff]
    %s701 = smul.u32 %s684, 128
    %s702 = sld [smem:[#allocation2 + %s701]]
    %v703 = vstv %s702
    %v704 = vmul.f32 %v703, %v685
    %v705 = vmul.f32 %v703, %v686
    %v706 = vmul.f32 %v703, %v687
    %v707 = vmul.f32 %v703, %v688
    %v708 = vmul.f32 %v703, %v689
    %v709 = vmul.f32 %v703, %v690
    %v710 = vmul.f32 %v703, %v691
    %v711 = vmul.f32 %v703, %v692
    %v712 = vmul.f32 %v703, %v693
    %v713 = vmul.f32 %v703, %v694
    %v714 = vmul.f32 %v703, %v695
    %v715 = vmul.f32 %v703, %v696
    %v716 = vmul.f32 %v703, %v697
    %v717 = vmul.f32 %v703, %v698
    %v718 = vmul.f32 %v703, %v699
    %v719 = vmul.f32 %v703, %v700
    %s720 = sld [smem:[#allocation6 + %s701]]
    %v721 = vstv %s720
    %v722 = vmul.f32 %v721, %v685
    %v723 = vmul.f32 %v721, %v686
    %v724 = vmul.f32 %v721, %v687
    %v725 = vmul.f32 %v721, %v688
    %v726 = vmul.f32 %v721, %v689
    %v727 = vmul.f32 %v721, %v690
    %v728 = vmul.f32 %v721, %v691
    %v729 = vmul.f32 %v721, %v692
    %v730 = vmul.f32 %v721, %v693
    %v731 = vmul.f32 %v721, %v694
    %v732 = vmul.f32 %v721, %v695
    %v733 = vmul.f32 %v721, %v696
    %v734 = vmul.f32 %v721, %v697
    %v735 = vmul.f32 %v721, %v698
    %v736 = vmul.f32 %v721, %v699
    %v737 = vmul.f32 %v721, %v700
    %v738 = vld [vmem:[%s107] sm:$0xff]
    %v739 = vld [vmem:[%s107 + $0x8] sm:$0xff]
    %v740 = vld [vmem:[%s107 + $0x10] sm:$0xff]
    %v741 = vld [vmem:[%s107 + $0x18] sm:$0xff]
    %v742 = vld [vmem:[%s107 + $0x20] sm:$0xff]
    %v743 = vld [vmem:[%s107 + $0x28] sm:$0xff]
    %v744 = vld [vmem:[%s107 + $0x30] sm:$0xff]
    %v745 = vld [vmem:[%s107 + $0x38] sm:$0xff]
    %v746 = vld [vmem:[%s107 + $0x40] sm:$0xff]
    %v747 = vld [vmem:[%s107 + $0x48] sm:$0xff]
    %v748 = vld [vmem:[%s107 + $0x50] sm:$0xff]
    %v749 = vld [vmem:[%s107 + $0x58] sm:$0xff]
    %v750 = vld [vmem:[%s107 + $0x60] sm:$0xff]
    %v751 = vld [vmem:[%s107 + $0x68] sm:$0xff]
    %v752 = vld [vmem:[%s107 + $0x70] sm:$0xff]
    %v753 = vld [vmem:[%s107 + $0x78] sm:$0xff]
    %s754 = sadd.s32 %s701, 1
    %s755 = sld [smem:[#allocation2 + %s754]]
    %v756 = vstv %s755
    %v757 = vmul.f32 %v756, %v738
    %v758 = vmul.f32 %v756, %v739
    %v759 = vmul.f32 %v756, %v740
    %v760 = vmul.f32 %v756, %v741
    %v761 = vmul.f32 %v756, %v742
    %v762 = vmul.f32 %v756, %v743
    %v763 = vmul.f32 %v756, %v744
    %v764 = vmul.f32 %v756, %v745
    %v765 = vmul.f32 %v756, %v746
    %v766 = vmul.f32 %v756, %v747
    %v767 = vmul.f32 %v756, %v748
    %v768 = vmul.f32 %v756, %v749
    %v769 = vmul.f32 %v756, %v750
    %v770 = vmul.f32 %v756, %v751
    %v771 = vmul.f32 %v756, %v752
    %v772 = vmul.f32 %v756, %v753
    %v773 = vadd.f32 %v704, %v757
    %v774 = vadd.f32 %v705, %v758
    %v775 = vadd.f32 %v706, %v759
    %v776 = vadd.f32 %v707, %v760
    %v777 = vadd.f32 %v708, %v761
    %v778 = vadd.f32 %v709, %v762
    %v779 = vadd.f32 %v710, %v763
    %v780 = vadd.f32 %v711, %v764
    %v781 = vadd.f32 %v712, %v765
    %v782 = vadd.f32 %v713, %v766
    %v783 = vadd.f32 %v714, %v767
    %v784 = vadd.f32 %v715, %v768
    %v785 = vadd.f32 %v716, %v769
    %v786 = vadd.f32 %v717, %v770
    %v787 = vadd.f32 %v718, %v771
    %v788 = vadd.f32 %v719, %v772
    %s789 = sld [smem:[#allocation6 + %s754]]
    %v790 = vstv %s789
    %v791 = vmul.f32 %v790, %v738
    %v792 = vmul.f32 %v790, %v739
    %v793 = vmul.f32 %v790, %v740
    %v794 = vmul.f32 %v790, %v741
    %v795 = vmul.f32 %v790, %v742
    %v796 = vmul.f32 %v790, %v743
    %v797 = vmul.f32 %v790, %v744
    %v798 = vmul.f32 %v790, %v745
    %v799 = vmul.f32 %v790, %v746
    %v800 = vmul.f32 %v790, %v747
    %v801 = vmul.f32 %v790, %v748
    %v802 = vmul.f32 %v790, %v749
    %v803 = vmul.f32 %v790, %v750
    %v804 = vmul.f32 %v790, %v751
    %v805 = vmul.f32 %v790, %v752
    %v806 = vmul.f32 %v790, %v753
    %v807 = vadd.f32 %v722, %v791
    %v808 = vadd.f32 %v723, %v792
    %v809 = vadd.f32 %v724, %v793
    %v810 = vadd.f32 %v725, %v794
    %v811 = vadd.f32 %v726, %v795
    %v812 = vadd.f32 %v727, %v796
    %v813 = vadd.f32 %v728, %v797
    %v814 = vadd.f32 %v729, %v798
    %v815 = vadd.f32 %v730, %v799
    %v816 = vadd.f32 %v731, %v800
    %v817 = vadd.f32 %v732, %v801
    %v818 = vadd.f32 %v733, %v802
    %v819 = vadd.f32 %v734, %v803
    %v820 = vadd.f32 %v735, %v804
    %v821 = vadd.f32 %v736, %v805
    %v822 = vadd.f32 %v737, %v806
    %v823 = vld [vmem:[%s193] sm:$0xff]
    %v824 = vld [vmem:[%s193 + $0x8] sm:$0xff]
    %v825 = vld [vmem:[%s193 + $0x10] sm:$0xff]
    %v826 = vld [vmem:[%s193 + $0x18] sm:$0xff]
    %v827 = vld [vmem:[%s193 + $0x20] sm:$0xff]
    %v828 = vld [vmem:[%s193 + $0x28] sm:$0xff]
    %v829 = vld [vmem:[%s193 + $0x30] sm:$0xff]
    %v830 = vld [vmem:[%s193 + $0x38] sm:$0xff]
    %v831 = vld [vmem:[%s193 + $0x40] sm:$0xff]
    %v832 = vld [vmem:[%s193 + $0x48] sm:$0xff]
    %v833 = vld [vmem:[%s193 + $0x50] sm:$0xff]
    %v834 = vld [vmem:[%s193 + $0x58] sm:$0xff]
    %v835 = vld [vmem:[%s193 + $0x60] sm:$0xff]
    %v836 = vld [vmem:[%s193 + $0x68] sm:$0xff]
    %v837 = vld [vmem:[%s193 + $0x70] sm:$0xff]
    %v838 = vld [vmem:[%s193 + $0x78] sm:$0xff]
    %s839 = sadd.s32 %s701, 2
    %s840 = sld [smem:[#allocation2 + %s839]]
    %v841 = vstv %s840
    %v842 = vmul.f32 %v841, %v823
    %v843 = vmul.f32 %v841, %v824
    %v844 = vmul.f32 %v841, %v825
    %v845 = vmul.f32 %v841, %v826
    %v846 = vmul.f32 %v841, %v827
    %v847 = vmul.f32 %v841, %v828
    %v848 = vmul.f32 %v841, %v829
    %v849 = vmul.f32 %v841, %v830
    %v850 = vmul.f32 %v841, %v831
    %v851 = vmul.f32 %v841, %v832
    %v852 = vmul.f32 %v841, %v833
    %v853 = vmul.f32 %v841, %v834
    %v854 = vmul.f32 %v841, %v835
    %v855 = vmul.f32 %v841, %v836
    %v856 = vmul.f32 %v841, %v837
    %v857 = vmul.f32 %v841, %v838
    %v858 = vadd.f32 %v773, %v842
    %v859 = vadd.f32 %v774, %v843
    %v860 = vadd.f32 %v775, %v844
    %v861 = vadd.f32 %v776, %v845
    %v862 = vadd.f32 %v777, %v846
    %v863 = vadd.f32 %v778, %v847
    %v864 = vadd.f32 %v779, %v848
    %v865 = vadd.f32 %v780, %v849
    %v866 = vadd.f32 %v781, %v850
    %v867 = vadd.f32 %v782, %v851
    %v868 = vadd.f32 %v783, %v852
    %v869 = vadd.f32 %v784, %v853
    %v870 = vadd.f32 %v785, %v854
    %v871 = vadd.f32 %v786, %v855
    %v872 = vadd.f32 %v787, %v856
    %v873 = vadd.f32 %v788, %v857
    %s874 = sld [smem:[#allocation6 + %s839]]
    %v875 = vstv %s874
    %v876 = vmul.f32 %v875, %v823
    %v877 = vmul.f32 %v875, %v824
    %v878 = vmul.f32 %v875, %v825
    %v879 = vmul.f32 %v875, %v826
    %v880 = vmul.f32 %v875, %v827
    %v881 = vmul.f32 %v875, %v828
    %v882 = vmul.f32 %v875, %v829
    %v883 = vmul.f32 %v875, %v830
    %v884 = vmul.f32 %v875, %v831
    %v885 = vmul.f32 %v875, %v832
    %v886 = vmul.f32 %v875, %v833
    %v887 = vmul.f32 %v875, %v834
    %v888 = vmul.f32 %v875, %v835
    %v889 = vmul.f32 %v875, %v836
    %v890 = vmul.f32 %v875, %v837
    %v891 = vmul.f32 %v875, %v838
    %v892 = vadd.f32 %v807, %v876
    %v893 = vadd.f32 %v808, %v877
    %v894 = vadd.f32 %v809, %v878
    %v895 = vadd.f32 %v810, %v879
    %v896 = vadd.f32 %v811, %v880
    %v897 = vadd.f32 %v812, %v881
    %v898 = vadd.f32 %v813, %v882
    %v899 = vadd.f32 %v814, %v883
    %v900 = vadd.f32 %v815, %v884
    %v901 = vadd.f32 %v816, %v885
    %v902 = vadd.f32 %v817, %v886
    %v903 = vadd.f32 %v818, %v887
    %v904 = vadd.f32 %v819, %v888
    %v905 = vadd.f32 %v820, %v889
    %v906 = vadd.f32 %v821, %v890
    %v907 = vadd.f32 %v822, %v891
    %v908 = vld [vmem:[%s279] sm:$0xff]
    %v909 = vld [vmem:[%s279 + $0x8] sm:$0xff]
    %v910 = vld [vmem:[%s279 + $0x10] sm:$0xff]
    %v911 = vld [vmem:[%s279 + $0x18] sm:$0xff]
    %v912 = vld [vmem:[%s279 + $0x20] sm:$0xff]
    %v913 = vld [vmem:[%s279 + $0x28] sm:$0xff]
    %v914 = vld [vmem:[%s279 + $0x30] sm:$0xff]
    %v915 = vld [vmem:[%s279 + $0x38] sm:$0xff]
    %v916 = vld [vmem:[%s279 + $0x40] sm:$0xff]
    %v917 = vld [vmem:[%s279 + $0x48] sm:$0xff]
    %v918 = vld [vmem:[%s279 + $0x50] sm:$0xff]
    %v919 = vld [vmem:[%s279 + $0x58] sm:$0xff]
    %v920 = vld [vmem:[%s279 + $0x60] sm:$0xff]
    %v921 = vld [vmem:[%s279 + $0x68] sm:$0xff]
    %v922 = vld [vmem:[%s279 + $0x70] sm:$0xff]
    %v923 = vld [vmem:[%s279 + $0x78] sm:$0xff]
    %s924 = sadd.s32 %s701, 3
    %s925 = sld [smem:[#allocation2 + %s924]]
    %v926 = vstv %s925
    %v927 = vmul.f32 %v926, %v908
    %v928 = vmul.f32 %v926, %v909
    %v929 = vmul.f32 %v926, %v910
    %v930 = vmul.f32 %v926, %v911
    %v931 = vmul.f32 %v926, %v912
    %v932 = vmul.f32 %v926, %v913
    %v933 = vmul.f32 %v926, %v914
    %v934 = vmul.f32 %v926, %v915
    %v935 = vmul.f32 %v926, %v916
    %v936 = vmul.f32 %v926, %v917
    %v937 = vmul.f32 %v926, %v918
    %v938 = vmul.f32 %v926, %v919
    %v939 = vmul.f32 %v926, %v920
    %v940 = vmul.f32 %v926, %v921
    %v941 = vmul.f32 %v926, %v922
    %v942 = vmul.f32 %v926, %v923
    %v943 = vadd.f32 %v858, %v927
    %v944 = vadd.f32 %v859, %v928
    %v945 = vadd.f32 %v860, %v929
    %v946 = vadd.f32 %v861, %v930
    %v947 = vadd.f32 %v862, %v931
    %v948 = vadd.f32 %v863, %v932
    %v949 = vadd.f32 %v864, %v933
    %v950 = vadd.f32 %v865, %v934
    %v951 = vadd.f32 %v866, %v935
    %v952 = vadd.f32 %v867, %v936
    %v953 = vadd.f32 %v868, %v937
    %v954 = vadd.f32 %v869, %v938
    %v955 = vadd.f32 %v870, %v939
    %v956 = vadd.f32 %v871, %v940
    %v957 = vadd.f32 %v872, %v941
    %v958 = vadd.f32 %v873, %v942
    %s959 = sld [smem:[#allocation6 + %s924]]
    %v960 = vstv %s959
    %v961 = vmul.f32 %v960, %v908
    %v962 = vmul.f32 %v960, %v909
    %v963 = vmul.f32 %v960, %v910
    %v964 = vmul.f32 %v960, %v911
    %v965 = vmul.f32 %v960, %v912
    %v966 = vmul.f32 %v960, %v913
    %v967 = vmul.f32 %v960, %v914
    %v968 = vmul.f32 %v960, %v915
    %v969 = vmul.f32 %v960, %v916
    %v970 = vmul.f32 %v960, %v917
    %v971 = vmul.f32 %v960, %v918
    %v972 = vmul.f32 %v960, %v919
    %v973 = vmul.f32 %v960, %v920
    %v974 = vmul.f32 %v960, %v921
    %v975 = vmul.f32 %v960, %v922
    %v976 = vmul.f32 %v960, %v923
    %v977 = vadd.f32 %v892, %v961
    %v978 = vadd.f32 %v893, %v962
    %v979 = vadd.f32 %v894, %v963
    %v980 = vadd.f32 %v895, %v964
    %v981 = vadd.f32 %v896, %v965
    %v982 = vadd.f32 %v897, %v966
    %v983 = vadd.f32 %v898, %v967
    %v984 = vadd.f32 %v899, %v968
    %v985 = vadd.f32 %v900, %v969
    %v986 = vadd.f32 %v901, %v970
    %v987 = vadd.f32 %v902, %v971
    %v988 = vadd.f32 %v903, %v972
    %v989 = vadd.f32 %v904, %v973
    %v990 = vadd.f32 %v905, %v974
    %v991 = vadd.f32 %v906, %v975
    %v992 = vadd.f32 %v907, %v976
    %v993 = vmul.f32 %v943, 1.442695
    %v994 = vpow.pop %v993
    %v995 = vmul.f32 %v944, 1.442695
    %v996 = vpow.pop %v995
    %v997 = vmul.f32 %v945, 1.442695
    %v998 = vpow.pop %v997
    %v999 = vmul.f32 %v946, 1.442695
    %v1000 = vpow.pop %v999
    %v1001 = vmul.f32 %v947, 1.442695
    %v1002 = vpow.pop %v1001
    %v1003 = vmul.f32 %v948, 1.442695
    %v1004 = vpow.pop %v1003
    %v1005 = vmul.f32 %v949, 1.442695
    %v1006 = vpow.pop %v1005
    %v1007 = vmul.f32 %v950, 1.442695
    %v1008 = vpow.pop %v1007
    %v1009 = vmul.f32 %v951, 1.442695
    %v1010 = vpow.pop %v1009
    %v1011 = vmul.f32 %v952, 1.442695
    %v1012 = vpow.pop %v1011
    %v1013 = vmul.f32 %v953, 1.442695
    %v1014 = vpow.pop %v1013
    %v1015 = vmul.f32 %v954, 1.442695
    %v1016 = vpow.pop %v1015
    %v1017 = vmul.f32 %v955, 1.442695
    %v1018 = vpow.pop %v1017
    %v1019 = vmul.f32 %v956, 1.442695
    %v1020 = vpow.pop %v1019
    %v1021 = vmul.f32 %v957, 1.442695
    %v1022 = vpow.pop %v1021
    %v1023 = vmul.f32 %v958, 1.442695
    %v1024 = vpow.pop %v1023
    %v1025 = vmul.f32 %v977, 1.442695
    %v1026 = vpow.pop %v1025
    %v1027 = vmul.f32 %v978, 1.442695
    %v1028 = vpow.pop %v1027
    %v1029 = vmul.f32 %v979, 1.442695
    %v1030 = vpow.pop %v1029
    %v1031 = vmul.f32 %v980, 1.442695
    %v1032 = vpow.pop %v1031
    %v1033 = vmul.f32 %v981, 1.442695
    %v1034 = vpow.pop %v1033
    %v1035 = vmul.f32 %v982, 1.442695
    %v1036 = vpow.pop %v1035
    %v1037 = vmul.f32 %v983, 1.442695
    %v1038 = vpow.pop %v1037
    %v1039 = vmul.f32 %v984, 1.442695
    %v1040 = vpow.pop %v1039
    %v1041 = vmul.f32 %v985, 1.442695
    %v1042 = vpow.pop %v1041
    %v1043 = vmul.f32 %v986, 1.442695
    %v1044 = vpow.pop %v1043
    %v1045 = vmul.f32 %v987, 1.442695
    %v1046 = vpow.pop %v1045
    %v1047 = vmul.f32 %v988, 1.442695
    %v1048 = vpow.pop %v1047
    %v1049 = vmul.f32 %v989, 1.442695
    %v1050 = vpow.pop %v1049
    %v1051 = vmul.f32 %v990, 1.442695
    %v1052 = vpow.pop %v1051
    %v1053 = vmul.f32 %v991, 1.442695
    %v1054 = vpow.pop %v1053
    %v1055 = vmul.f32 %v992, 1.442695
    %v1056 = vpow.pop %v1055
    %v1057 = vadd.f32 %v994, %v996
    %v1058 = vadd.f32 %v1057, %v998
    %v1059 = vadd.f32 %v1058, %v1000
    %v1060 = vadd.f32 %v1059, %v1002
    %v1061 = vadd.f32 %v1060, %v1004
    %v1062 = vadd.f32 %v1061, %v1006
    %v1063 = vadd.f32 %v1062, %v1008
    %v1064 = vadd.f32 %v1063, %v1010
    %v1065 = vadd.f32 %v1064, %v1012
    %v1066 = vadd.f32 %v1065, %v1014
    %v1067 = vadd.f32 %v1066, %v1016
    %v1068 = vadd.f32 %v1067, %v1018
    %v1069 = vadd.f32 %v1068, %v1020
    %v1070 = vadd.f32 %v1069, %v1022
    %v1071 = vadd.f32 %v1070, %v1024
    %v1072 = vrot.slane %v1071, 4
    %v1073 = vadd.f32 %v1071, %v1072
    %v1074 = vrot.slane %v1073, 2
    %v1075 = vadd.f32 %v1073, %v1074
    %v1076 = vrot.slane %v1075, 1
    %v1077 = vadd.f32 %v1075, %v1076
    %v1078 = vadd.f32 %v1077, 1e-06
    %v1079 = vrcp.pop %v1078
    %v1080 = vadd.f32 %v1026, %v1028
    %v1081 = vadd.f32 %v1080, %v1030
    %v1082 = vadd.f32 %v1081, %v1032
    %v1083 = vadd.f32 %v1082, %v1034
    %v1084 = vadd.f32 %v1083, %v1036
    %v1085 = vadd.f32 %v1084, %v1038
    %v1086 = vadd.f32 %v1085, %v1040
    %v1087 = vadd.f32 %v1086, %v1042
    %v1088 = vadd.f32 %v1087, %v1044
    %v1089 = vadd.f32 %v1088, %v1046
    %v1090 = vadd.f32 %v1089, %v1048
    %v1091 = vadd.f32 %v1090, %v1050
    %v1092 = vadd.f32 %v1091, %v1052
    %v1093 = vadd.f32 %v1092, %v1054
    %v1094 = vadd.f32 %v1093, %v1056
    %v1095 = vrot.slane %v1094, 4
    %v1096 = vadd.f32 %v1094, %v1095
    %v1097 = vrot.slane %v1096, 2
    %v1098 = vadd.f32 %v1096, %v1097
    %v1099 = vrot.slane %v1098, 1
    %v1100 = vadd.f32 %v1098, %v1099
    %v1101 = vadd.f32 %v1100, 1e-06
    %v1102 = vrcp.pop %v1101
    %v1103 = vmul.f32 %v994, %v1079
    %v1104 = vmul.f32 %v996, %v1079
    %v1105 = vmul.f32 %v998, %v1079
    %v1106 = vmul.f32 %v1000, %v1079
    %v1107 = vmul.f32 %v1002, %v1079
    %v1108 = vmul.f32 %v1004, %v1079
    %v1109 = vmul.f32 %v1006, %v1079
    %v1110 = vmul.f32 %v1008, %v1079
    %v1111 = vmul.f32 %v1010, %v1079
    %v1112 = vmul.f32 %v1012, %v1079
    %v1113 = vmul.f32 %v1014, %v1079
    %v1114 = vmul.f32 %v1016, %v1079
    %v1115 = vmul.f32 %v1018, %v1079
    %v1116 = vmul.f32 %v1020, %v1079
    %v1117 = vmul.f32 %v1022, %v1079
    %v1118 = vmul.f32 %v1024, %v1079
    %v1119 = vmul.f32 %v1026, %v1102
    %v1120 = vmul.f32 %v1028, %v1102
    %v1121 = vmul.f32 %v1030, %v1102
    %v1122 = vmul.f32 %v1032, %v1102
    %v1123 = vmul.f32 %v1034, %v1102
    %v1124 = vmul.f32 %v1036, %v1102
    %v1125 = vmul.f32 %v1038, %v1102
    %v1126 = vmul.f32 %v1040, %v1102
    %v1127 = vmul.f32 %v1042, %v1102
    %v1128 = vmul.f32 %v1044, %v1102
    %v1129 = vmul.f32 %v1046, %v1102
    %v1130 = vmul.f32 %v1048, %v1102
    %v1131 = vmul.f32 %v1050, %v1102
    %v1132 = vmul.f32 %v1052, %v1102
    %v1133 = vmul.f32 %v1054, %v1102
    %v1134 = vmul.f32 %v1056, %v1102
    %s1135 = scalar_lea.vmem [#allocation10], 128
    %1136 = vst [vmem:[%s1135] sm:$0xff] %v1103
    %1137 = vst [vmem:[%s1135 + $0x8] sm:$0xff] %v1104
    %1138 = vst [vmem:[%s1135 + $0x10] sm:$0xff] %v1105
    %1139 = vst [vmem:[%s1135 + $0x18] sm:$0xff] %v1106
    %1140 = vst [vmem:[%s1135 + $0x20] sm:$0xff] %v1107
    %1141 = vst [vmem:[%s1135 + $0x28] sm:$0xff] %v1108
    %1142 = vst [vmem:[%s1135 + $0x30] sm:$0xff] %v1109
    %1143 = vst [vmem:[%s1135 + $0x38] sm:$0xff] %v1110
    %1144 = vst [vmem:[%s1135 + $0x40] sm:$0xff] %v1111
    %1145 = vst [vmem:[%s1135 + $0x48] sm:$0xff] %v1112
    %1146 = vst [vmem:[%s1135 + $0x50] sm:$0xff] %v1113
    %1147 = vst [vmem:[%s1135 + $0x58] sm:$0xff] %v1114
    %1148 = vst [vmem:[%s1135 + $0x60] sm:$0xff] %v1115
    %1149 = vst [vmem:[%s1135 + $0x68] sm:$0xff] %v1116
    %1150 = vst [vmem:[%s1135 + $0x70] sm:$0xff] %v1117
    %1151 = vst [vmem:[%s1135 + $0x78] sm:$0xff] %v1118
    %1152 = vmatprep.subr.mxu0 0.0
    %1153 = vmatpush1.msra.mxu0 %v1134
    %1154 = vmatprep.subr.mxu0 0.0
    %1155 = vmatpush1.msra.mxu0 %v1133
    %1156 = vmatprep.subr.mxu0 0.0
    %1157 = vmatpush1.msra.mxu0 %v1132
    %1158 = vmatprep.subr.mxu0 0.0
    %1159 = vmatpush1.msra.mxu0 %v1131
    %1160 = vmatprep.subr.mxu0 0.0
    %1161 = vmatpush1.msra.mxu0 %v1130
    %1162 = vmatprep.subr.mxu0 0.0
    %1163 = vmatpush1.msra.mxu0 %v1129
    %1164 = vmatprep.subr.mxu0 0.0
    %1165 = vmatpush1.msra.mxu0 %v1128
    %1166 = vmatprep.subr.mxu0 0.0
    %1167 = vmatpush1.msra.mxu0 %v1127
    %1168 = vmatprep.subr.mxu0 0.0
    %1169 = vmatpush1.msra.mxu0 %v1126
    %1170 = vmatprep.subr.mxu0 0.0
    %1171 = vmatpush1.msra.mxu0 %v1125
    %1172 = vmatprep.subr.mxu0 0.0
    %1173 = vmatpush1.msra.mxu0 %v1124
    %1174 = vmatprep.subr.mxu0 0.0
    %1175 = vmatpush1.msra.mxu0 %v1123
    %1176 = vmatprep.subr.mxu0 0.0
    %1177 = vmatpush1.msra.mxu0 %v1122
    %1178 = vmatprep.subr.mxu0 0.0
    %1179 = vmatpush1.msra.mxu0 %v1121
    %1180 = vmatprep.subr.mxu0 0.0
    %1181 = vmatpush1.msra.mxu0 %v1120
    %1182 = vmatprep.subr.mxu0 0.0
    %1183 = vmatpush1.msra.mxu0 %v1119
    %1184 = vmatprep.subr.mxu0 0.0
    %1185 = vmatpush2.msra.mxu0 0.0
    %1186 = vmatprep.subr.mxu0 0.0
    %1187 = vmatpush2.msra.mxu0 0.0
    %1188 = vmatprep.subr.mxu0 0.0
    %1189 = vmatpush2.msra.mxu0 0.0
    %1190 = vmatprep.subr.mxu0 0.0
    %1191 = vmatpush2.msra.mxu0 0.0
    %1192 = vmatprep.subr.mxu0 0.0
    %1193 = vmatpush2.msra.mxu0 0.0
    %1194 = vmatprep.subr.mxu0 0.0
    %1195 = vmatpush2.msra.mxu0 0.0
    %1196 = vmatprep.subr.mxu0 0.0
    %1197 = vmatpush2.msra.mxu0 0.0
    %1198 = vmatprep.subr.mxu0 0.0
    %1199 = vmatpush2.msra.mxu0 0.0
    %1200 = vmatprep.subr.mxu0 0.0
    %1201 = vmatpush2.msra.mxu0 0.0
    %1202 = vmatprep.subr.mxu0 0.0
    %1203 = vmatpush2.msra.mxu0 0.0
    %1204 = vmatprep.subr.mxu0 0.0
    %1205 = vmatpush2.msra.mxu0 0.0
    %1206 = vmatprep.subr.mxu0 0.0
    %1207 = vmatpush2.msra.mxu0 0.0
    %1208 = vmatprep.subr.mxu0 0.0
    %1209 = vmatpush2.msra.mxu0 0.0
    %1210 = vmatprep.subr.mxu0 0.0
    %1211 = vmatpush2.msra.mxu0 0.0
    %1212 = vmatprep.subr.mxu0 0.0
    %1213 = vmatpush2.msra.mxu0 0.0
    %1214 = vmatprep.subr.mxu0 0.0
    %1215 = vmatpush2.msra.mxu0 0.0
    %1216 = vmatprep.mubr.f32.mxu0 0.0
    %1217 = vmatmul.mubr.f32.gmra.mxu0 %v1103
    %v1218 = vpop.f32.mrf.mxu0
    %v1219 = vadd.f32 0.0, %v1218
    %v1220 = vpop.f32.mrf.mxu0
    %1221 = vmatprep.mubr.f32.mxu0 0.0
    %1222 = vmatmul.mubr.f32.gmra.mxu0 %v1104
    %v1223 = vpop.f32.mrf.mxu0
    %v1224 = vadd.f32 0.0, %v1223
    %v1225 = vpop.f32.mrf.mxu0
    %1226 = vmatprep.mubr.f32.mxu0 0.0
    %1227 = vmatmul.mubr.f32.gmra.mxu0 %v1105
    %v1228 = vpop.f32.mrf.mxu0
    %v1229 = vadd.f32 0.0, %v1228
    %v1230 = vpop.f32.mrf.mxu0
    %1231 = vmatprep.mubr.f32.mxu0 0.0
    %1232 = vmatmul.mubr.f32.gmra.mxu0 %v1106
    %v1233 = vpop.f32.mrf.mxu0
    %v1234 = vadd.f32 0.0, %v1233
    %v1235 = vpop.f32.mrf.mxu0
    %1236 = vmatprep.mubr.f32.mxu0 0.0
    %1237 = vmatmul.mubr.f32.gmra.mxu0 %v1107
    %v1238 = vpop.f32.mrf.mxu0
    %v1239 = vadd.f32 0.0, %v1238
    %v1240 = vpop.f32.mrf.mxu0
    %1241 = vmatprep.mubr.f32.mxu0 0.0
    %1242 = vmatmul.mubr.f32.gmra.mxu0 %v1108
    %v1243 = vpop.f32.mrf.mxu0
    %v1244 = vadd.f32 0.0, %v1243
    %v1245 = vpop.f32.mrf.mxu0
    %1246 = vmatprep.mubr.f32.mxu0 0.0
    %1247 = vmatmul.mubr.f32.gmra.mxu0 %v1109
    %v1248 = vpop.f32.mrf.mxu0
    %v1249 = vadd.f32 0.0, %v1248
    %v1250 = vpop.f32.mrf.mxu0
    %1251 = vmatprep.mubr.f32.mxu0 0.0
    %1252 = vmatmul.mubr.f32.gmra.mxu0 %v1110
    %v1253 = vpop.f32.mrf.mxu0
    %v1254 = vadd.f32 0.0, %v1253
    %v1255 = vpop.f32.mrf.mxu0
    %1256 = vmatprep.mubr.f32.mxu0 0.0
    %1257 = vmatmul.mubr.f32.gmra.mxu0 %v1111
    %v1258 = vpop.f32.mrf.mxu0
    %v1259 = vadd.f32 0.0, %v1258
    %v1260 = vpop.f32.mrf.mxu0
    %1261 = vmatprep.mubr.f32.mxu0 0.0
    %1262 = vmatmul.mubr.f32.gmra.mxu0 %v1112
    %v1263 = vpop.f32.mrf.mxu0
    %v1264 = vadd.f32 0.0, %v1263
    %v1265 = vpop.f32.mrf.mxu0
    %1266 = vmatprep.mubr.f32.mxu0 0.0
    %1267 = vmatmul.mubr.f32.gmra.mxu0 %v1113
    %v1268 = vpop.f32.mrf.mxu0
    %v1269 = vadd.f32 0.0, %v1268
    %v1270 = vpop.f32.mrf.mxu0
    %1271 = vmatprep.mubr.f32.mxu0 0.0
    %1272 = vmatmul.mubr.f32.gmra.mxu0 %v1114
    %v1273 = vpop.f32.mrf.mxu0
    %v1274 = vadd.f32 0.0, %v1273
    %v1275 = vpop.f32.mrf.mxu0
    %1276 = vmatprep.mubr.f32.mxu0 0.0
    %1277 = vmatmul.mubr.f32.gmra.mxu0 %v1115
    %v1278 = vpop.f32.mrf.mxu0
    %v1279 = vadd.f32 0.0, %v1278
    %v1280 = vpop.f32.mrf.mxu0
    %1281 = vmatprep.mubr.f32.mxu0 0.0
    %1282 = vmatmul.mubr.f32.gmra.mxu0 %v1116
    %v1283 = vpop.f32.mrf.mxu0
    %v1284 = vadd.f32 0.0, %v1283
    %v1285 = vpop.f32.mrf.mxu0
    %1286 = vmatprep.mubr.f32.mxu0 0.0
    %1287 = vmatmul.mubr.f32.gmra.mxu0 %v1117
    %v1288 = vpop.f32.mrf.mxu0
    %v1289 = vadd.f32 0.0, %v1288
    %v1290 = vpop.f32.mrf.mxu0
    %1291 = vmatprep.mubr.f32.mxu0 0.0
    %1292 = vmatmul.mubr.f32.gmra.mxu0 %v1118
    %v1293 = vpop.f32.mrf.mxu0
    %v1294 = vadd.f32 0.0, %v1293
    %v1295 = vpop.f32.mrf.mxu0
    %1296 = vdwg.mxu0
    %s1297 = scalar_lea.vmem [#allocation9], 128
    %1298 = vst [vmem:[%s1297] sm:$0xff] %v1219
    %1299 = vst [vmem:[%s1297 + $0x8] sm:$0xff] %v1224
    %1300 = vst [vmem:[%s1297 + $0x10] sm:$0xff] %v1229
    %1301 = vst [vmem:[%s1297 + $0x18] sm:$0xff] %v1234
    %1302 = vst [vmem:[%s1297 + $0x20] sm:$0xff] %v1239
    %1303 = vst [vmem:[%s1297 + $0x28] sm:$0xff] %v1244
    %1304 = vst [vmem:[%s1297 + $0x30] sm:$0xff] %v1249
    %1305 = vst [vmem:[%s1297 + $0x38] sm:$0xff] %v1254
    %1306 = vst [vmem:[%s1297 + $0x40] sm:$0xff] %v1259
    %1307 = vst [vmem:[%s1297 + $0x48] sm:$0xff] %v1264
    %1308 = vst [vmem:[%s1297 + $0x50] sm:$0xff] %v1269
    %1309 = vst [vmem:[%s1297 + $0x58] sm:$0xff] %v1274
    %1310 = vst [vmem:[%s1297 + $0x60] sm:$0xff] %v1279
    %1311 = vst [vmem:[%s1297 + $0x68] sm:$0xff] %v1284
    %1312 = vst [vmem:[%s1297 + $0x70] sm:$0xff] %v1289
    %1313 = vst [vmem:[%s1297 + $0x78] sm:$0xff] %v1294
    %s1314 = sadd.s32 %s53, 2
    %v1315 = vld [vmem:[#allocation8] sm:$0xff]
    %v1316 = vld [vmem:[#allocation8 + $0x8] sm:$0xff]
    %v1317 = vld [vmem:[#allocation8 + $0x10] sm:$0xff]
    %v1318 = vld [vmem:[#allocation8 + $0x18] sm:$0xff]
    %v1319 = vld [vmem:[#allocation8 + $0x20] sm:$0xff]
    %v1320 = vld [vmem:[#allocation8 + $0x28] sm:$0xff]
    %v1321 = vld [vmem:[#allocation8 + $0x30] sm:$0xff]
    %v1322 = vld [vmem:[#allocation8 + $0x38] sm:$0xff]
    %v1323 = vld [vmem:[#allocation8 + $0x40] sm:$0xff]
    %v1324 = vld [vmem:[#allocation8 + $0x48] sm:$0xff]
    %v1325 = vld [vmem:[#allocation8 + $0x50] sm:$0xff]
    %v1326 = vld [vmem:[#allocation8 + $0x58] sm:$0xff]
    %v1327 = vld [vmem:[#allocation8 + $0x60] sm:$0xff]
    %v1328 = vld [vmem:[#allocation8 + $0x68] sm:$0xff]
    %v1329 = vld [vmem:[#allocation8 + $0x70] sm:$0xff]
    %v1330 = vld [vmem:[#allocation8 + $0x78] sm:$0xff]
    %s1331 = smul.u32 %s1314, 128
    %s1332 = sld [smem:[#allocation2 + %s1331]]
    %v1333 = vstv %s1332
    %v1334 = vmul.f32 %v1333, %v1315
    %v1335 = vmul.f32 %v1333, %v1316
    %v1336 = vmul.f32 %v1333, %v1317
    %v1337 = vmul.f32 %v1333, %v1318
    %v1338 = vmul.f32 %v1333, %v1319
    %v1339 = vmul.f32 %v1333, %v1320
    %v1340 = vmul.f32 %v1333, %v1321
    %v1341 = vmul.f32 %v1333, %v1322
    %v1342 = vmul.f32 %v1333, %v1323
    %v1343 = vmul.f32 %v1333, %v1324
    %v1344 = vmul.f32 %v1333, %v1325
    %v1345 = vmul.f32 %v1333, %v1326
    %v1346 = vmul.f32 %v1333, %v1327
    %v1347 = vmul.f32 %v1333, %v1328
    %v1348 = vmul.f32 %v1333, %v1329
    %v1349 = vmul.f32 %v1333, %v1330
    %s1350 = sld [smem:[#allocation6 + %s1331]]
    %v1351 = vstv %s1350
    %v1352 = vmul.f32 %v1351, %v1315
    %v1353 = vmul.f32 %v1351, %v1316
    %v1354 = vmul.f32 %v1351, %v1317
    %v1355 = vmul.f32 %v1351, %v1318
    %v1356 = vmul.f32 %v1351, %v1319
    %v1357 = vmul.f32 %v1351, %v1320
    %v1358 = vmul.f32 %v1351, %v1321
    %v1359 = vmul.f32 %v1351, %v1322
    %v1360 = vmul.f32 %v1351, %v1323
    %v1361 = vmul.f32 %v1351, %v1324
    %v1362 = vmul.f32 %v1351, %v1325
    %v1363 = vmul.f32 %v1351, %v1326
    %v1364 = vmul.f32 %v1351, %v1327
    %v1365 = vmul.f32 %v1351, %v1328
    %v1366 = vmul.f32 %v1351, %v1329
    %v1367 = vmul.f32 %v1351, %v1330
    %v1368 = vld [vmem:[%s107] sm:$0xff]
    %v1369 = vld [vmem:[%s107 + $0x8] sm:$0xff]
    %v1370 = vld [vmem:[%s107 + $0x10] sm:$0xff]
    %v1371 = vld [vmem:[%s107 + $0x18] sm:$0xff]
    %v1372 = vld [vmem:[%s107 + $0x20] sm:$0xff]
    %v1373 = vld [vmem:[%s107 + $0x28] sm:$0xff]
    %v1374 = vld [vmem:[%s107 + $0x30] sm:$0xff]
    %v1375 = vld [vmem:[%s107 + $0x38] sm:$0xff]
    %v1376 = vld [vmem:[%s107 + $0x40] sm:$0xff]
    %v1377 = vld [vmem:[%s107 + $0x48] sm:$0xff]
    %v1378 = vld [vmem:[%s107 + $0x50] sm:$0xff]
    %v1379 = vld [vmem:[%s107 + $0x58] sm:$0xff]
    %v1380 = vld [vmem:[%s107 + $0x60] sm:$0xff]
    %v1381 = vld [vmem:[%s107 + $0x68] sm:$0xff]
    %v1382 = vld [vmem:[%s107 + $0x70] sm:$0xff]
    %v1383 = vld [vmem:[%s107 + $0x78] sm:$0xff]
    %s1384 = sadd.s32 %s1331, 1
    %s1385 = sld [smem:[#allocation2 + %s1384]]
    %v1386 = vstv %s1385
    %v1387 = vmul.f32 %v1386, %v1368
    %v1388 = vmul.f32 %v1386, %v1369
    %v1389 = vmul.f32 %v1386, %v1370
    %v1390 = vmul.f32 %v1386, %v1371
    %v1391 = vmul.f32 %v1386, %v1372
    %v1392 = vmul.f32 %v1386, %v1373
    %v1393 = vmul.f32 %v1386, %v1374
    %v1394 = vmul.f32 %v1386, %v1375
    %v1395 = vmul.f32 %v1386, %v1376
    %v1396 = vmul.f32 %v1386, %v1377
    %v1397 = vmul.f32 %v1386, %v1378
    %v1398 = vmul.f32 %v1386, %v1379
    %v1399 = vmul.f32 %v1386, %v1380
    %v1400 = vmul.f32 %v1386, %v1381
    %v1401 = vmul.f32 %v1386, %v1382
    %v1402 = vmul.f32 %v1386, %v1383
    %v1403 = vadd.f32 %v1334, %v1387
    %v1404 = vadd.f32 %v1335, %v1388
    %v1405 = vadd.f32 %v1336, %v1389
    %v1406 = vadd.f32 %v1337, %v1390
    %v1407 = vadd.f32 %v1338, %v1391
    %v1408 = vadd.f32 %v1339, %v1392
    %v1409 = vadd.f32 %v1340, %v1393
    %v1410 = vadd.f32 %v1341, %v1394
    %v1411 = vadd.f32 %v1342, %v1395
    %v1412 = vadd.f32 %v1343, %v1396
    %v1413 = vadd.f32 %v1344, %v1397
    %v1414 = vadd.f32 %v1345, %v1398
    %v1415 = vadd.f32 %v1346, %v1399
    %v1416 = vadd.f32 %v1347, %v1400
    %v1417 = vadd.f32 %v1348, %v1401
    %v1418 = vadd.f32 %v1349, %v1402
    %s1419 = sld [smem:[#allocation6 + %s1384]]
    %v1420 = vstv %s1419
    %v1421 = vmul.f32 %v1420, %v1368
    %v1422 = vmul.f32 %v1420, %v1369
    %v1423 = vmul.f32 %v1420, %v1370
    %v1424 = vmul.f32 %v1420, %v1371
    %v1425 = vmul.f32 %v1420, %v1372
    %v1426 = vmul.f32 %v1420, %v1373
    %v1427 = vmul.f32 %v1420, %v1374
    %v1428 = vmul.f32 %v1420, %v1375
    %v1429 = vmul.f32 %v1420, %v1376
    %v1430 = vmul.f32 %v1420, %v1377
    %v1431 = vmul.f32 %v1420, %v1378
    %v1432 = vmul.f32 %v1420, %v1379
    %v1433 = vmul.f32 %v1420, %v1380
    %v1434 = vmul.f32 %v1420, %v1381
    %v1435 = vmul.f32 %v1420, %v1382
    %v1436 = vmul.f32 %v1420, %v1383
    %v1437 = vadd.f32 %v1352, %v1421
    %v1438 = vadd.f32 %v1353, %v1422
    %v1439 = vadd.f32 %v1354, %v1423
    %v1440 = vadd.f32 %v1355, %v1424
    %v1441 = vadd.f32 %v1356, %v1425
    %v1442 = vadd.f32 %v1357, %v1426
    %v1443 = vadd.f32 %v1358, %v1427
    %v1444 = vadd.f32 %v1359, %v1428
    %v1445 = vadd.f32 %v1360, %v1429
    %v1446 = vadd.f32 %v1361, %v1430
    %v1447 = vadd.f32 %v1362, %v1431
    %v1448 = vadd.f32 %v1363, %v1432
    %v1449 = vadd.f32 %v1364, %v1433
    %v1450 = vadd.f32 %v1365, %v1434
    %v1451 = vadd.f32 %v1366, %v1435
    %v1452 = vadd.f32 %v1367, %v1436
    %v1453 = vld [vmem:[%s193] sm:$0xff]
    %v1454 = vld [vmem:[%s193 + $0x8] sm:$0xff]
    %v1455 = vld [vmem:[%s193 + $0x10] sm:$0xff]
    %v1456 = vld [vmem:[%s193 + $0x18] sm:$0xff]
    %v1457 = vld [vmem:[%s193 + $0x20] sm:$0xff]
    %v1458 = vld [vmem:[%s193 + $0x28] sm:$0xff]
    %v1459 = vld [vmem:[%s193 + $0x30] sm:$0xff]
    %v1460 = vld [vmem:[%s193 + $0x38] sm:$0xff]
    %v1461 = vld [vmem:[%s193 + $0x40] sm:$0xff]
    %v1462 = vld [vmem:[%s193 + $0x48] sm:$0xff]
    %v1463 = vld [vmem:[%s193 + $0x50] sm:$0xff]
    %v1464 = vld [vmem:[%s193 + $0x58] sm:$0xff]
    %v1465 = vld [vmem:[%s193 + $0x60] sm:$0xff]
    %v1466 = vld [vmem:[%s193 + $0x68] sm:$0xff]
    %v1467 = vld [vmem:[%s193 + $0x70] sm:$0xff]
    %v1468 = vld [vmem:[%s193 + $0x78] sm:$0xff]
    %s1469 = sadd.s32 %s1331, 2
    %s1470 = sld [smem:[#allocation2 + %s1469]]
    %v1471 = vstv %s1470
    %v1472 = vmul.f32 %v1471, %v1453
    %v1473 = vmul.f32 %v1471, %v1454
    %v1474 = vmul.f32 %v1471, %v1455
    %v1475 = vmul.f32 %v1471, %v1456
    %v1476 = vmul.f32 %v1471, %v1457
    %v1477 = vmul.f32 %v1471, %v1458
    %v1478 = vmul.f32 %v1471, %v1459
    %v1479 = vmul.f32 %v1471, %v1460
    %v1480 = vmul.f32 %v1471, %v1461
    %v1481 = vmul.f32 %v1471, %v1462
    %v1482 = vmul.f32 %v1471, %v1463
    %v1483 = vmul.f32 %v1471, %v1464
    %v1484 = vmul.f32 %v1471, %v1465
    %v1485 = vmul.f32 %v1471, %v1466
    %v1486 = vmul.f32 %v1471, %v1467
    %v1487 = vmul.f32 %v1471, %v1468
    %v1488 = vadd.f32 %v1403, %v1472
    %v1489 = vadd.f32 %v1404, %v1473
    %v1490 = vadd.f32 %v1405, %v1474
    %v1491 = vadd.f32 %v1406, %v1475
    %v1492 = vadd.f32 %v1407, %v1476
    %v1493 = vadd.f32 %v1408, %v1477
    %v1494 = vadd.f32 %v1409, %v1478
    %v1495 = vadd.f32 %v1410, %v1479
    %v1496 = vadd.f32 %v1411, %v1480
    %v1497 = vadd.f32 %v1412, %v1481
    %v1498 = vadd.f32 %v1413, %v1482
    %v1499 = vadd.f32 %v1414, %v1483
    %v1500 = vadd.f32 %v1415, %v1484
    %v1501 = vadd.f32 %v1416, %v1485
    %v1502 = vadd.f32 %v1417, %v1486
    %v1503 = vadd.f32 %v1418, %v1487
    %s1504 = sld [smem:[#allocation6 + %s1469]]
    %v1505 = vstv %s1504
    %v1506 = vmul.f32 %v1505, %v1453
    %v1507 = vmul.f32 %v1505, %v1454
    %v1508 = vmul.f32 %v1505, %v1455
    %v1509 = vmul.f32 %v1505, %v1456
    %v1510 = vmul.f32 %v1505, %v1457
    %v1511 = vmul.f32 %v1505, %v1458
    %v1512 = vmul.f32 %v1505, %v1459
    %v1513 = vmul.f32 %v1505, %v1460
    %v1514 = vmul.f32 %v1505, %v1461
    %v1515 = vmul.f32 %v1505, %v1462
    %v1516 = vmul.f32 %v1505, %v1463
    %v1517 = vmul.f32 %v1505, %v1464
    %v1518 = vmul.f32 %v1505, %v1465
    %v1519 = vmul.f32 %v1505, %v1466
    %v1520 = vmul.f32 %v1505, %v1467
    %v1521 = vmul.f32 %v1505, %v1468
    %v1522 = vadd.f32 %v1437, %v1506
    %v1523 = vadd.f32 %v1438, %v1507
    %v1524 = vadd.f32 %v1439, %v1508
    %v1525 = vadd.f32 %v1440, %v1509
    %v1526 = vadd.f32 %v1441, %v1510
    %v1527 = vadd.f32 %v1442, %v1511
    %v1528 = vadd.f32 %v1443, %v1512
    %v1529 = vadd.f32 %v1444, %v1513
    %v1530 = vadd.f32 %v1445, %v1514
    %v1531 = vadd.f32 %v1446, %v1515
    %v1532 = vadd.f32 %v1447, %v1516
    %v1533 = vadd.f32 %v1448, %v1517
    %v1534 = vadd.f32 %v1449, %v1518
    %v1535 = vadd.f32 %v1450, %v1519
    %v1536 = vadd.f32 %v1451, %v1520
    %v1537 = vadd.f32 %v1452, %v1521
    %v1538 = vld [vmem:[%s279] sm:$0xff]
    %v1539 = vld [vmem:[%s279 + $0x8] sm:$0xff]
    %v1540 = vld [vmem:[%s279 + $0x10] sm:$0xff]
    %v1541 = vld [vmem:[%s279 + $0x18] sm:$0xff]
    %v1542 = vld [vmem:[%s279 + $0x20] sm:$0xff]
    %v1543 = vld [vmem:[%s279 + $0x28] sm:$0xff]
    %v1544 = vld [vmem:[%s279 + $0x30] sm:$0xff]
    %v1545 = vld [vmem:[%s279 + $0x38] sm:$0xff]
    %v1546 = vld [vmem:[%s279 + $0x40] sm:$0xff]
    %v1547 = vld [vmem:[%s279 + $0x48] sm:$0xff]
    %v1548 = vld [vmem:[%s279 + $0x50] sm:$0xff]
    %v1549 = vld [vmem:[%s279 + $0x58] sm:$0xff]
    %v1550 = vld [vmem:[%s279 + $0x60] sm:$0xff]
    %v1551 = vld [vmem:[%s279 + $0x68] sm:$0xff]
    %v1552 = vld [vmem:[%s279 + $0x70] sm:$0xff]
    %v1553 = vld [vmem:[%s279 + $0x78] sm:$0xff]
    %s1554 = sadd.s32 %s1331, 3
    %s1555 = sld [smem:[#allocation2 + %s1554]]
    %v1556 = vstv %s1555
    %v1557 = vmul.f32 %v1556, %v1538
    %v1558 = vmul.f32 %v1556, %v1539
    %v1559 = vmul.f32 %v1556, %v1540
    %v1560 = vmul.f32 %v1556, %v1541
    %v1561 = vmul.f32 %v1556, %v1542
    %v1562 = vmul.f32 %v1556, %v1543
    %v1563 = vmul.f32 %v1556, %v1544
    %v1564 = vmul.f32 %v1556, %v1545
    %v1565 = vmul.f32 %v1556, %v1546
    %v1566 = vmul.f32 %v1556, %v1547
    %v1567 = vmul.f32 %v1556, %v1548
    %v1568 = vmul.f32 %v1556, %v1549
    %v1569 = vmul.f32 %v1556, %v1550
    %v1570 = vmul.f32 %v1556, %v1551
    %v1571 = vmul.f32 %v1556, %v1552
    %v1572 = vmul.f32 %v1556, %v1553
    %v1573 = vadd.f32 %v1488, %v1557
    %v1574 = vadd.f32 %v1489, %v1558
    %v1575 = vadd.f32 %v1490, %v1559
    %v1576 = vadd.f32 %v1491, %v1560
    %v1577 = vadd.f32 %v1492, %v1561
    %v1578 = vadd.f32 %v1493, %v1562
    %v1579 = vadd.f32 %v1494, %v1563
    %v1580 = vadd.f32 %v1495, %v1564
    %v1581 = vadd.f32 %v1496, %v1565
    %v1582 = vadd.f32 %v1497, %v1566
    %v1583 = vadd.f32 %v1498, %v1567
    %v1584 = vadd.f32 %v1499, %v1568
    %v1585 = vadd.f32 %v1500, %v1569
    %v1586 = vadd.f32 %v1501, %v1570
    %v1587 = vadd.f32 %v1502, %v1571
    %v1588 = vadd.f32 %v1503, %v1572
    %s1589 = sld [smem:[#allocation6 + %s1554]]
    %v1590 = vstv %s1589
    %v1591 = vmul.f32 %v1590, %v1538
    %v1592 = vmul.f32 %v1590, %v1539
    %v1593 = vmul.f32 %v1590, %v1540
    %v1594 = vmul.f32 %v1590, %v1541
    %v1595 = vmul.f32 %v1590, %v1542
    %v1596 = vmul.f32 %v1590, %v1543
    %v1597 = vmul.f32 %v1590, %v1544
    %v1598 = vmul.f32 %v1590, %v1545
    %v1599 = vmul.f32 %v1590, %v1546
    %v1600 = vmul.f32 %v1590, %v1547
    %v1601 = vmul.f32 %v1590, %v1548
    %v1602 = vmul.f32 %v1590, %v1549
    %v1603 = vmul.f32 %v1590, %v1550
    %v1604 = vmul.f32 %v1590, %v1551
    %v1605 = vmul.f32 %v1590, %v1552
    %v1606 = vmul.f32 %v1590, %v1553
    %v1607 = vadd.f32 %v1522, %v1591
    %v1608 = vadd.f32 %v1523, %v1592
    %v1609 = vadd.f32 %v1524, %v1593
    %v1610 = vadd.f32 %v1525, %v1594
    %v1611 = vadd.f32 %v1526, %v1595
    %v1612 = vadd.f32 %v1527, %v1596
    %v1613 = vadd.f32 %v1528, %v1597
    %v1614 = vadd.f32 %v1529, %v1598
    %v1615 = vadd.f32 %v1530, %v1599
    %v1616 = vadd.f32 %v1531, %v1600
    %v1617 = vadd.f32 %v1532, %v1601
    %v1618 = vadd.f32 %v1533, %v1602
    %v1619 = vadd.f32 %v1534, %v1603
    %v1620 = vadd.f32 %v1535, %v1604
    %v1621 = vadd.f32 %v1536, %v1605
    %v1622 = vadd.f32 %v1537, %v1606
    %v1623 = vmul.f32 %v1573, 1.442695
    %v1624 = vpow.pop %v1623
    %v1625 = vmul.f32 %v1574, 1.442695
    %v1626 = vpow.pop %v1625
    %v1627 = vmul.f32 %v1575, 1.442695
    %v1628 = vpow.pop %v1627
    %v1629 = vmul.f32 %v1576, 1.442695
    %v1630 = vpow.pop %v1629
    %v1631 = vmul.f32 %v1577, 1.442695
    %v1632 = vpow.pop %v1631
    %v1633 = vmul.f32 %v1578, 1.442695
    %v1634 = vpow.pop %v1633
    %v1635 = vmul.f32 %v1579, 1.442695
    %v1636 = vpow.pop %v1635
    %v1637 = vmul.f32 %v1580, 1.442695
    %v1638 = vpow.pop %v1637
    %v1639 = vmul.f32 %v1581, 1.442695
    %v1640 = vpow.pop %v1639
    %v1641 = vmul.f32 %v1582, 1.442695
    %v1642 = vpow.pop %v1641
    %v1643 = vmul.f32 %v1583, 1.442695
    %v1644 = vpow.pop %v1643
    %v1645 = vmul.f32 %v1584, 1.442695
    %v1646 = vpow.pop %v1645
    %v1647 = vmul.f32 %v1585, 1.442695
    %v1648 = vpow.pop %v1647
    %v1649 = vmul.f32 %v1586, 1.442695
    %v1650 = vpow.pop %v1649
    %v1651 = vmul.f32 %v1587, 1.442695
    %v1652 = vpow.pop %v1651
    %v1653 = vmul.f32 %v1588, 1.442695
    %v1654 = vpow.pop %v1653
    %v1655 = vmul.f32 %v1607, 1.442695
    %v1656 = vpow.pop %v1655
    %v1657 = vmul.f32 %v1608, 1.442695
    %v1658 = vpow.pop %v1657
    %v1659 = vmul.f32 %v1609, 1.442695
    %v1660 = vpow.pop %v1659
    %v1661 = vmul.f32 %v1610, 1.442695
    %v1662 = vpow.pop %v1661
    %v1663 = vmul.f32 %v1611, 1.442695
    %v1664 = vpow.pop %v1663
    %v1665 = vmul.f32 %v1612, 1.442695
    %v1666 = vpow.pop %v1665
    %v1667 = vmul.f32 %v1613, 1.442695
    %v1668 = vpow.pop %v1667
    %v1669 = vmul.f32 %v1614, 1.442695
    %v1670 = vpow.pop %v1669
    %v1671 = vmul.f32 %v1615, 1.442695
    %v1672 = vpow.pop %v1671
    %v1673 = vmul.f32 %v1616, 1.442695
    %v1674 = vpow.pop %v1673
    %v1675 = vmul.f32 %v1617, 1.442695
    %v1676 = vpow.pop %v1675
    %v1677 = vmul.f32 %v1618, 1.442695
    %v1678 = vpow.pop %v1677
    %v1679 = vmul.f32 %v1619, 1.442695
    %v1680 = vpow.pop %v1679
    %v1681 = vmul.f32 %v1620, 1.442695
    %v1682 = vpow.pop %v1681
    %v1683 = vmul.f32 %v1621, 1.442695
    %v1684 = vpow.pop %v1683
    %v1685 = vmul.f32 %v1622, 1.442695
    %v1686 = vpow.pop %v1685
    %v1687 = vadd.f32 %v1624, %v1626
    %v1688 = vadd.f32 %v1687, %v1628
    %v1689 = vadd.f32 %v1688, %v1630
    %v1690 = vadd.f32 %v1689, %v1632
    %v1691 = vadd.f32 %v1690, %v1634
    %v1692 = vadd.f32 %v1691, %v1636
    %v1693 = vadd.f32 %v1692, %v1638
    %v1694 = vadd.f32 %v1693, %v1640
    %v1695 = vadd.f32 %v1694, %v1642
    %v1696 = vadd.f32 %v1695, %v1644
    %v1697 = vadd.f32 %v1696, %v1646
    %v1698 = vadd.f32 %v1697, %v1648
    %v1699 = vadd.f32 %v1698, %v1650
    %v1700 = vadd.f32 %v1699, %v1652
    %v1701 = vadd.f32 %v1700, %v1654
    %v1702 = vrot.slane %v1701, 4
    %v1703 = vadd.f32 %v1701, %v1702
    %v1704 = vrot.slane %v1703, 2
    %v1705 = vadd.f32 %v1703, %v1704
    %v1706 = vrot.slane %v1705, 1
    %v1707 = vadd.f32 %v1705, %v1706
    %v1708 = vadd.f32 %v1707, 1e-06
    %v1709 = vrcp.pop %v1708
    %v1710 = vadd.f32 %v1656, %v1658
    %v1711 = vadd.f32 %v1710, %v1660
    %v1712 = vadd.f32 %v1711, %v1662
    %v1713 = vadd.f32 %v1712, %v1664
    %v1714 = vadd.f32 %v1713, %v1666
    %v1715 = vadd.f32 %v1714, %v1668
    %v1716 = vadd.f32 %v1715, %v1670
    %v1717 = vadd.f32 %v1716, %v1672
    %v1718 = vadd.f32 %v1717, %v1674
    %v1719 = vadd.f32 %v1718, %v1676
    %v1720 = vadd.f32 %v1719, %v1678
    %v1721 = vadd.f32 %v1720, %v1680
    %v1722 = vadd.f32 %v1721, %v1682
    %v1723 = vadd.f32 %v1722, %v1684
    %v1724 = vadd.f32 %v1723, %v1686
    %v1725 = vrot.slane %v1724, 4
    %v1726 = vadd.f32 %v1724, %v1725
    %v1727 = vrot.slane %v1726, 2
    %v1728 = vadd.f32 %v1726, %v1727
    %v1729 = vrot.slane %v1728, 1
    %v1730 = vadd.f32 %v1728, %v1729
    %v1731 = vadd.f32 %v1730, 1e-06
    %v1732 = vrcp.pop %v1731
    %v1733 = vmul.f32 %v1624, %v1709
    %v1734 = vmul.f32 %v1626, %v1709
    %v1735 = vmul.f32 %v1628, %v1709
    %v1736 = vmul.f32 %v1630, %v1709
    %v1737 = vmul.f32 %v1632, %v1709
    %v1738 = vmul.f32 %v1634, %v1709
    %v1739 = vmul.f32 %v1636, %v1709
    %v1740 = vmul.f32 %v1638, %v1709
    %v1741 = vmul.f32 %v1640, %v1709
    %v1742 = vmul.f32 %v1642, %v1709
    %v1743 = vmul.f32 %v1644, %v1709
    %v1744 = vmul.f32 %v1646, %v1709
    %v1745 = vmul.f32 %v1648, %v1709
    %v1746 = vmul.f32 %v1650, %v1709
    %v1747 = vmul.f32 %v1652, %v1709
    %v1748 = vmul.f32 %v1654, %v1709
    %v1749 = vmul.f32 %v1656, %v1732
    %v1750 = vmul.f32 %v1658, %v1732
    %v1751 = vmul.f32 %v1660, %v1732
    %v1752 = vmul.f32 %v1662, %v1732
    %v1753 = vmul.f32 %v1664, %v1732
    %v1754 = vmul.f32 %v1666, %v1732
    %v1755 = vmul.f32 %v1668, %v1732
    %v1756 = vmul.f32 %v1670, %v1732
    %v1757 = vmul.f32 %v1672, %v1732
    %v1758 = vmul.f32 %v1674, %v1732
    %v1759 = vmul.f32 %v1676, %v1732
    %v1760 = vmul.f32 %v1678, %v1732
    %v1761 = vmul.f32 %v1680, %v1732
    %v1762 = vmul.f32 %v1682, %v1732
    %v1763 = vmul.f32 %v1684, %v1732
    %v1764 = vmul.f32 %v1686, %v1732
    %s1765 = scalar_lea.vmem [#allocation10], 256
    %1766 = vst [vmem:[%s1765] sm:$0xff] %v1733
    %1767 = vst [vmem:[%s1765 + $0x8] sm:$0xff] %v1734
    %1768 = vst [vmem:[%s1765 + $0x10] sm:$0xff] %v1735
    %1769 = vst [vmem:[%s1765 + $0x18] sm:$0xff] %v1736
    %1770 = vst [vmem:[%s1765 + $0x20] sm:$0xff] %v1737
    %1771 = vst [vmem:[%s1765 + $0x28] sm:$0xff] %v1738
    %1772 = vst [vmem:[%s1765 + $0x30] sm:$0xff] %v1739
    %1773 = vst [vmem:[%s1765 + $0x38] sm:$0xff] %v1740
    %1774 = vst [vmem:[%s1765 + $0x40] sm:$0xff] %v1741
    %1775 = vst [vmem:[%s1765 + $0x48] sm:$0xff] %v1742
    %1776 = vst [vmem:[%s1765 + $0x50] sm:$0xff] %v1743
    %1777 = vst [vmem:[%s1765 + $0x58] sm:$0xff] %v1744
    %1778 = vst [vmem:[%s1765 + $0x60] sm:$0xff] %v1745
    %1779 = vst [vmem:[%s1765 + $0x68] sm:$0xff] %v1746
    %1780 = vst [vmem:[%s1765 + $0x70] sm:$0xff] %v1747
    %1781 = vst [vmem:[%s1765 + $0x78] sm:$0xff] %v1748
    %1782 = vmatprep.subr.mxu0 0.0
    %1783 = vmatpush1.msra.mxu0 %v1764
    %1784 = vmatprep.subr.mxu0 0.0
    %1785 = vmatpush1.msra.mxu0 %v1763
    %1786 = vmatprep.subr.mxu0 0.0
    %1787 = vmatpush1.msra.mxu0 %v1762
    %1788 = vmatprep.subr.mxu0 0.0
    %1789 = vmatpush1.msra.mxu0 %v1761
    %1790 = vmatprep.subr.mxu0 0.0
    %1791 = vmatpush1.msra.mxu0 %v1760
    %1792 = vmatprep.subr.mxu0 0.0
    %1793 = vmatpush1.msra.mxu0 %v1759
    %1794 = vmatprep.subr.mxu0 0.0
    %1795 = vmatpush1.msra.mxu0 %v1758
    %1796 = vmatprep.subr.mxu0 0.0
    %1797 = vmatpush1.msra.mxu0 %v1757
    %1798 = vmatprep.subr.mxu0 0.0
    %1799 = vmatpush1.msra.mxu0 %v1756
    %1800 = vmatprep.subr.mxu0 0.0
    %1801 = vmatpush1.msra.mxu0 %v1755
    %1802 = vmatprep.subr.mxu0 0.0
    %1803 = vmatpush1.msra.mxu0 %v1754
    %1804 = vmatprep.subr.mxu0 0.0
    %1805 = vmatpush1.msra.mxu0 %v1753
    %1806 = vmatprep.subr.mxu0 0.0
    %1807 = vmatpush1.msra.mxu0 %v1752
    %1808 = vmatprep.subr.mxu0 0.0
    %1809 = vmatpush1.msra.mxu0 %v1751
    %1810 = vmatprep.subr.mxu0 0.0
    %1811 = vmatpush1.msra.mxu0 %v1750
    %1812 = vmatprep.subr.mxu0 0.0
    %1813 = vmatpush1.msra.mxu0 %v1749
    %1814 = vmatprep.subr.mxu0 0.0
    %1815 = vmatpush2.msra.mxu0 0.0
    %1816 = vmatprep.subr.mxu0 0.0
    %1817 = vmatpush2.msra.mxu0 0.0
    %1818 = vmatprep.subr.mxu0 0.0
    %1819 = vmatpush2.msra.mxu0 0.0
    %1820 = vmatprep.subr.mxu0 0.0
    %1821 = vmatpush2.msra.mxu0 0.0
    %1822 = vmatprep.subr.mxu0 0.0
    %1823 = vmatpush2.msra.mxu0 0.0
    %1824 = vmatprep.subr.mxu0 0.0
    %1825 = vmatpush2.msra.mxu0 0.0
    %1826 = vmatprep.subr.mxu0 0.0
    %1827 = vmatpush2.msra.mxu0 0.0
    %1828 = vmatprep.subr.mxu0 0.0
    %1829 = vmatpush2.msra.mxu0 0.0
    %1830 = vmatprep.subr.mxu0 0.0
    %1831 = vmatpush2.msra.mxu0 0.0
    %1832 = vmatprep.subr.mxu0 0.0
    %1833 = vmatpush2.msra.mxu0 0.0
    %1834 = vmatprep.subr.mxu0 0.0
    %1835 = vmatpush2.msra.mxu0 0.0
    %1836 = vmatprep.subr.mxu0 0.0
    %1837 = vmatpush2.msra.mxu0 0.0
    %1838 = vmatprep.subr.mxu0 0.0
    %1839 = vmatpush2.msra.mxu0 0.0
    %1840 = vmatprep.subr.mxu0 0.0
    %1841 = vmatpush2.msra.mxu0 0.0
    %1842 = vmatprep.subr.mxu0 0.0
    %1843 = vmatpush2.msra.mxu0 0.0
    %1844 = vmatprep.subr.mxu0 0.0
    %1845 = vmatpush2.msra.mxu0 0.0
    %1846 = vmatprep.mubr.f32.mxu0 0.0
    %1847 = vmatmul.mubr.f32.gmra.mxu0 %v1733
    %v1848 = vpop.f32.mrf.mxu0
    %v1849 = vadd.f32 0.0, %v1848
    %v1850 = vpop.f32.mrf.mxu0
    %1851 = vmatprep.mubr.f32.mxu0 0.0
    %1852 = vmatmul.mubr.f32.gmra.mxu0 %v1734
    %v1853 = vpop.f32.mrf.mxu0
    %v1854 = vadd.f32 0.0, %v1853
    %v1855 = vpop.f32.mrf.mxu0
    %1856 = vmatprep.mubr.f32.mxu0 0.0
    %1857 = vmatmul.mubr.f32.gmra.mxu0 %v1735
    %v1858 = vpop.f32.mrf.mxu0
    %v1859 = vadd.f32 0.0, %v1858
    %v1860 = vpop.f32.mrf.mxu0
    %1861 = vmatprep.mubr.f32.mxu0 0.0
    %1862 = vmatmul.mubr.f32.gmra.mxu0 %v1736
    %v1863 = vpop.f32.mrf.mxu0
    %v1864 = vadd.f32 0.0, %v1863
    %v1865 = vpop.f32.mrf.mxu0
    %1866 = vmatprep.mubr.f32.mxu0 0.0
    %1867 = vmatmul.mubr.f32.gmra.mxu0 %v1737
    %v1868 = vpop.f32.mrf.mxu0
    %v1869 = vadd.f32 0.0, %v1868
    %v1870 = vpop.f32.mrf.mxu0
    %1871 = vmatprep.mubr.f32.mxu0 0.0
    %1872 = vmatmul.mubr.f32.gmra.mxu0 %v1738
    %v1873 = vpop.f32.mrf.mxu0
    %v1874 = vadd.f32 0.0, %v1873
    %v1875 = vpop.f32.mrf.mxu0
    %1876 = vmatprep.mubr.f32.mxu0 0.0
    %1877 = vmatmul.mubr.f32.gmra.mxu0 %v1739
    %v1878 = vpop.f32.mrf.mxu0
    %v1879 = vadd.f32 0.0, %v1878
    %v1880 = vpop.f32.mrf.mxu0
    %1881 = vmatprep.mubr.f32.mxu0 0.0
    %1882 = vmatmul.mubr.f32.gmra.mxu0 %v1740
    %v1883 = vpop.f32.mrf.mxu0
    %v1884 = vadd.f32 0.0, %v1883
    %v1885 = vpop.f32.mrf.mxu0
    %1886 = vmatprep.mubr.f32.mxu0 0.0
    %1887 = vmatmul.mubr.f32.gmra.mxu0 %v1741
    %v1888 = vpop.f32.mrf.mxu0
    %v1889 = vadd.f32 0.0, %v1888
    %v1890 = vpop.f32.mrf.mxu0
    %1891 = vmatprep.mubr.f32.mxu0 0.0
    %1892 = vmatmul.mubr.f32.gmra.mxu0 %v1742
    %v1893 = vpop.f32.mrf.mxu0
    %v1894 = vadd.f32 0.0, %v1893
    %v1895 = vpop.f32.mrf.mxu0
    %1896 = vmatprep.mubr.f32.mxu0 0.0
    %1897 = vmatmul.mubr.f32.gmra.mxu0 %v1743
    %v1898 = vpop.f32.mrf.mxu0
    %v1899 = vadd.f32 0.0, %v1898
    %v1900 = vpop.f32.mrf.mxu0
    %1901 = vmatprep.mubr.f32.mxu0 0.0
    %1902 = vmatmul.mubr.f32.gmra.mxu0 %v1744
    %v1903 = vpop.f32.mrf.mxu0
    %v1904 = vadd.f32 0.0, %v1903
    %v1905 = vpop.f32.mrf.mxu0
    %1906 = vmatprep.mubr.f32.mxu0 0.0
    %1907 = vmatmul.mubr.f32.gmra.mxu0 %v1745
    %v1908 = vpop.f32.mrf.mxu0
    %v1909 = vadd.f32 0.0, %v1908
    %v1910 = vpop.f32.mrf.mxu0
    %1911 = vmatprep.mubr.f32.mxu0 0.0
    %1912 = vmatmul.mubr.f32.gmra.mxu0 %v1746
    %v1913 = vpop.f32.mrf.mxu0
    %v1914 = vadd.f32 0.0, %v1913
    %v1915 = vpop.f32.mrf.mxu0
    %1916 = vmatprep.mubr.f32.mxu0 0.0
    %1917 = vmatmul.mubr.f32.gmra.mxu0 %v1747
    %v1918 = vpop.f32.mrf.mxu0
    %v1919 = vadd.f32 0.0, %v1918
    %v1920 = vpop.f32.mrf.mxu0
    %1921 = vmatprep.mubr.f32.mxu0 0.0
    %1922 = vmatmul.mubr.f32.gmra.mxu0 %v1748
    %v1923 = vpop.f32.mrf.mxu0
    %v1924 = vadd.f32 0.0, %v1923
    %v1925 = vpop.f32.mrf.mxu0
    %1926 = vdwg.mxu0
    %s1927 = scalar_lea.vmem [#allocation9], 256
    %1928 = vst [vmem:[%s1927] sm:$0xff] %v1849
    %1929 = vst [vmem:[%s1927 + $0x8] sm:$0xff] %v1854
    %1930 = vst [vmem:[%s1927 + $0x10] sm:$0xff] %v1859
    %1931 = vst [vmem:[%s1927 + $0x18] sm:$0xff] %v1864
    %1932 = vst [vmem:[%s1927 + $0x20] sm:$0xff] %v1869
    %1933 = vst [vmem:[%s1927 + $0x28] sm:$0xff] %v1874
    %1934 = vst [vmem:[%s1927 + $0x30] sm:$0xff] %v1879
    %1935 = vst [vmem:[%s1927 + $0x38] sm:$0xff] %v1884
    %1936 = vst [vmem:[%s1927 + $0x40] sm:$0xff] %v1889
    %1937 = vst [vmem:[%s1927 + $0x48] sm:$0xff] %v1894
    %1938 = vst [vmem:[%s1927 + $0x50] sm:$0xff] %v1899
    %1939 = vst [vmem:[%s1927 + $0x58] sm:$0xff] %v1904
    %1940 = vst [vmem:[%s1927 + $0x60] sm:$0xff] %v1909
    %1941 = vst [vmem:[%s1927 + $0x68] sm:$0xff] %v1914
    %1942 = vst [vmem:[%s1927 + $0x70] sm:$0xff] %v1919
    %1943 = vst [vmem:[%s1927 + $0x78] sm:$0xff] %v1924
    // Predicated region
    $region26: #{_hmae_pallas.1} parent=1 // pred_check
      _
    $region27: #{_hmae_pallas.1} parent=1 // pred_check_branch
      %1945 = sbr.rel (0) target = $region29
    $region28: #{_hmae_pallas.1} parent=1 // pred_region
      %s1947 = ssub.s32 6144, 6144
      %1948 = vsyncadd [#allocation4], %s1947
      %s1949 = sshll.u32 [#allocation9], 4
      %s1950 = int_to_ptr.vmem [resolvable:$true] %s1949
      %1955 = dma.vmem_to_hbm [thread:$0]  %s1950, 6144, %s3, [#allocation4], 128, 128, 8
    $region29: #{_hmae_pallas.1} parent=1 // pred_fallthru
      _
    // Predicated region
    $region30: #{_hmae_pallas.1} parent=1 // pred_check
      _
    $region31: #{_hmae_pallas.1} parent=1 // pred_check_branch
      %1957 = sbr.rel (0) target = $region33
    $region32: #{_hmae_pallas.1} parent=1 // pred_region
      %s1959 = ssub.s32 6144, 6144
      %1960 = vsyncadd [#allocation11], %s1959
      %s1961 = sshll.u32 [#allocation10], 4
      %s1962 = int_to_ptr.vmem [resolvable:$true] %s1961
      %1967 = dma.vmem_to_hbm [thread:$0]  %s1962, 6144, %s4, [#allocation11], 128, 128, 8
    $region33: #{_hmae_pallas.1} parent=1 // pred_fallthru
      _
    // Predicated region
    $region34: #{_hmae_pallas.1} parent=1 // pred_check
      _
    $region35: #{_hmae_pallas.1} parent=1 // pred_check_branch
      %1969 = sbr.rel (0) target = $region37
    $region36: #{_hmae_pallas.1} parent=1 // pred_region
      %1970 = dma.done [#allocation4], 6144
    $region37: #{_hmae_pallas.1} parent=1 // pred_fallthru
      _
    // Predicated region
    $region38: #{_hmae_pallas.1} parent=1 // pred_check
      _
    $region39: #{_hmae_pallas.1} parent=1 // pred_check_branch
      %1972 = sbr.rel (0) target = $region41
    $region40: #{_hmae_pallas.1} parent=1 // pred_region
      %1973 = dma.done [#allocation11], 6144
    $region41: #{_hmae_pallas.1} parent=1 // pred_fallthru
      _
    %1974 = vsyncpa [#allocation3], 1
    %1975 = vsyncpa [#allocation4], 1
    %1976 = vsyncpa [#allocation11], 1
    %1977 = vsyncpa [#allocation5], 1
    %1978 = vsyncpa [#allocation7], 1

</llo_original>
